<compile_context>
chip_gen: v5e
topology: v5e:2x2
jax: 0.10.0
libtpu: 0.0.40
codegen_flags: <defaults>
</compile_context>

<pallas_src>
import functools

import jax
import jax.numpy as jnp
from jax.experimental import pallas as pl
from jax.experimental.pallas import tpu as pltpu


# ----------------------------------------------------------------------------
# Small helpers
# ----------------------------------------------------------------------------
def _round_up(x, m):
    return ((x + m - 1) // m) * m


def _pad_to(x, target_shape):
    pads = [(0, t - s) for s, t in zip(x.shape, target_shape)]
    if all(p == (0, 0) for p in pads):
        return x
    return jnp.pad(x, pads)


@functools.lru_cache(maxsize=1)
def _vmem_limit_bytes():
    """Scoped-VMEM limit safe across v5e/v6e (128 MiB phys) and v7x (64 MiB phys)."""
    try:
        cap = int(pltpu.get_tpu_info().vmem_capacity_bytes)
        return min(cap // 2, 48 * 1024 * 1024)
    except Exception:
        return 32 * 1024 * 1024


def _choose_tm(Mp):
    """Row tile: single block for small M; otherwise the largest divisor <= 1024
    that still leaves >= 2 blocks on the 'parallel' i axis (v7x megacore)."""
    if Mp <= 256:
        return Mp
    for tm in (1024, 512, 256, 128, 64, 32, 16, 8):
        if Mp % tm == 0 and Mp // tm >= 2:
            return tm
    return Mp


# ----------------------------------------------------------------------------
# Pallas kernel: o = [relu]( sum_i A_i @ W_i  + b )
# Full-extent K blocks (no K grid axis, no accumulator scratch); 2D grid (M, N).
# ----------------------------------------------------------------------------
def _mm_multi_kernel(*refs, n_in, apply_relu):
    a_refs = refs[:n_in]
    w_refs = refs[n_in:2 * n_in]
    b_ref = refs[2 * n_in]
    o_ref = refs[2 * n_in + 1]

    acc = jnp.dot(a_refs[0][...], w_refs[0][...], preferred_element_type=jnp.float32)
    for t in range(1, n_in):
        acc = acc + jnp.dot(a_refs[t][...], w_refs[t][...],
                            preferred_element_type=jnp.float32)
    r = acc + b_ref[...]
    if apply_relu:
        r = jnp.maximum(r, 0.0)
    o_ref[...] = r.astype(o_ref.dtype)


def matmul_multi_bias_act(a_list, w_list, b, apply_relu, out_dtype=jnp.bfloat16):
    """a_list[i]: (M, K_i), w_list[i]: (K_i, N), b: (N,) -> (M, N).

    bf16 MXU inputs, f32 accumulation.  N (and bias) are zero-padded to a lane-dense
    multiple of 128; K is never padded (full-extent blocks); M is padded only if it
    is not already a multiple of 16.
    """
    n_in = len(a_list)
    M = a_list[0].shape[0]
    N = w_list[0].shape[1]

    Mp = _round_up(M, 16)
    Np = _round_up(N, 128)
    tn = 256 if (Np >= 256 and Np % 256 == 0) else 128
    tm = _choose_tm(Mp)

    a_ps = [_pad_to(a.astype(jnp.bfloat16), (Mp, a.shape[1])) for a in a_list]
    w_ps = [_pad_to(w.astype(jnp.bfloat16), (w.shape[0], Np)) for w in w_list]
    b_p = _pad_to(b.reshape(1, N).astype(jnp.float32), (1, Np))

    in_specs = []
    for a in a_ps:                                   # full-K blocks, tiled over M
        in_specs.append(pl.BlockSpec((tm, a.shape[1]), lambda i, j: (i, 0)))
    for w in w_ps:                                   # full-K blocks, tiled over N
        in_specs.append(pl.BlockSpec((w.shape[0], tn), lambda i, j: (0, j)))
    in_specs.append(pl.BlockSpec((1, tn), lambda i, j: (0, j)))   # bias

    k_total = sum(a.shape[1] for a in a_ps)
    out_itemsize = 4 if out_dtype == jnp.float32 else 2
    bytes_accessed = (sum(int(a.size) * 2 for a in a_ps)
                      + sum(int(w.size) * 2 for w in w_ps)
                      + int(Np) * 4 + int(Mp) * int(Np) * out_itemsize)

    kernel = functools.partial(_mm_multi_kernel, n_in=n_in, apply_relu=apply_relu)
    out = pl.pallas_call(
        kernel,
        out_shape=jax.ShapeDtypeStruct((Mp, Np), out_dtype),
        grid=(Mp // tm, Np // tn),
        in_specs=in_specs,
        out_specs=pl.BlockSpec((tm, tn), lambda i, j: (i, j)),
        compiler_params=pltpu.CompilerParams(
            dimension_semantics=("parallel", "parallel"),
            vmem_limit_bytes=_vmem_limit_bytes()),
        cost_estimate=pl.CostEstimate(
            flops=int(2 * Mp * Np * k_total),
            transcendentals=0,
            bytes_accessed=int(bytes_accessed)),
    )(*a_ps, *w_ps, b_p)

    if (Mp, Np) != (M, N):
        out = out[:M, :N]
    return out


# ----------------------------------------------------------------------------
# Conv glue: im2col (bf16, written once, no K/M padding rewrites) + Pallas matmul
# ----------------------------------------------------------------------------
def _extract_patches(x, kh, kw, stride, dilation):
    """x: NHWC -> patches (B, Ho, Wo, kh*kw*C); padding = dilation*(k-1)//2."""
    B, H, W, C = x.shape
    ph = dilation * (kh - 1) // 2
    pw = dilation * (kw - 1) // 2
    xp = jnp.pad(x, ((0, 0), (ph, ph), (pw, pw), (0, 0)))
    Ho = (H + 2 * ph - dilation * (kh - 1) - 1) // stride + 1
    Wo = (W + 2 * pw - dilation * (kw - 1) - 1) // stride + 1
    slabs = []
    for i in range(kh):
        for j in range(kw):
            y0 = i * dilation
            x0 = j * dilation
            sl = xp[:,
                    y0:y0 + stride * (Ho - 1) + 1:stride,
                    x0:x0 + stride * (Wo - 1) + 1:stride, :]
            slabs.append(sl)
    if len(slabs) == 1:
        return slabs[0], Ho, Wo
    return jnp.concatenate(slabs, axis=-1), Ho, Wo


def conv2d_multi(xs, ws, b, stride=1, dilation=1, relu=True, out_dtype=jnp.bfloat16):
    """Conv of the implicit channel-concat of `xs` with per-branch weight slices
    `ws` (each (kh,kw,cin_i,cout)).  The concatenated feature map is never
    materialized; each branch becomes one (A_i, W_i) operand of the fused kernel."""
    a_list, wm_list = [], []
    B = xs[0].shape[0]
    Ho = Wo = None
    for x, w in zip(xs, ws):
        kh, kw, cin, cout = w.shape
        p, Ho, Wo = _extract_patches(x.astype(jnp.bfloat16), kh, kw, stride, dilation)
        a_list.append(p.reshape(B * Ho * Wo, kh * kw * cin))
        wm_list.append(w.reshape(kh * kw * cin, cout))
    out = matmul_multi_bias_act(a_list, wm_list, b, relu, out_dtype=out_dtype)
    return out.reshape(B, Ho, Wo, ws[0].shape[-1])


def conv2d(x, w, b, stride=1, dilation=1, relu=True, out_dtype=jnp.bfloat16):
    return conv2d_multi([x], [w], b, stride=stride, dilation=dilation,
                        relu=relu, out_dtype=out_dtype)


# ----------------------------------------------------------------------------
# Bilinear upsample (align_corners=True) as dense interpolation matmuls
# ----------------------------------------------------------------------------
def _interp_matrix(out_size, in_size):
    """R[o, i] = bilinear weight of input index i for output o (align_corners=True)."""
    if out_size == in_size:
        return jnp.eye(out_size, dtype=jnp.float32)
    if out_size == 1 or in_size == 1:
        s = jnp.zeros((out_size,), jnp.float32)
    else:
        s = jnp.arange(out_size, dtype=jnp.float32) * ((in_size - 1) / (out_size - 1))
    d = jnp.abs(s[:, None] - jnp.arange(in_size, dtype=jnp.float32)[None, :])
    return jnp.maximum(0.0, 1.0 - d)


def bilinear_upsample(x, out_h, out_w):
    """NHWC bilinear resize (align_corners=True); bf16 inputs, f32 accumulation."""
    B, H, W, C = x.shape
    if out_h == H and out_w == W:
        return x
    cdt = jnp.bfloat16 if x.dtype == jnp.bfloat16 else jnp.float32
    Rh = _interp_matrix(out_h, H).astype(cdt)
    Rw = _interp_matrix(out_w, W).astype(cdt)
    y = jnp.einsum("oh,bhwc->bowc", Rh, x.astype(cdt),
                   preferred_element_type=jnp.float32)
    y = jnp.einsum("pw,bhwc->bhpc", Rw.astype(jnp.float32), y,
                   preferred_element_type=jnp.float32)
    return y.astype(x.dtype)


# ----------------------------------------------------------------------------
# Parameter init (deterministic, synthetic)
# ----------------------------------------------------------------------------
def _init_conv(key, kh, kw, cin, cout):
    k1, k2 = jax.random.split(key)
    fan_in = kh * kw * cin
    w = jax.random.normal(k1, (kh, kw, cin, cout), jnp.float32) / jnp.sqrt(float(fan_in))
    b = 0.01 * jax.random.normal(k2, (cout,), jnp.float32)
    return {"w": w, "b": b}


def init_unipose_params(key, num_classes=14, cin=3, c_stem=8, c_low=16, c_high=32):
    keys = jax.random.split(key, 16)
    p = {}
    # backbone (simplified ResNet-style strided stem)
    p["stem"] = _init_conv(keys[0], 3, 3, cin, c_stem)            # /2
    p["layer1"] = _init_conv(keys[1], 3, 3, c_stem, c_low)        # /4 -> low_level_feat
    p["layer4"] = _init_conv(keys[2], 3, 3, c_low, c_high)        # /8 -> x
    # WASP: waterfall atrous convs + image-pool branch + 1x1 fuse
    p["wasp_a1"] = _init_conv(keys[3], 3, 3, c_high, c_high)      # dilation 1
    p["wasp_a2"] = _init_conv(keys[4], 3, 3, c_high, c_high)      # dilation 2
    p["wasp_a3"] = _init_conv(keys[5], 3, 3, c_high, c_high)      # dilation 3
    p["wasp_a4"] = _init_conv(keys[6], 3, 3, c_high, c_high)      # dilation 4
    p["wasp_gap"] = _init_conv(keys[7], 1, 1, c_high, c_high)
    p["wasp_fuse"] = _init_conv(keys[8], 1, 1, 5 * c_high, c_high)
    # decoder
    p["dec_low"] = _init_conv(keys[9], 1, 1, c_low, c_stem)
    p["dec_conv1"] = _init_conv(keys[10], 3, 3, c_high + c_stem, c_high)
    p["dec_conv2"] = _init_conv(keys[11], 3, 3, c_high, c_high)
    p["dec_out"] = _init_conv(keys[12], 1, 1, c_high, num_classes)
    return p


# ----------------------------------------------------------------------------
# Forward pass (mirrors unipose.forward)
# ----------------------------------------------------------------------------
def unipose_forward(params, x_nchw):
    # NCHW -> NHWC, single bf16 cast at the entry
    x = jnp.transpose(x_nchw, (0, 2, 3, 1)).astype(jnp.bfloat16)
    in_h, in_w = x.shape[1], x.shape[2]

    # ---- backbone: x, low_level_feat = backbone(input) ----
    h = conv2d(x, params["stem"]["w"], params["stem"]["b"], stride=2, relu=True)
    low_level_feat = conv2d(h, params["layer1"]["w"], params["layer1"]["b"],
                            stride=2, relu=True)
    hi = conv2d(low_level_feat, params["layer4"]["w"], params["layer4"]["b"],
                stride=2, relu=True)

    # ---- WASP: waterfall atrous spatial pooling ----
    w1 = conv2d(hi, params["wasp_a1"]["w"], params["wasp_a1"]["b"], dilation=1, relu=True)
    w2 = conv2d(w1, params["wasp_a2"]["w"], params["wasp_a2"]["b"], dilation=2, relu=True)
    w3 = conv2d(w2, params["wasp_a3"]["w"], params["wasp_a3"]["b"], dilation=3, relu=True)
    w4 = conv2d(w3, params["wasp_a4"]["w"], params["wasp_a4"]["b"], dilation=4, relu=True)

    # Image-pool branch: spatially constant, so fold it into the fuse conv instead
    # of broadcast_to + concat.  (Tiny (B,C) matmuls stay in plain XLA.)
    C = hi.shape[-1]
    gap = jnp.mean(hi.astype(jnp.float32), axis=(1, 2))                       # (B, C)
    wg = params["wasp_gap"]["w"].reshape(C, C)
    gap = jnp.maximum(gap @ wg + params["wasp_gap"]["b"], 0.0)                # 1x1 + ReLU
    wf = params["wasp_fuse"]["w"]                                             # (1,1,5C,C)
    gap_contrib = gap @ wf[0, 0, 4 * C:, :]                                   # (B, C)

    # Fuse conv over the 4 atrous branches without materializing the concat.
    branch_w = [wf[:, :, t * C:(t + 1) * C, :] for t in range(4)]
    lin = conv2d_multi([w1, w2, w3, w4], branch_w, params["wasp_fuse"]["b"],
                       relu=False, out_dtype=jnp.float32)
    wasp_out = jnp.maximum(lin + gap_contrib[:, None, None, :],
                           0.0).astype(jnp.bfloat16)

    # ---- decoder: fuse with low-level features, predict heatmaps ----
    low = conv2d(low_level_feat, params["dec_low"]["w"], params["dec_low"]["b"],
                 relu=True)
    up = bilinear_upsample(wasp_out, low.shape[1], low.shape[2])
    cu = up.shape[-1]
    wd = params["dec_conv1"]["w"]
    d = conv2d_multi([up, low], [wd[:, :, :cu, :], wd[:, :, cu:, :]],
                     params["dec_conv1"]["b"], relu=True)                     # fused concat
    d = conv2d(d, params["dec_conv2"]["w"], params["dec_conv2"]["b"], relu=True)
    d = conv2d(d, params["dec_out"]["w"], params["dec_out"]["b"], relu=False,
               out_dtype=jnp.float32)
    d = bilinear_upsample(d, in_h, in_w)

    # NHWC -> NCHW (match PyTorch output convention)
    return jnp.transpose(d, (0, 3, 1, 2)).astype(jnp.float32)


# ----------------------------------------------------------------------------
if __name__ == "__main__":
    key = jax.random.PRNGKey(0)
    k_param, k_input = jax.random.split(key)

    num_classes = 14
    params = init_unipose_params(k_param, num_classes=num_classes)

    # small input consistent with the module: NCHW image batch
    x = jax.random.normal(k_input, (2, 3, 32, 32), jnp.float32)

    fwd = jax.jit(unipose_forward)
    out = fwd(params, x)
    out = jax.block_until_ready(out)

    assert out.shape == (2, num_classes, 32, 32), out.shape
    assert jnp.all(jnp.isfinite(out))
    print("KERNEL_OK")
</pallas_src>

<mosaic_0001>
module attributes {stable_mosaic.version = 11 : i64} {
  func.func @_mm_multi_kernel(%arg0: i32, %arg1: i32, %arg2: memref<256x27xbf16, #tpu.memory_space<vmem>>, %arg3: memref<27x128xbf16, #tpu.memory_space<vmem>>, %arg4: memref<1x128xf32, #tpu.memory_space<vmem>>, %arg5: memref<256x128xbf16, #tpu.memory_space<vmem>>) attributes {dimension_semantics = [#tpu.dimension_semantics<parallel>, #tpu.dimension_semantics<parallel>], iteration_bounds = array<i64: 2, 1>, scalar_prefetch = 0 : i64, scratch_operands = 0 : i64, tpu.core_type = #tpu.core_type<tc>, window_params = [{transform_indices = @transform_0, window_bounds = array<i64: 256, 27>}, {transform_indices = @transform_1, window_bounds = array<i64: 27, 128>}, {transform_indices = @transform_2, window_bounds = array<i64: 1, 128>}, {transform_indices = @transform_3, window_bounds = array<i64: 256, 128>}]} {
    %c0 = arith.constant 0 : index
    %c0_0 = arith.constant 0 : index
    %0 = vector.load %arg2[%c0, %c0_0] : memref<256x27xbf16, #tpu.memory_space<vmem>>, vector<256x27xbf16>
    %c0_1 = arith.constant 0 : index
    %c0_2 = arith.constant 0 : index
    %1 = vector.load %arg3[%c0_1, %c0_2] : memref<27x128xbf16, #tpu.memory_space<vmem>>, vector<27x128xbf16>
    %cst = arith.constant dense<0.000000e+00> : vector<256x128xf32>
    %2 = tpu.matmul %0, %1, %cst {dimension_numbers = #tpu.dot_dimension_numbers<[1], [0], [0], [1], [0, 0, 1, 1], [], []>} : vector<256x27xbf16>, vector<27x128xbf16>, vector<256x128xf32> -> vector<256x128xf32>
    %c0_3 = arith.constant 0 : index
    %c0_4 = arith.constant 0 : index
    %3 = vector.load %arg4[%c0_3, %c0_4] : memref<1x128xf32, #tpu.memory_space<vmem>>, vector<1x128xf32>
    %4 = vector.broadcast %3 : vector<1x128xf32> to vector<256x128xf32>
    %5 = arith.addf %2, %4 : vector<256x128xf32>
    %cst_5 = arith.constant 0.000000e+00 : f32
    %6 = vector.broadcast %cst_5 : f32 to vector<256x128xf32>
    %7 = arith.maximumf %5, %6 : vector<256x128xf32>
    %8 = arith.truncf %7 : vector<256x128xf32> to vector<256x128xbf16>
    %c0_6 = arith.constant 0 : index
    %c0_7 = arith.constant 0 : index
    %9 = vector.load %arg5[%c0_6, %c0_7] : memref<256x128xbf16, #tpu.memory_space<vmem>>, vector<256x128xbf16>
    tpu.vector_store %arg5[%c0_6, %c0_7], %8 {strides = array<i32>} : memref<256x128xbf16, #tpu.memory_space<vmem>>, vector<256x128xbf16>,
    return
  }
  func.func @transform_0(%arg0: i32, %arg1: i32) -> (i32, i32) {
    %c0_i32 = arith.constant 0 : i32
    %c0_i32_0 = arith.constant 0 : i32
    return %arg0, %c0_i32 : i32, i32
  }
  func.func @transform_1(%arg0: i32, %arg1: i32) -> (i32, i32) {
    %c0_i32 = arith.constant 0 : i32
    %c0_i32_0 = arith.constant 0 : i32
    return %c0_i32, %arg1 : i32, i32
  }
  func.func @transform_2(%arg0: i32, %arg1: i32) -> (i32, i32) {
    %c0_i32 = arith.constant 0 : i32
    %c0_i32_0 = arith.constant 0 : i32
    return %c0_i32, %arg1 : i32, i32
  }
  func.func @transform_3(%arg0: i32, %arg1: i32) -> (i32, i32) {
    %c0_i32 = arith.constant 0 : i32
    return %arg0, %arg1 : i32, i32
  }
}

module attributes {stable_mosaic.version = 11 : i64} {
  func.func @_mm_multi_kernel(%arg0: i32, %arg1: i32, %arg2: memref<128x72xbf16, #tpu.memory_space<vmem>>, %arg3: memref<72x128xbf16, #tpu.memory_space<vmem>>, %arg4: memref<1x128xf32, #tpu.memory_space<vmem>>, %arg5: memref<128x128xbf16, #tpu.memory_space<vmem>>) attributes {dimension_semantics = [#tpu.dimension_semantics<parallel>, #tpu.dimension_semantics<parallel>], iteration_bounds = array<i64: 1, 1>, scalar_prefetch = 0 : i64, scratch_operands = 0 : i64, tpu.core_type = #tpu.core_type<tc>, window_params = [{transform_indices = @transform_0, window_bounds = array<i64: 128, 72>}, {transform_indices = @transform_1, window_bounds = array<i64: 72, 128>}, {transform_indices = @transform_2, window_bounds = array<i64: 1, 128>}, {transform_indices = @transform_3, window_bounds = array<i64: 128, 128>}]} {
    %c0 = arith.constant 0 : index
    %c0_0 = arith.constant 0 : index
    %0 = vector.load %arg2[%c0, %c0_0] : memref<128x72xbf16, #tpu.memory_space<vmem>>, vector<128x72xbf16>
    %c0_1 = arith.constant 0 : index
    %c0_2 = arith.constant 0 : index
    %1 = vector.load %arg3[%c0_1, %c0_2] : memref<72x128xbf16, #tpu.memory_space<vmem>>, vector<72x128xbf16>
    %cst = arith.constant dense<0.000000e+00> : vector<128x128xf32>
    %2 = tpu.matmul %0, %1, %cst {dimension_numbers = #tpu.dot_dimension_numbers<[1], [0], [0], [1], [0, 0, 1, 1], [], []>} : vector<128x72xbf16>, vector<72x128xbf16>, vector<128x128xf32> -> vector<128x128xf32>
    %c0_3 = arith.constant 0 : index
    %c0_4 = arith.constant 0 : index
    %3 = vector.load %arg4[%c0_3, %c0_4] : memref<1x128xf32, #tpu.memory_space<vmem>>, vector<1x128xf32>
    %4 = vector.broadcast %3 : vector<1x128xf32> to vector<128x128xf32>
    %5 = arith.addf %2, %4 : vector<128x128xf32>
    %cst_5 = arith.constant 0.000000e+00 : f32
    %6 = vector.broadcast %cst_5 : f32 to vector<128x128xf32>
    %7 = arith.maximumf %5, %6 : vector<128x128xf32>
    %8 = arith.truncf %7 : vector<128x128xf32> to vector<128x128xbf16>
    %c0_6 = arith.constant 0 : index
    %c0_7 = arith.constant 0 : index
    %9 = vector.load %arg5[%c0_6, %c0_7] : memref<128x128xbf16, #tpu.memory_space<vmem>>, vector<128x128xbf16>
    tpu.vector_store %arg5[%c0_6, %c0_7], %8 {strides = array<i32>} : memref<128x128xbf16, #tpu.memory_space<vmem>>, vector<128x128xbf16>,
    return
  }
  func.func @transform_0(%arg0: i32, %arg1: i32) -> (i32, i32) {
    %c0_i32 = arith.constant 0 : i32
    %c0_i32_0 = arith.constant 0 : i32
    return %arg0, %c0_i32 : i32, i32
  }
  func.func @transform_1(%arg0: i32, %arg1: i32) -> (i32, i32) {
    %c0_i32 = arith.constant 0 : i32
    %c0_i32_0 = arith.constant 0 : i32
    return %c0_i32, %arg1 : i32, i32
  }
  func.func @transform_2(%arg0: i32, %arg1: i32) -> (i32, i32) {
    %c0_i32 = arith.constant 0 : i32
    %c0_i32_0 = arith.constant 0 : i32
    return %c0_i32, %arg1 : i32, i32
  }
  func.func @transform_3(%arg0: i32, %arg1: i32) -> (i32, i32) {
    %c0_i32 = arith.constant 0 : i32
    return %arg0, %arg1 : i32, i32
  }
}

module attributes {stable_mosaic.version = 11 : i64} {
  func.func @_mm_multi_kernel(%arg0: i32, %arg1: i32, %arg2: memref<128x16xbf16, #tpu.memory_space<vmem>>, %arg3: memref<16x128xbf16, #tpu.memory_space<vmem>>, %arg4: memref<1x128xf32, #tpu.memory_space<vmem>>, %arg5: memref<128x128xbf16, #tpu.memory_space<vmem>>) attributes {dimension_semantics = [#tpu.dimension_semantics<parallel>, #tpu.dimension_semantics<parallel>], iteration_bounds = array<i64: 1, 1>, scalar_prefetch = 0 : i64, scratch_operands = 0 : i64, tpu.core_type = #tpu.core_type<tc>, window_params = [{transform_indices = @transform_0, window_bounds = array<i64: 128, 16>}, {transform_indices = @transform_1, window_bounds = array<i64: 16, 128>}, {transform_indices = @transform_2, window_bounds = array<i64: 1, 128>}, {transform_indices = @transform_3, window_bounds = array<i64: 128, 128>}]} {
    %c0 = arith.constant 0 : index
    %c0_0 = arith.constant 0 : index
    %0 = vector.load %arg2[%c0, %c0_0] : memref<128x16xbf16, #tpu.memory_space<vmem>>, vector<128x16xbf16>
    %c0_1 = arith.constant 0 : index
    %c0_2 = arith.constant 0 : index
    %1 = vector.load %arg3[%c0_1, %c0_2] : memref<16x128xbf16, #tpu.memory_space<vmem>>, vector<16x128xbf16>
    %cst = arith.constant dense<0.000000e+00> : vector<128x128xf32>
    %2 = tpu.matmul %0, %1, %cst {dimension_numbers = #tpu.dot_dimension_numbers<[1], [0], [0], [1], [0, 0, 1, 1], [], []>} : vector<128x16xbf16>, vector<16x128xbf16>, vector<128x128xf32> -> vector<128x128xf32>
    %c0_3 = arith.constant 0 : index
    %c0_4 = arith.constant 0 : index
    %3 = vector.load %arg4[%c0_3, %c0_4] : memref<1x128xf32, #tpu.memory_space<vmem>>, vector<1x128xf32>
    %4 = vector.broadcast %3 : vector<1x128xf32> to vector<128x128xf32>
    %5 = arith.addf %2, %4 : vector<128x128xf32>
    %cst_5 = arith.constant 0.000000e+00 : f32
    %6 = vector.broadcast %cst_5 : f32 to vector<128x128xf32>
    %7 = arith.maximumf %5, %6 : vector<128x128xf32>
    %8 = arith.truncf %7 : vector<128x128xf32> to vector<128x128xbf16>
    %c0_6 = arith.constant 0 : index
    %c0_7 = arith.constant 0 : index
    %9 = vector.load %arg5[%c0_6, %c0_7] : memref<128x128xbf16, #tpu.memory_space<vmem>>, vector<128x128xbf16>
    tpu.vector_store %arg5[%c0_6, %c0_7], %8 {strides = array<i32>} : memref<128x128xbf16, #tpu.memory_space<vmem>>, vector<128x128xbf16>,
    return
  }
  func.func @transform_0(%arg0: i32, %arg1: i32) -> (i32, i32) {
    %c0_i32 = arith.constant 0 : i32
    %c0_i32_0 = arith.constant 0 : i32
    return %arg0, %c0_i32 : i32, i32
  }
  func.func @transform_1(%arg0: i32, %arg1: i32) -> (i32, i32) {
    %c0_i32 = arith.constant 0 : i32
    %c0_i32_0 = arith.constant 0 : i32
    return %c0_i32, %arg1 : i32, i32
  }
  func.func @transform_2(%arg0: i32, %arg1: i32) -> (i32, i32) {
    %c0_i32 = arith.constant 0 : i32
    %c0_i32_0 = arith.constant 0 : i32
    return %c0_i32, %arg1 : i32, i32
  }
  func.func @transform_3(%arg0: i32, %arg1: i32) -> (i32, i32) {
    %c0_i32 = arith.constant 0 : i32
    return %arg0, %arg1 : i32, i32
  }
}

module attributes {stable_mosaic.version = 11 : i64} {
  func.func @_mm_multi_kernel(%arg0: i32, %arg1: i32, %arg2: memref<32x144xbf16, #tpu.memory_space<vmem>>, %arg3: memref<144x128xbf16, #tpu.memory_space<vmem>>, %arg4: memref<1x128xf32, #tpu.memory_space<vmem>>, %arg5: memref<32x128xbf16, #tpu.memory_space<vmem>>) attributes {dimension_semantics = [#tpu.dimension_semantics<parallel>, #tpu.dimension_semantics<parallel>], iteration_bounds = array<i64: 1, 1>, scalar_prefetch = 0 : i64, scratch_operands = 0 : i64, tpu.core_type = #tpu.core_type<tc>, window_params = [{transform_indices = @transform_0, window_bounds = array<i64: 32, 144>}, {transform_indices = @transform_1, window_bounds = array<i64: 144, 128>}, {transform_indices = @transform_2, window_bounds = array<i64: 1, 128>}, {transform_indices = @transform_3, window_bounds = array<i64: 32, 128>}]} {
    %c0 = arith.constant 0 : index
    %c0_0 = arith.constant 0 : index
    %0 = vector.load %arg2[%c0, %c0_0] : memref<32x144xbf16, #tpu.memory_space<vmem>>, vector<32x144xbf16>
    %c0_1 = arith.constant 0 : index
    %c0_2 = arith.constant 0 : index
    %1 = vector.load %arg3[%c0_1, %c0_2] : memref<144x128xbf16, #tpu.memory_space<vmem>>, vector<144x128xbf16>
    %cst = arith.constant dense<0.000000e+00> : vector<32x128xf32>
    %2 = tpu.matmul %0, %1, %cst {dimension_numbers = #tpu.dot_dimension_numbers<[1], [0], [0], [1], [0, 0, 1, 1], [], []>} : vector<32x144xbf16>, vector<144x128xbf16>, vector<32x128xf32> -> vector<32x128xf32>
    %c0_3 = arith.constant 0 : index
    %c0_4 = arith.constant 0 : index
    %3 = vector.load %arg4[%c0_3, %c0_4] : memref<1x128xf32, #tpu.memory_space<vmem>>, vector<1x128xf32>
    %4 = vector.broadcast %3 : vector<1x128xf32> to vector<32x128xf32>
    %5 = arith.addf %2, %4 : vector<32x128xf32>
    %cst_5 = arith.constant 0.000000e+00 : f32
    %6 = vector.broadcast %cst_5 : f32 to vector<32x128xf32>
    %7 = arith.maximumf %5, %6 : vector<32x128xf32>
    %8 = arith.truncf %7 : vector<32x128xf32> to vector<32x128xbf16>
    %c0_6 = arith.constant 0 : index
    %c0_7 = arith.constant 0 : index
    %9 = vector.load %arg5[%c0_6, %c0_7] : memref<32x128xbf16, #tpu.memory_space<vmem>>, vector<32x128xbf16>
    tpu.vector_store %arg5[%c0_6, %c0_7], %8 {strides = array<i32>} : memref<32x128xbf16, #tpu.memory_space<vmem>>, vector<32x128xbf16>,
    return
  }
  func.func @transform_0(%arg0: i32, %arg1: i32) -> (i32, i32) {
    %c0_i32 = arith.constant 0 : i32
    %c0_i32_0 = arith.constant 0 : i32
    return %arg0, %c0_i32 : i32, i32
  }
  func.func @transform_1(%arg0: i32, %arg1: i32) -> (i32, i32) {
    %c0_i32 = arith.constant 0 : i32
    %c0_i32_0 = arith.constant 0 : i32
    return %c0_i32, %arg1 : i32, i32
  }
  func.func @transform_2(%arg0: i32, %arg1: i32) -> (i32, i32) {
    %c0_i32 = arith.constant 0 : i32
    %c0_i32_0 = arith.constant 0 : i32
    return %c0_i32, %arg1 : i32, i32
  }
  func.func @transform_3(%arg0: i32, %arg1: i32) -> (i32, i32) {
    %c0_i32 = arith.constant 0 : i32
    return %arg0, %arg1 : i32, i32
  }
}

module attributes {stable_mosaic.version = 11 : i64} {
  func.func @_mm_multi_kernel(%arg0: i32, %arg1: i32, %arg2: memref<32x288xbf16, #tpu.memory_space<vmem>>, %arg3: memref<288x128xbf16, #tpu.memory_space<vmem>>, %arg4: memref<1x128xf32, #tpu.memory_space<vmem>>, %arg5: memref<32x128xbf16, #tpu.memory_space<vmem>>) attributes {dimension_semantics = [#tpu.dimension_semantics<parallel>, #tpu.dimension_semantics<parallel>], iteration_bounds = array<i64: 1, 1>, scalar_prefetch = 0 : i64, scratch_operands = 0 : i64, tpu.core_type = #tpu.core_type<tc>, window_params = [{transform_indices = @transform_0, window_bounds = array<i64: 32, 288>}, {transform_indices = @transform_1, window_bounds = array<i64: 288, 128>}, {transform_indices = @transform_2, window_bounds = array<i64: 1, 128>}, {transform_indices = @transform_3, window_bounds = array<i64: 32, 128>}]} {
    %c0 = arith.constant 0 : index
    %c0_0 = arith.constant 0 : index
    %0 = vector.load %arg2[%c0, %c0_0] : memref<32x288xbf16, #tpu.memory_space<vmem>>, vector<32x288xbf16>
    %c0_1 = arith.constant 0 : index
    %c0_2 = arith.constant 0 : index
    %1 = vector.load %arg3[%c0_1, %c0_2] : memref<288x128xbf16, #tpu.memory_space<vmem>>, vector<288x128xbf16>
    %cst = arith.constant dense<0.000000e+00> : vector<32x128xf32>
    %2 = tpu.matmul %0, %1, %cst {dimension_numbers = #tpu.dot_dimension_numbers<[1], [0], [0], [1], [0, 0, 1, 1], [], []>} : vector<32x288xbf16>, vector<288x128xbf16>, vector<32x128xf32> -> vector<32x128xf32>
    %c0_3 = arith.constant 0 : index
    %c0_4 = arith.constant 0 : index
    %3 = vector.load %arg4[%c0_3, %c0_4] : memref<1x128xf32, #tpu.memory_space<vmem>>, vector<1x128xf32>
    %4 = vector.broadcast %3 : vector<1x128xf32> to vector<32x128xf32>
    %5 = arith.addf %2, %4 : vector<32x128xf32>
    %cst_5 = arith.constant 0.000000e+00 : f32
    %6 = vector.broadcast %cst_5 : f32 to vector<32x128xf32>
    %7 = arith.maximumf %5, %6 : vector<32x128xf32>
    %8 = arith.truncf %7 : vector<32x128xf32> to vector<32x128xbf16>
    %c0_6 = arith.constant 0 : index
    %c0_7 = arith.constant 0 : index
    %9 = vector.load %arg5[%c0_6, %c0_7] : memref<32x128xbf16, #tpu.memory_space<vmem>>, vector<32x128xbf16>
    tpu.vector_store %arg5[%c0_6, %c0_7], %8 {strides = array<i32>} : memref<32x128xbf16, #tpu.memory_space<vmem>>, vector<32x128xbf16>,
    return
  }
  func.func @transform_0(%arg0: i32, %arg1: i32) -> (i32, i32) {
    %c0_i32 = arith.constant 0 : i32
    %c0_i32_0 = arith.constant 0 : i32
    return %arg0, %c0_i32 : i32, i32
  }
  func.func @transform_1(%arg0: i32, %arg1: i32) -> (i32, i32) {
    %c0_i32 = arith.constant 0 : i32
    %c0_i32_0 = arith.constant 0 : i32
    return %c0_i32, %arg1 : i32, i32
  }
  func.func @transform_2(%arg0: i32, %arg1: i32) -> (i32, i32) {
    %c0_i32 = arith.constant 0 : i32
    %c0_i32_0 = arith.constant 0 : i32
    return %c0_i32, %arg1 : i32, i32
  }
  func.func @transform_3(%arg0: i32, %arg1: i32) -> (i32, i32) {
    %c0_i32 = arith.constant 0 : i32
    return %arg0, %arg1 : i32, i32
  }
}

module attributes {stable_mosaic.version = 11 : i64} {
  func.func @_mm_multi_kernel(%arg0: i32, %arg1: i32, %arg2: memref<32x32xbf16, #tpu.memory_space<vmem>>, %arg3: memref<32x32xbf16, #tpu.memory_space<vmem>>, %arg4: memref<32x32xbf16, #tpu.memory_space<vmem>>, %arg5: memref<32x32xbf16, #tpu.memory_space<vmem>>, %arg6: memref<32x128xbf16, #tpu.memory_space<vmem>>, %arg7: memref<32x128xbf16, #tpu.memory_space<vmem>>, %arg8: memref<32x128xbf16, #tpu.memory_space<vmem>>, %arg9: memref<32x128xbf16, #tpu.memory_space<vmem>>, %arg10: memref<1x128xf32, #tpu.memory_space<vmem>>, %arg11: memref<32x128xf32, #tpu.memory_space<vmem>>) attributes {dimension_semantics = [#tpu.dimension_semantics<parallel>, #tpu.dimension_semantics<parallel>], iteration_bounds = array<i64: 1, 1>, scalar_prefetch = 0 : i64, scratch_operands = 0 : i64, tpu.core_type = #tpu.core_type<tc>, window_params = [{transform_indices = @transform_0, window_bounds = array<i64: 32, 32>}, {transform_indices = @transform_1, window_bounds = array<i64: 32, 32>}, {transform_indices = @transform_2, window_bounds = array<i64: 32, 32>}, {transform_indices = @transform_3, window_bounds = array<i64: 32, 32>}, {transform_indices = @transform_4, window_bounds = array<i64: 32, 128>}, {transform_indices = @transform_5, window_bounds = array<i64: 32, 128>}, {transform_indices = @transform_6, window_bounds = array<i64: 32, 128>}, {transform_indices = @transform_7, window_bounds = array<i64: 32, 128>}, {transform_indices = @transform_8, window_bounds = array<i64: 1, 128>}, {transform_indices = @transform_9, window_bounds = array<i64: 32, 128>}]} {
    %c0 = arith.constant 0 : index
    %c0_0 = arith.constant 0 : index
    %0 = vector.load %arg2[%c0, %c0_0] : memref<32x32xbf16, #tpu.memory_space<vmem>>, vector<32x32xbf16>
    %c0_1 = arith.constant 0 : index
    %c0_2 = arith.constant 0 : index
    %1 = vector.load %arg6[%c0_1, %c0_2] : memref<32x128xbf16, #tpu.memory_space<vmem>>, vector<32x128xbf16>
    %cst = arith.constant dense<0.000000e+00> : vector<32x128xf32>
    %2 = tpu.matmul %0, %1, %cst {dimension_numbers = #tpu.dot_dimension_numbers<[1], [0], [0], [1], [0, 0, 1, 1], [], []>} : vector<32x32xbf16>, vector<32x128xbf16>, vector<32x128xf32> -> vector<32x128xf32>
    %c0_3 = arith.constant 0 : index
    %c0_4 = arith.constant 0 : index
    %3 = vector.load %arg3[%c0_3, %c0_4] : memref<32x32xbf16, #tpu.memory_space<vmem>>, vector<32x32xbf16>
    %c0_5 = arith.constant 0 : index
    %c0_6 = arith.constant 0 : index
    %4 = vector.load %arg7[%c0_5, %c0_6] : memref<32x128xbf16, #tpu.memory_space<vmem>>, vector<32x128xbf16>
    %cst_7 = arith.constant dense<0.000000e+00> : vector<32x128xf32>
    %5 = tpu.matmul %3, %4, %cst_7 {dimension_numbers = #tpu.dot_dimension_numbers<[1], [0], [0], [1], [0, 0, 1, 1], [], []>} : vector<32x32xbf16>, vector<32x128xbf16>, vector<32x128xf32> -> vector<32x128xf32>
    %6 = arith.addf %2, %5 : vector<32x128xf32>
    %c0_8 = arith.constant 0 : index
    %c0_9 = arith.constant 0 : index
    %7 = vector.load %arg4[%c0_8, %c0_9] : memref<32x32xbf16, #tpu.memory_space<vmem>>, vector<32x32xbf16>
    %c0_10 = arith.constant 0 : index
    %c0_11 = arith.constant 0 : index
    %8 = vector.load %arg8[%c0_10, %c0_11] : memref<32x128xbf16, #tpu.memory_space<vmem>>, vector<32x128xbf16>
    %cst_12 = arith.constant dense<0.000000e+00> : vector<32x128xf32>
    %9 = tpu.matmul %7, %8, %cst_12 {dimension_numbers = #tpu.dot_dimension_numbers<[1], [0], [0], [1], [0, 0, 1, 1], [], []>} : vector<32x32xbf16>, vector<32x128xbf16>, vector<32x128xf32> -> vector<32x128xf32>
    %10 = arith.addf %6, %9 : vector<32x128xf32>
    %c0_13 = arith.constant 0 : index
    %c0_14 = arith.constant 0 : index
    %11 = vector.load %arg5[%c0_13, %c0_14] : memref<32x32xbf16, #tpu.memory_space<vmem>>, vector<32x32xbf16>
    %c0_15 = arith.constant 0 : index
    %c0_16 = arith.constant 0 : index
    %12 = vector.load %arg9[%c0_15, %c0_16] : memref<32x128xbf16, #tpu.memory_space<vmem>>, vector<32x128xbf16>
    %cst_17 = arith.constant dense<0.000000e+00> : vector<32x128xf32>
    %13 = tpu.matmul %11, %12, %cst_17 {dimension_numbers = #tpu.dot_dimension_numbers<[1], [0], [0], [1], [0, 0, 1, 1], [], []>} : vector<32x32xbf16>, vector<32x128xbf16>, vector<32x128xf32> -> vector<32x128xf32>
    %14 = arith.addf %10, %13 : vector<32x128xf32>
    %c0_18 = arith.constant 0 : index
    %c0_19 = arith.constant 0 : index
    %15 = vector.load %arg10[%c0_18, %c0_19] : memref<1x128xf32, #tpu.memory_space<vmem>>, vector<1x128xf32>
    %16 = vector.broadcast %15 : vector<1x128xf32> to vector<32x128xf32>
    %17 = arith.addf %14, %16 : vector<32x128xf32>
    %c0_20 = arith.constant 0 : index
    %c0_21 = arith.constant 0 : index
    %18 = vector.load %arg11[%c0_20, %c0_21] : memref<32x128xf32, #tpu.memory_space<vmem>>, vector<32x128xf32>
    tpu.vector_store %arg11[%c0_20, %c0_21], %17 {strides = array<i32>} : memref<32x128xf32, #tpu.memory_space<vmem>>, vector<32x128xf32>,
    return
  }
  func.func @transform_0(%arg0: i32, %arg1: i32) -> (i32, i32) {
    %c0_i32 = arith.constant 0 : i32
    %c0_i32_0 = arith.constant 0 : i32
    return %arg0, %c0_i32 : i32, i32
  }
  func.func @transform_1(%arg0: i32, %arg1: i32) -> (i32, i32) {
    %c0_i32 = arith.constant 0 : i32
    %c0_i32_0 = arith.constant 0 : i32
    return %arg0, %c0_i32 : i32, i32
  }
  func.func @transform_2(%arg0: i32, %arg1: i32) -> (i32, i32) {
    %c0_i32 = arith.constant 0 : i32
    %c0_i32_0 = arith.constant 0 : i32
    return %arg0, %c0_i32 : i32, i32
  }
  func.func @transform_3(%arg0: i32, %arg1: i32) -> (i32, i32) {
    %c0_i32 = arith.constant 0 : i32
    %c0_i32_0 = arith.constant 0 : i32
    return %arg0, %c0_i32 : i32, i32
  }
  func.func @transform_4(%arg0: i32, %arg1: i32) -> (i32, i32) {
    %c0_i32 = arith.constant 0 : i32
    %c0_i32_0 = arith.constant 0 : i32
    return %c0_i32, %arg1 : i32, i32
  }
  func.func @transform_5(%arg0: i32, %arg1: i32) -> (i32, i32) {
    %c0_i32 = arith.constant 0 : i32
    %c0_i32_0 = arith.constant 0 : i32
    return %c0_i32, %arg1 : i32, i32
  }
  func.func @transform_6(%arg0: i32, %arg1: i32) -> (i32, i32) {
    %c0_i32 = arith.constant 0 : i32
    %c0_i32_0 = arith.constant 0 : i32
    return %c0_i32, %arg1 : i32, i32
  }
  func.func @transform_7(%arg0: i32, %arg1: i32) -> (i32, i32) {
    %c0_i32 = arith.constant 0 : i32
    %c0_i32_0 = arith.constant 0 : i32
    return %c0_i32, %arg1 : i32, i32
  }
  func.func @transform_8(%arg0: i32, %arg1: i32) -> (i32, i32) {
    %c0_i32 = arith.constant 0 : i32
    %c0_i32_0 = arith.constant 0 : i32
    return %c0_i32, %arg1 : i32, i32
  }
  func.func @transform_9(%arg0: i32, %arg1: i32) -> (i32, i32) {
    %c0_i32 = arith.constant 0 : i32
    return %arg0, %arg1 : i32, i32
  }
}

module attributes {stable_mosaic.version = 11 : i64} {
  func.func @_mm_multi_kernel(%arg0: i32, %arg1: i32, %arg2: memref<128x288xbf16, #tpu.memory_space<vmem>>, %arg3: memref<128x72xbf16, #tpu.memory_space<vmem>>, %arg4: memref<288x128xbf16, #tpu.memory_space<vmem>>, %arg5: memref<72x128xbf16, #tpu.memory_space<vmem>>, %arg6: memref<1x128xf32, #tpu.memory_space<vmem>>, %arg7: memref<128x128xbf16, #tpu.memory_space<vmem>>) attributes {dimension_semantics = [#tpu.dimension_semantics<parallel>, #tpu.dimension_semantics<parallel>], iteration_bounds = array<i64: 1, 1>, scalar_prefetch = 0 : i64, scratch_operands = 0 : i64, tpu.core_type = #tpu.core_type<tc>, window_params = [{transform_indices = @transform_0, window_bounds = array<i64: 128, 288>}, {transform_indices = @transform_1, window_bounds = array<i64: 128, 72>}, {transform_indices = @transform_2, window_bounds = array<i64: 288, 128>}, {transform_indices = @transform_3, window_bounds = array<i64: 72, 128>}, {transform_indices = @transform_4, window_bounds = array<i64: 1, 128>}, {transform_indices = @transform_5, window_bounds = array<i64: 128, 128>}]} {
    %c0 = arith.constant 0 : index
    %c0_0 = arith.constant 0 : index
    %0 = vector.load %arg2[%c0, %c0_0] : memref<128x288xbf16, #tpu.memory_space<vmem>>, vector<128x288xbf16>
    %c0_1 = arith.constant 0 : index
    %c0_2 = arith.constant 0 : index
    %1 = vector.load %arg4[%c0_1, %c0_2] : memref<288x128xbf16, #tpu.memory_space<vmem>>, vector<288x128xbf16>
    %cst = arith.constant dense<0.000000e+00> : vector<128x128xf32>
    %2 = tpu.matmul %0, %1, %cst {dimension_numbers = #tpu.dot_dimension_numbers<[1], [0], [0], [1], [0, 0, 1, 1], [], []>} : vector<128x288xbf16>, vector<288x128xbf16>, vector<128x128xf32> -> vector<128x128xf32>
    %c0_3 = arith.constant 0 : index
    %c0_4 = arith.constant 0 : index
    %3 = vector.load %arg3[%c0_3, %c0_4] : memref<128x72xbf16, #tpu.memory_space<vmem>>, vector<128x72xbf16>
    %c0_5 = arith.constant 0 : index
    %c0_6 = arith.constant 0 : index
    %4 = vector.load %arg5[%c0_5, %c0_6] : memref<72x128xbf16, #tpu.memory_space<vmem>>, vector<72x128xbf16>
    %cst_7 = arith.constant dense<0.000000e+00> : vector<128x128xf32>
    %5 = tpu.matmul %3, %4, %cst_7 {dimension_numbers = #tpu.dot_dimension_numbers<[1], [0], [0], [1], [0, 0, 1, 1], [], []>} : vector<128x72xbf16>, vector<72x128xbf16>, vector<128x128xf32> -> vector<128x128xf32>
    %6 = arith.addf %2, %5 : vector<128x128xf32>
    %c0_8 = arith.constant 0 : index
    %c0_9 = arith.constant 0 : index
    %7 = vector.load %arg6[%c0_8, %c0_9] : memref<1x128xf32, #tpu.memory_space<vmem>>, vector<1x128xf32>
    %8 = vector.broadcast %7 : vector<1x128xf32> to vector<128x128xf32>
    %9 = arith.addf %6, %8 : vector<128x128xf32>
    %cst_10 = arith.constant 0.000000e+00 : f32
    %10 = vector.broadcast %cst_10 : f32 to vector<128x128xf32>
    %11 = arith.maximumf %9, %10 : vector<128x128xf32>
    %12 = arith.truncf %11 : vector<128x128xf32> to vector<128x128xbf16>
    %c0_11 = arith.constant 0 : index
    %c0_12 = arith.constant 0 : index
    %13 = vector.load %arg7[%c0_11, %c0_12] : memref<128x128xbf16, #tpu.memory_space<vmem>>, vector<128x128xbf16>
    tpu.vector_store %arg7[%c0_11, %c0_12], %12 {strides = array<i32>} : memref<128x128xbf16, #tpu.memory_space<vmem>>, vector<128x128xbf16>,
    return
  }
  func.func @transform_0(%arg0: i32, %arg1: i32) -> (i32, i32) {
    %c0_i32 = arith.constant 0 : i32
    %c0_i32_0 = arith.constant 0 : i32
    return %arg0, %c0_i32 : i32, i32
  }
  func.func @transform_1(%arg0: i32, %arg1: i32) -> (i32, i32) {
    %c0_i32 = arith.constant 0 : i32
    %c0_i32_0 = arith.constant 0 : i32
    return %arg0, %c0_i32 : i32, i32
  }
  func.func @transform_2(%arg0: i32, %arg1: i32) -> (i32, i32) {
    %c0_i32 = arith.constant 0 : i32
    %c0_i32_0 = arith.constant 0 : i32
    return %c0_i32, %arg1 : i32, i32
  }
  func.func @transform_3(%arg0: i32, %arg1: i32) -> (i32, i32) {
    %c0_i32 = arith.constant 0 : i32
    %c0_i32_0 = arith.constant 0 : i32
    return %c0_i32, %arg1 : i32, i32
  }
  func.func @transform_4(%arg0: i32, %arg1: i32) -> (i32, i32) {
    %c0_i32 = arith.constant 0 : i32
    %c0_i32_0 = arith.constant 0 : i32
    return %c0_i32, %arg1 : i32, i32
  }
  func.func @transform_5(%arg0: i32, %arg1: i32) -> (i32, i32) {
    %c0_i32 = arith.constant 0 : i32
    return %arg0, %arg1 : i32, i32
  }
}

module attributes {stable_mosaic.version = 11 : i64} {
  func.func @_mm_multi_kernel(%arg0: i32, %arg1: i32, %arg2: memref<128x288xbf16, #tpu.memory_space<vmem>>, %arg3: memref<288x128xbf16, #tpu.memory_space<vmem>>, %arg4: memref<1x128xf32, #tpu.memory_space<vmem>>, %arg5: memref<128x128xbf16, #tpu.memory_space<vmem>>) attributes {dimension_semantics = [#tpu.dimension_semantics<parallel>, #tpu.dimension_semantics<parallel>], iteration_bounds = array<i64: 1, 1>, scalar_prefetch = 0 : i64, scratch_operands = 0 : i64, tpu.core_type = #tpu.core_type<tc>, window_params = [{transform_indices = @transform_0, window_bounds = array<i64: 128, 288>}, {transform_indices = @transform_1, window_bounds = array<i64: 288, 128>}, {transform_indices = @transform_2, window_bounds = array<i64: 1, 128>}, {transform_indices = @transform_3, window_bounds = array<i64: 128, 128>}]} {
    %c0 = arith.constant 0 : index
    %c0_0 = arith.constant 0 : index
    %0 = vector.load %arg2[%c0, %c0_0] : memref<128x288xbf16, #tpu.memory_space<vmem>>, vector<128x288xbf16>
    %c0_1 = arith.constant 0 : index
    %c0_2 = arith.constant 0 : index
    %1 = vector.load %arg3[%c0_1, %c0_2] : memref<288x128xbf16, #tpu.memory_space<vmem>>, vector<288x128xbf16>
    %cst = arith.constant dense<0.000000e+00> : vector<128x128xf32>
    %2 = tpu.matmul %0, %1, %cst {dimension_numbers = #tpu.dot_dimension_numbers<[1], [0], [0], [1], [0, 0, 1, 1], [], []>} : vector<128x288xbf16>, vector<288x128xbf16>, vector<128x128xf32> -> vector<128x128xf32>
    %c0_3 = arith.constant 0 : index
    %c0_4 = arith.constant 0 : index
    %3 = vector.load %arg4[%c0_3, %c0_4] : memref<1x128xf32, #tpu.memory_space<vmem>>, vector<1x128xf32>
    %4 = vector.broadcast %3 : vector<1x128xf32> to vector<128x128xf32>
    %5 = arith.addf %2, %4 : vector<128x128xf32>
    %cst_5 = arith.constant 0.000000e+00 : f32
    %6 = vector.broadcast %cst_5 : f32 to vector<128x128xf32>
    %7 = arith.maximumf %5, %6 : vector<128x128xf32>
    %8 = arith.truncf %7 : vector<128x128xf32> to vector<128x128xbf16>
    %c0_6 = arith.constant 0 : index
    %c0_7 = arith.constant 0 : index
    %9 = vector.load %arg5[%c0_6, %c0_7] : memref<128x128xbf16, #tpu.memory_space<vmem>>, vector<128x128xbf16>
    tpu.vector_store %arg5[%c0_6, %c0_7], %8 {strides = array<i32>} : memref<128x128xbf16, #tpu.memory_space<vmem>>, vector<128x128xbf16>,
    return
  }
  func.func @transform_0(%arg0: i32, %arg1: i32) -> (i32, i32) {
    %c0_i32 = arith.constant 0 : i32
    %c0_i32_0 = arith.constant 0 : i32
    return %arg0, %c0_i32 : i32, i32
  }
  func.func @transform_1(%arg0: i32, %arg1: i32) -> (i32, i32) {
    %c0_i32 = arith.constant 0 : i32
    %c0_i32_0 = arith.constant 0 : i32
    return %c0_i32, %arg1 : i32, i32
  }
  func.func @transform_2(%arg0: i32, %arg1: i32) -> (i32, i32) {
    %c0_i32 = arith.constant 0 : i32
    %c0_i32_0 = arith.constant 0 : i32
    return %c0_i32, %arg1 : i32, i32
  }
  func.func @transform_3(%arg0: i32, %arg1: i32) -> (i32, i32) {
    %c0_i32 = arith.constant 0 : i32
    return %arg0, %arg1 : i32, i32
  }
}

module attributes {stable_mosaic.version = 11 : i64} {
  func.func @_mm_multi_kernel(%arg0: i32, %arg1: i32, %arg2: memref<128x32xbf16, #tpu.memory_space<vmem>>, %arg3: memref<32x128xbf16, #tpu.memory_space<vmem>>, %arg4: memref<1x128xf32, #tpu.memory_space<vmem>>, %arg5: memref<128x128xf32, #tpu.memory_space<vmem>>) attributes {dimension_semantics = [#tpu.dimension_semantics<parallel>, #tpu.dimension_semantics<parallel>], iteration_bounds = array<i64: 1, 1>, scalar_prefetch = 0 : i64, scratch_operands = 0 : i64, tpu.core_type = #tpu.core_type<tc>, window_params = [{transform_indices = @transform_0, window_bounds = array<i64: 128, 32>}, {transform_indices = @transform_1, window_bounds = array<i64: 32, 128>}, {transform_indices = @transform_2, window_bounds = array<i64: 1, 128>}, {transform_indices = @transform_3, window_bounds = array<i64: 128, 128>}]} {
    %c0 = arith.constant 0 : index
    %c0_0 = arith.constant 0 : index
    %0 = vector.load %arg2[%c0, %c0_0] : memref<128x32xbf16, #tpu.memory_space<vmem>>, vector<128x32xbf16>
    %c0_1 = arith.constant 0 : index
    %c0_2 = arith.constant 0 : index
    %1 = vector.load %arg3[%c0_1, %c0_2] : memref<32x128xbf16, #tpu.memory_space<vmem>>, vector<32x128xbf16>
    %cst = arith.constant dense<0.000000e+00> : vector<128x128xf32>
    %2 = tpu.matmul %0, %1, %cst {dimension_numbers = #tpu.dot_dimension_numbers<[1], [0], [0], [1], [0, 0, 1, 1], [], []>} : vector<128x32xbf16>, vector<32x128xbf16>, vector<128x128xf32> -> vector<128x128xf32>
    %c0_3 = arith.constant 0 : index
    %c0_4 = arith.constant 0 : index
    %3 = vector.load %arg4[%c0_3, %c0_4] : memref<1x128xf32, #tpu.memory_space<vmem>>, vector<1x128xf32>
    %4 = vector.broadcast %3 : vector<1x128xf32> to vector<128x128xf32>
    %5 = arith.addf %2, %4 : vector<128x128xf32>
    %c0_5 = arith.constant 0 : index
    %c0_6 = arith.constant 0 : index
    %6 = vector.load %arg5[%c0_5, %c0_6] : memref<128x128xf32, #tpu.memory_space<vmem>>, vector<128x128xf32>
    tpu.vector_store %arg5[%c0_5, %c0_6], %5 {strides = array<i32>} : memref<128x128xf32, #tpu.memory_space<vmem>>, vector<128x128xf32>,
    return
  }
  func.func @transform_0(%arg0: i32, %arg1: i32) -> (i32, i32) {
    %c0_i32 = arith.constant 0 : i32
    %c0_i32_0 = arith.constant 0 : i32
    return %arg0, %c0_i32 : i32, i32
  }
  func.func @transform_1(%arg0: i32, %arg1: i32) -> (i32, i32) {
    %c0_i32 = arith.constant 0 : i32
    %c0_i32_0 = arith.constant 0 : i32
    return %c0_i32, %arg1 : i32, i32
  }
  func.func @transform_2(%arg0: i32, %arg1: i32) -> (i32, i32) {
    %c0_i32 = arith.constant 0 : i32
    %c0_i32_0 = arith.constant 0 : i32
    return %c0_i32, %arg1 : i32, i32
  }
  func.func @transform_3(%arg0: i32, %arg1: i32) -> (i32, i32) {
    %c0_i32 = arith.constant 0 : i32
    return %arg0, %arg1 : i32, i32
  }
}

</mosaic_0001>

<llo_original>
// kernel: unipose_forward.12
$region0: #{unipose_forward.12}
  #allocation0 [shape = 'u32[]', space=smem, size = 0x4, offset = 0x4, fixed_abs, tag = 'smem constant byte address 0x4 - core index']
  #allocation1 [shape = 'u32[72,128]{1,0:T(1,128)}', space=vmem, size = 0x9000, scoped, tag = 'internal scratch']
  %s0 = inlined_call_operand.vmem [shape: bf16[512,27], index: 0, kind: input, shape index: {}]
  %s1 = inlined_call_operand.vmem [shape: bf16[27,128], index: 1, kind: input, shape index: {}]
  %s2 = inlined_call_operand.vmem [shape: f32[1,128], index: 2, kind: input, shape index: {}]
  %s3 = inlined_call_operand.vmem [shape: bf16[512,128], index: 3, kind: output, shape index: {}]
  %s4 = sld [smem:[#allocation0]]
  $region45: #{unipose_forward.12} parent=0
    _
  %s6 = ssub.s32 1, %s4
  %s7 = scalar_select 0, %s6, %s4
  loop: start=0, step=1, limit=4
  $region2: #{unipose_forward.12} parent=0 // loop_pre_header
    _
  $region3: #{unipose_forward.12} parent=0 // loop_header
    %s9 = sphi 0, %s13
    %p10 = scmp.ge.s32.totalorder %s9, 4
    %s16 = sphi 0, %s28
    %s17 = sphi 0, %s24
    %s18 = sphi 0, %s16
    %s19 = sphi 0, %s17
    %s20 = sphi 0, %s18
    %s21 = sphi 0, %s19
    %s31 = sphi 0, %s33
    %s34 = sphi 0, %s31
    %s35 = sphi 0, %s34
    %s51 = sphi 0, %s35
    %s57 = sphi 0, %s59
    %s60 = sphi 0, %s57
    %s61 = sphi 0, %s60
    %s77 = sphi 0, %s61
    %s83 = sphi 0, %s85
    %s86 = sphi 0, %s83
    %s87 = sphi 0, %s86
    %s103 = sphi 0, %s87
    %s111 = sphi 0, %s113
    %s114 = sphi 0, %s111
    %s115 = sphi 0, %s114
    %s131 = sphi 0, %s115
  $region4: #{unipose_forward.12} parent=0 // loop_header_branch
    %12 = sbr.rel (%p10) target = $region8
  $region5: #{unipose_forward.12} parent=0 // loop_body
    %s14 = ssub.s32 %s9, 1
    %s15 = ssub.s32 %s9, 2
    %s22 = sadd.s32 1, %s17
    %p23 = scmp.ge.s32.totalorder %s22, 1
    %s24 = scalar_select %p23, 0, %s22
    %s25 = sadd.s32 1, %s16
    %s26 = scalar_select %p23, %s25, %s16
    %p27 = scmp.ge.s32.totalorder %s26, 2
    %s28 = scalar_select %p27, 0, %s26
    %s29 = ssub.s32 %s16, %s28
    %p30 = scmp.eq.s32.totalorder %s29, 0
    %s32 = sadd.s32 %s31, 1
    %s33 = scalar_select %p30, %s31, %s32
    %p36 = pneg %p30
    %p37 = scmp.eq.s32.totalorder %s9, 1
    %p38 = por %p36, %p37
    %p39 = scmp.ne.s32.totalorder %s31, %s34
    %p40 = scmp.eq.s32.totalorder %s9, 0
    %p41 = por %p39, %p40
    %p42 = scmp.ne.s32.totalorder %s31, %s34
    %p43 = scmp.eq.s32.totalorder %s14, 1
    %p44 = por %p42, %p43
    %p45 = scmp.ne.s32.totalorder %s34, %s35
    %p46 = scmp.eq.s32.totalorder %s14, 0
    %p47 = por %p45, %p46
    %p48 = scmp.ne.s32.totalorder %s34, %s35
    %p49 = scmp.eq.s32.totalorder %s15, 1
    %p50 = por %p48, %p49
    %p52 = scmp.ne.s32.totalorder %s35, %s51
    %p53 = scmp.eq.s32.totalorder %s15, 0
    %p54 = por %p52, %p53
    %s55 = ssub.s32 %s17, %s24
    %p56 = scmp.eq.s32.totalorder %s55, 0
    %s58 = sadd.s32 %s57, 1
    %s59 = scalar_select %p56, %s57, %s58
    %p62 = pneg %p56
    %p63 = scmp.eq.s32.totalorder %s9, 1
    %p64 = por %p62, %p63
    %p65 = scmp.ne.s32.totalorder %s57, %s60
    %p66 = scmp.eq.s32.totalorder %s9, 0
    %p67 = por %p65, %p66
    %p68 = scmp.ne.s32.totalorder %s57, %s60
    %p69 = scmp.eq.s32.totalorder %s14, 1
    %p70 = por %p68, %p69
    %p71 = scmp.ne.s32.totalorder %s60, %s61
    %p72 = scmp.eq.s32.totalorder %s14, 0
    %p73 = por %p71, %p72
    %p74 = scmp.ne.s32.totalorder %s60, %s61
    %p75 = scmp.eq.s32.totalorder %s15, 1
    %p76 = por %p74, %p75
    %p78 = scmp.ne.s32.totalorder %s61, %s77
    %p79 = scmp.eq.s32.totalorder %s15, 0
    %p80 = por %p78, %p79
    %s81 = ssub.s32 %s17, %s24
    %p82 = scmp.eq.s32.totalorder %s81, 0
    %s84 = sadd.s32 %s83, 1
    %s85 = scalar_select %p82, %s83, %s84
    %p88 = pneg %p82
    %p89 = scmp.eq.s32.totalorder %s9, 1
    %p90 = por %p88, %p89
    %p91 = scmp.ne.s32.totalorder %s83, %s86
    %p92 = scmp.eq.s32.totalorder %s9, 0
    %p93 = por %p91, %p92
    %p94 = scmp.ne.s32.totalorder %s83, %s86
    %p95 = scmp.eq.s32.totalorder %s14, 1
    %p96 = por %p94, %p95
    %p97 = scmp.ne.s32.totalorder %s86, %s87
    %p98 = scmp.eq.s32.totalorder %s14, 0
    %p99 = por %p97, %p98
    %p100 = scmp.ne.s32.totalorder %s86, %s87
    %p101 = scmp.eq.s32.totalorder %s15, 1
    %p102 = por %p100, %p101
    %p104 = scmp.ne.s32.totalorder %s87, %s103
    %p105 = scmp.eq.s32.totalorder %s15, 0
    %p106 = por %p104, %p105
    %s107 = ssub.s32 %s16, %s28
    %s108 = ssub.s32 %s17, %s24
    %s109 = sor.u32 %s107, %s108
    %p110 = scmp.eq.s32.totalorder %s109, 0
    %s112 = sadd.s32 %s111, 1
    %s113 = scalar_select %p110, %s111, %s112
    %p116 = pneg %p110
    %p117 = scmp.eq.s32.totalorder %s9, 1
    %p118 = por %p116, %p117
    %p119 = scmp.ne.s32.totalorder %s111, %s114
    %p120 = scmp.eq.s32.totalorder %s9, 0
    %p121 = por %p119, %p120
    %p122 = scmp.ne.s32.totalorder %s111, %s114
    %p123 = scmp.eq.s32.totalorder %s14, 1
    %p124 = por %p122, %p123
    %p125 = scmp.ne.s32.totalorder %s114, %s115
    %p126 = scmp.eq.s32.totalorder %s14, 0
    %p127 = por %p125, %p126
    %p128 = scmp.ne.s32.totalorder %s114, %s115
    %p129 = scmp.eq.s32.totalorder %s15, 1
    %p130 = por %p128, %p129
    %p132 = scmp.ne.s32.totalorder %s115, %s131
    %p133 = scmp.eq.s32.totalorder %s15, 0
    %p134 = por %p132, %p133
    %p135 = scmp.le.s32.totalorder 1, %s9
    %p136 = scmp.lt.s32.totalorder %s9, 3
    %p137 = pnand %p135, %p136
    %p138 = pneg %p137
    // Predicated region
    $region9: #{unipose_forward.12} parent=5 // pred_check
      _
    $region10: #{unipose_forward.12} parent=5 // pred_check_branch
      %140 = sbr.rel (%p137) target = $region12
    $region11: #{unipose_forward.12} parent=5 // pred_region
      %s141 = ssub.s32 %s9, 1
      // Predicated region
      $region13: #{unipose_forward.12} parent=11 // pred_check
        %p142 = pneg %p73
      $region14: #{unipose_forward.12} parent=11 // pred_check_branch
        %144 = sbr.rel (%p142) target = $region16
      $region15: #{unipose_forward.12} parent=11 // pred_region
        %p145 = scmp.lt.s32.totalorder %s19, 0
        %s146 = scalar_select %p145, %s19, 0
        %s147 = smul.addr %s146, 4
        %s148 = scalar_lea.vmem %s1, %s147
      $region16: #{unipose_forward.12} parent=11 // pred_fallthru
        _
      // Predicated region
      $region17: #{unipose_forward.12} parent=11 // pred_check
        %p149 = pneg %p99
      $region18: #{unipose_forward.12} parent=11 // pred_check_branch
        %151 = sbr.rel (%p149) target = $region20
      $region19: #{unipose_forward.12} parent=11 // pred_region
        %p152 = scmp.lt.s32.totalorder %s19, 0
        %s153 = scalar_select %p152, %s19, 0
        %s154 = scalar_lea.vmem %s2, %s153
      $region20: #{unipose_forward.12} parent=11 // pred_fallthru
        _
    $region12: #{unipose_forward.12} parent=5 // pred_fallthru
      _
    %p155 = scmp.lt.s32.totalorder %s9, 2
    // Predicated region
    $region21: #{unipose_forward.12} parent=5 // pred_check
      %p156 = pneg %p155
    $region22: #{unipose_forward.12} parent=5 // pred_check_branch
      %158 = sbr.rel (%p156) target = $region24
    $region23: #{unipose_forward.12} parent=5 // pred_region
      // Predicated region
      $region25: #{unipose_forward.12} parent=23 // pred_check
        %p159 = pneg %p41
      $region26: #{unipose_forward.12} parent=23 // pred_check_branch
        %161 = sbr.rel (%p159) target = $region28
      $region27: #{unipose_forward.12} parent=23 // pred_region
        %s162 = smul.u32 32, %s16
        %p163 = scmp.lt.s32.totalorder %s162, 63
        %s164 = scalar_select %p163, %s162, 63
        %s165 = smul.addr %s164, 4
        %s166 = scalar_lea.vmem %s0, %s165
        %s167 = smul.u32 32, %s16
      $region28: #{unipose_forward.12} parent=23 // pred_fallthru
        _
    $region24: #{unipose_forward.12} parent=5 // pred_fallthru
      _
    %p168 = scmp.le.s32.totalorder 1, %s9
    %p169 = scmp.lt.s32.totalorder %s9, 3
    %p170 = pnand %p168, %p169
    %p171 = pneg %p170
    // Predicated region
    $region29: #{unipose_forward.12} parent=5 // pred_check
      _
    $region30: #{unipose_forward.12} parent=5 // pred_check_branch
      %173 = sbr.rel (%p170) target = $region32
    $region31: #{unipose_forward.12} parent=5 // pred_region
      %s174 = ssub.s32 %s9, 1
      %s175 = smul.u32 32, %s18
      %p176 = scmp.lt.s32.totalorder %s175, 63
      %s177 = scalar_select %p176, %s175, 63
      %s178 = smul.addr %s177, 4
      %s179 = scalar_lea.vmem %s0, %s178
      %p180 = pneg %p47
      %p181 = pneg %p44
      %p182 = scmp.lt.s32.totalorder %s19, 0
      %s183 = scalar_select %p182, %s19, 0
      %s184 = smul.addr %s183, 4
      %s185 = scalar_lea.vmem %s1, %s184
      %p186 = pneg %p73
      %p187 = pneg %p70
      %p188 = scmp.lt.s32.totalorder %s19, 0
      %s189 = scalar_select %p188, %s19, 0
      %s190 = scalar_lea.vmem %s2, %s189
      %p191 = pneg %p99
      %p192 = pneg %p96
      %p193 = pneg %p127
      %p194 = pneg %p124
      %s195 = smul.u32 32, %s18
      %p196 = scmp.lt.s32.totalorder %s195, 63
      %s197 = scalar_select %p196, %s195, 63
      %p198 = scmp.lt.s32.totalorder %s19, 0
      %s199 = scalar_select %p198, %s19, 0
      %s200 = sadd.s32 %s199, %s197
      %s201 = smul.addr %s200, 4
      %s202 = scalar_lea.vmem %s3, %s201
      %s203 = smul.u32 32, %s18
      %p204 = scmp.lt.s32.totalorder %s203, 63
      %s205 = scalar_select %p204, %s203, 63
      %s206 = smul.addr %s205, 4
      %s207 = scalar_lea.vmem %s0, %s206
      %s208 = smul.u32 32, %s18
      %p209 = scmp.lt.s32.totalorder %s19, 0
      %s210 = scalar_select %p209, %s19, 0
      %s211 = smul.addr %s210, 4
      %s212 = scalar_lea.vmem %s1, %s211
      %p213 = scmp.lt.s32.totalorder %s19, 0
      %s214 = scalar_select %p213, %s19, 0
      %s215 = scalar_lea.vmem %s2, %s214
      %s216 = smul.u32 32, %s18
      %p217 = scmp.lt.s32.totalorder %s216, 63
      %s218 = scalar_select %p217, %s216, 63
      %p219 = scmp.lt.s32.totalorder %s19, 0
      %s220 = scalar_select %p219, %s19, 0
      %s221 = sadd.s32 %s220, %s218
      %s222 = smul.addr %s221, 4
      %s223 = scalar_lea.vmem %s3, %s222
      %s224 = smul.u32 32, %s18
      %v226 = vld [vmem:[%s207] sm:$0xf]
      %v227 = vld [vmem:[%s207 + $0x4] sm:$0xf]
      %v228 = vld [vmem:[%s207 + $0x8] sm:$0xf]
      %v229 = vld [vmem:[%s207 + $0xc] sm:$0xf]
      %v230 = vld [vmem:[%s207 + $0x10] sm:$0xf]
      %v231 = vld [vmem:[%s207 + $0x14] sm:$0xf]
      %v232 = vld [vmem:[%s207 + $0x18] sm:$0xf]
      %v233 = vld [vmem:[%s207 + $0x1c] sm:$0xf]
      %v234 = vld [vmem:[%s207 + $0x20] sm:$0xf]
      %v235 = vld [vmem:[%s207 + $0x24] sm:$0xf]
      %v236 = vld [vmem:[%s207 + $0x28] sm:$0xf]
      %v237 = vld [vmem:[%s207 + $0x2c] sm:$0xf]
      %v238 = vld [vmem:[%s207 + $0x30] sm:$0xf]
      %v239 = vld [vmem:[%s207 + $0x34] sm:$0xf]
      %v240 = vld [vmem:[%s207 + $0x38] sm:$0xf]
      %v241 = vld [vmem:[%s207 + $0x3c] sm:$0xf]
      %v242 = vld [vmem:[%s207 + $0x40] sm:$0xf]
      %v243 = vld [vmem:[%s207 + $0x44] sm:$0xf]
      %v244 = vld [vmem:[%s207 + $0x48] sm:$0xf]
      %v245 = vld [vmem:[%s207 + $0x4c] sm:$0xf]
      %v246 = vld [vmem:[%s207 + $0x50] sm:$0xf]
      %v247 = vld [vmem:[%s207 + $0x54] sm:$0xf]
      %v248 = vld [vmem:[%s207 + $0x58] sm:$0xf]
      %v249 = vld [vmem:[%s207 + $0x5c] sm:$0xf]
      %v250 = vld [vmem:[%s207 + $0x60] sm:$0xf]
      %v251 = vld [vmem:[%s207 + $0x64] sm:$0xf]
      %v252 = vld [vmem:[%s207 + $0x68] sm:$0xf]
      %v253 = vld [vmem:[%s207 + $0x6c] sm:$0xf]
      %v254 = vld [vmem:[%s207 + $0x70] sm:$0xf]
      %v255 = vld [vmem:[%s207 + $0x74] sm:$0xf]
      %v256 = vld [vmem:[%s207 + $0x78] sm:$0xf]
      %v257 = vld [vmem:[%s207 + $0x7c] sm:$0xf]
      %v258 = vld [vmem:[%s212] sm:$0xf]
      %v259 = vld [vmem:[%s212 + $0x4] sm:$0xf]
      %v260 = vld [vmem:[%s212 + $0x8] sm:$0xf]
      %v261 = vld [vmem:[%s212 + $0xc] sm:$0x3]
      %v262 = vld [vmem:[%s215] sm:$0x1]
      %v264 = vperm.slane %v262, 0
      %v298 = vunpack.c.l.b16 %v226
      %v299 = vunpack.c.l.b16 %v227
      %v300 = vunpack.c.l.b16 %v228
      %v301 = vunpack.c.l.b16 %v229
      %v302 = vunpack.c.l.b16 %v230
      %v303 = vunpack.c.l.b16 %v231
      %v304 = vunpack.c.l.b16 %v232
      %v305 = vunpack.c.l.b16 %v233
      %v306 = vunpack.c.l.b16 %v234
      %v307 = vunpack.c.l.b16 %v235
      %v308 = vunpack.c.l.b16 %v236
      %v309 = vunpack.c.l.b16 %v237
      %v310 = vunpack.c.l.b16 %v238
      %v311 = vunpack.c.l.b16 %v239
      %v312 = vunpack.c.l.b16 %v240
      %v313 = vunpack.c.l.b16 %v241
      %v314 = vunpack.c.l.b16 %v242
      %v315 = vunpack.c.l.b16 %v243
      %v316 = vunpack.c.l.b16 %v244
      %v317 = vunpack.c.l.b16 %v245
      %v318 = vunpack.c.l.b16 %v246
      %v319 = vunpack.c.l.b16 %v247
      %v320 = vunpack.c.l.b16 %v248
      %v321 = vunpack.c.l.b16 %v249
      %v322 = vunpack.c.l.b16 %v250
      %v323 = vunpack.c.l.b16 %v251
      %v324 = vunpack.c.l.b16 %v252
      %v325 = vunpack.c.l.b16 %v253
      %v326 = vunpack.c.l.b16 %v254
      %v327 = vunpack.c.l.b16 %v255
      %v328 = vunpack.c.l.b16 %v256
      %v329 = vunpack.c.l.b16 %v257
      %v330 = vpack.c.b16 %v299, %v298
      %v331 = vpack.c.b16 %v301, %v300
      %v332 = vpack.c.b16 %v303, %v302
      %v333 = vpack.c.b16 %v305, %v304
      %v334 = vpack.c.b16 %v307, %v306
      %v335 = vpack.c.b16 %v309, %v308
      %v336 = vpack.c.b16 %v311, %v310
      %v337 = vpack.c.b16 %v313, %v312
      %v338 = vpack.c.b16 %v315, %v314
      %v339 = vpack.c.b16 %v317, %v316
      %v340 = vpack.c.b16 %v319, %v318
      %v341 = vpack.c.b16 %v321, %v320
      %v342 = vpack.c.b16 %v323, %v322
      %v343 = vpack.c.b16 %v325, %v324
      %v344 = vpack.c.b16 %v327, %v326
      %v345 = vpack.c.b16 %v329, %v328
      %v350 = vunpack.c.l.b16 %v258
      %v351 = vunpack.c.l.b16 %v259
      %v352 = vunpack.c.l.b16 %v260
      %v353 = vunpack.c.l.b16 %v261
      %v354 = vpack.c.b16 %v351, %v350
      %v355 = vpack.c.b16 %v353, %v352
      %vm357 = vcmask 220160
      %v359 = vsel %vm357, %v330, 0
      %v362 = vsel %vm357, %v331, 0
      %v365 = vsel %vm357, %v332, 0
      %v368 = vsel %vm357, %v333, 0
      %v371 = vsel %vm357, %v334, 0
      %v374 = vsel %vm357, %v335, 0
      %v377 = vsel %vm357, %v336, 0
      %v380 = vsel %vm357, %v337, 0
      %v383 = vsel %vm357, %v338, 0
      %v386 = vsel %vm357, %v339, 0
      %v389 = vsel %vm357, %v340, 0
      %v392 = vsel %vm357, %v341, 0
      %v395 = vsel %vm357, %v342, 0
      %v398 = vsel %vm357, %v343, 0
      %v401 = vsel %vm357, %v344, 0
      %v404 = vsel %vm357, %v345, 0
      %vm406 = vcmask 1044480
      %vm407 = vcmask 1045504
      %v408 = vsel %vm406, 4294967295, 65535
      %v409 = vsel %vm407, %v408, 0
      %v411 = vand.u32 %v355, %v409
      %413 = vmatpush.bf16.msra.mxu0 0
      %414 = vmatpush.bf16.msra.mxu0 0
      %415 = vmatpush.bf16.msra.mxu0 0
      %416 = vmatpush.bf16.msra.mxu0 0
      %417 = vmatpush.bf16.msra.mxu0 0
      %418 = vmatpush.bf16.msra.mxu0 0
      %419 = vmatpush.bf16.msra.mxu0 %v411
      %420 = vmatpush.bf16.msra.mxu0 %v354
      %421 = vmatmul.bf16.gmra.mxu0 %v359
      %v422 = vpop.f32.mrf.mxu0
      %v423 = vadd.f32 %v264, %v422
      %v424 = vpop.f32.mrf.mxu0
      %v425 = vadd.f32 %v264, %v424
      %426 = vmatmul.bf16.gmra.mxu0 %v362
      %v427 = vpop.f32.mrf.mxu0
      %v428 = vadd.f32 %v264, %v427
      %v429 = vpop.f32.mrf.mxu0
      %v430 = vadd.f32 %v264, %v429
      %431 = vmatmul.bf16.gmra.mxu0 %v365
      %v432 = vpop.f32.mrf.mxu0
      %v433 = vadd.f32 %v264, %v432
      %v434 = vpop.f32.mrf.mxu0
      %v435 = vadd.f32 %v264, %v434
      %436 = vmatmul.bf16.gmra.mxu0 %v368
      %v437 = vpop.f32.mrf.mxu0
      %v438 = vadd.f32 %v264, %v437
      %v439 = vpop.f32.mrf.mxu0
      %v440 = vadd.f32 %v264, %v439
      %441 = vmatmul.bf16.gmra.mxu0 %v371
      %v442 = vpop.f32.mrf.mxu0
      %v443 = vadd.f32 %v264, %v442
      %v444 = vpop.f32.mrf.mxu0
      %v445 = vadd.f32 %v264, %v444
      %446 = vmatmul.bf16.gmra.mxu0 %v374
      %v447 = vpop.f32.mrf.mxu0
      %v448 = vadd.f32 %v264, %v447
      %v449 = vpop.f32.mrf.mxu0
      %v450 = vadd.f32 %v264, %v449
      %451 = vmatmul.bf16.gmra.mxu0 %v377
      %v452 = vpop.f32.mrf.mxu0
      %v453 = vadd.f32 %v264, %v452
      %v454 = vpop.f32.mrf.mxu0
      %v455 = vadd.f32 %v264, %v454
      %456 = vmatmul.bf16.gmra.mxu0 %v380
      %v457 = vpop.f32.mrf.mxu0
      %v458 = vadd.f32 %v264, %v457
      %v459 = vpop.f32.mrf.mxu0
      %v460 = vadd.f32 %v264, %v459
      %461 = vmatmul.bf16.gmra.mxu0 %v383
      %v462 = vpop.f32.mrf.mxu0
      %v463 = vadd.f32 %v264, %v462
      %v464 = vpop.f32.mrf.mxu0
      %v465 = vadd.f32 %v264, %v464
      %466 = vmatmul.bf16.gmra.mxu0 %v386
      %v467 = vpop.f32.mrf.mxu0
      %v468 = vadd.f32 %v264, %v467
      %v469 = vpop.f32.mrf.mxu0
      %v470 = vadd.f32 %v264, %v469
      %471 = vmatmul.bf16.gmra.mxu0 %v389
      %v472 = vpop.f32.mrf.mxu0
      %v473 = vadd.f32 %v264, %v472
      %v474 = vpop.f32.mrf.mxu0
      %v475 = vadd.f32 %v264, %v474
      %476 = vmatmul.bf16.gmra.mxu0 %v392
      %v477 = vpop.f32.mrf.mxu0
      %v478 = vadd.f32 %v264, %v477
      %v479 = vpop.f32.mrf.mxu0
      %v480 = vadd.f32 %v264, %v479
      %481 = vmatmul.bf16.gmra.mxu0 %v395
      %v482 = vpop.f32.mrf.mxu0
      %v483 = vadd.f32 %v264, %v482
      %v484 = vpop.f32.mrf.mxu0
      %v485 = vadd.f32 %v264, %v484
      %486 = vmatmul.bf16.gmra.mxu0 %v398
      %v487 = vpop.f32.mrf.mxu0
      %v488 = vadd.f32 %v264, %v487
      %v489 = vpop.f32.mrf.mxu0
      %v490 = vadd.f32 %v264, %v489
      %491 = vmatmul.bf16.gmra.mxu0 %v401
      %v492 = vpop.f32.mrf.mxu0
      %v493 = vadd.f32 %v264, %v492
      %v494 = vpop.f32.mrf.mxu0
      %v495 = vadd.f32 %v264, %v494
      %496 = vmatmul.bf16.gmra.mxu0 %v404
      %v497 = vpop.f32.mrf.mxu0
      %v498 = vadd.f32 %v264, %v497
      %v499 = vpop.f32.mrf.mxu0
      %v500 = vadd.f32 %v264, %v499
      %501 = vdwg.mxu0
      %v502 = vmax.f32 %v423, 0.0
      %v503 = vmax.f32 %v425, 0.0
      %v504 = vmax.f32 %v428, 0.0
      %v505 = vmax.f32 %v430, 0.0
      %v506 = vmax.f32 %v433, 0.0
      %v507 = vmax.f32 %v435, 0.0
      %v508 = vmax.f32 %v438, 0.0
      %v509 = vmax.f32 %v440, 0.0
      %v510 = vmax.f32 %v443, 0.0
      %v511 = vmax.f32 %v445, 0.0
      %v512 = vmax.f32 %v448, 0.0
      %v513 = vmax.f32 %v450, 0.0
      %v514 = vmax.f32 %v453, 0.0
      %v515 = vmax.f32 %v455, 0.0
      %v516 = vmax.f32 %v458, 0.0
      %v517 = vmax.f32 %v460, 0.0
      %v518 = vmax.f32 %v463, 0.0
      %v519 = vmax.f32 %v465, 0.0
      %v520 = vmax.f32 %v468, 0.0
      %v521 = vmax.f32 %v470, 0.0
      %v522 = vmax.f32 %v473, 0.0
      %v523 = vmax.f32 %v475, 0.0
      %v524 = vmax.f32 %v478, 0.0
      %v525 = vmax.f32 %v480, 0.0
      %v526 = vmax.f32 %v483, 0.0
      %v527 = vmax.f32 %v485, 0.0
      %v528 = vmax.f32 %v488, 0.0
      %v529 = vmax.f32 %v490, 0.0
      %v530 = vmax.f32 %v493, 0.0
      %v531 = vmax.f32 %v495, 0.0
      %v532 = vmax.f32 %v498, 0.0
      %v533 = vmax.f32 %v500, 0.0
      %v534 = vpack.c.bf16 %v502, %v502
      %v535 = vpack.c.bf16 %v503, %v503
      %v536 = vpack.c.bf16 %v504, %v504
      %v537 = vpack.c.bf16 %v505, %v505
      %v538 = vpack.c.bf16 %v506, %v506
      %v539 = vpack.c.bf16 %v507, %v507
      %v540 = vpack.c.bf16 %v508, %v508
      %v541 = vpack.c.bf16 %v509, %v509
      %v542 = vpack.c.bf16 %v510, %v510
      %v543 = vpack.c.bf16 %v511, %v511
      %v544 = vpack.c.bf16 %v512, %v512
      %v545 = vpack.c.bf16 %v513, %v513
      %v546 = vpack.c.bf16 %v514, %v514
      %v547 = vpack.c.bf16 %v515, %v515
      %v548 = vpack.c.bf16 %v516, %v516
      %v549 = vpack.c.bf16 %v517, %v517
      %v550 = vpack.c.bf16 %v518, %v518
      %v551 = vpack.c.bf16 %v519, %v519
      %v552 = vpack.c.bf16 %v520, %v520
      %v553 = vpack.c.bf16 %v521, %v521
      %v554 = vpack.c.bf16 %v522, %v522
      %v555 = vpack.c.bf16 %v523, %v523
      %v556 = vpack.c.bf16 %v524, %v524
      %v557 = vpack.c.bf16 %v525, %v525
      %v558 = vpack.c.bf16 %v526, %v526
      %v559 = vpack.c.bf16 %v527, %v527
      %v560 = vpack.c.bf16 %v528, %v528
      %v561 = vpack.c.bf16 %v529, %v529
      %v562 = vpack.c.bf16 %v530, %v530
      %v563 = vpack.c.bf16 %v531, %v531
      %v564 = vpack.c.bf16 %v532, %v532
      %v565 = vpack.c.bf16 %v533, %v533
      %566 = vst [vmem:[%s223] sm:$0xf] %v534
      %567 = vst [vmem:[%s223 + $0x4] sm:$0xf] %v535
      %568 = vst [vmem:[%s223 + $0x8] sm:$0xf] %v536
      %569 = vst [vmem:[%s223 + $0xc] sm:$0xf] %v537
      %570 = vst [vmem:[%s223 + $0x10] sm:$0xf] %v538
      %571 = vst [vmem:[%s223 + $0x14] sm:$0xf] %v539
      %572 = vst [vmem:[%s223 + $0x18] sm:$0xf] %v540
      %573 = vst [vmem:[%s223 + $0x1c] sm:$0xf] %v541
      %574 = vst [vmem:[%s223 + $0x20] sm:$0xf] %v542
      %575 = vst [vmem:[%s223 + $0x24] sm:$0xf] %v543
      %576 = vst [vmem:[%s223 + $0x28] sm:$0xf] %v544
      %577 = vst [vmem:[%s223 + $0x2c] sm:$0xf] %v545
      %578 = vst [vmem:[%s223 + $0x30] sm:$0xf] %v546
      %579 = vst [vmem:[%s223 + $0x34] sm:$0xf] %v547
      %580 = vst [vmem:[%s223 + $0x38] sm:$0xf] %v548
      %581 = vst [vmem:[%s223 + $0x3c] sm:$0xf] %v549
      %582 = vst [vmem:[%s223 + $0x40] sm:$0xf] %v550
      %583 = vst [vmem:[%s223 + $0x44] sm:$0xf] %v551
      %584 = vst [vmem:[%s223 + $0x48] sm:$0xf] %v552
      %585 = vst [vmem:[%s223 + $0x4c] sm:$0xf] %v553
      %586 = vst [vmem:[%s223 + $0x50] sm:$0xf] %v554
      %587 = vst [vmem:[%s223 + $0x54] sm:$0xf] %v555
      %588 = vst [vmem:[%s223 + $0x58] sm:$0xf] %v556
      %589 = vst [vmem:[%s223 + $0x5c] sm:$0xf] %v557
      %590 = vst [vmem:[%s223 + $0x60] sm:$0xf] %v558
      %591 = vst [vmem:[%s223 + $0x64] sm:$0xf] %v559
      %592 = vst [vmem:[%s223 + $0x68] sm:$0xf] %v560
      %593 = vst [vmem:[%s223 + $0x6c] sm:$0xf] %v561
      %594 = vst [vmem:[%s223 + $0x70] sm:$0xf] %v562
      %595 = vst [vmem:[%s223 + $0x74] sm:$0xf] %v563
      %596 = vst [vmem:[%s223 + $0x78] sm:$0xf] %v564
      %597 = vst [vmem:[%s223 + $0x7c] sm:$0xf] %v565
      %s598 = smul.u32 32, %s18
      %p599 = scmp.lt.s32.totalorder %s598, 63
      %s600 = scalar_select %p599, %s598, 63
      %p601 = scmp.lt.s32.totalorder %s19, 0
      %s602 = scalar_select %p601, %s19, 0
      %s603 = sadd.s32 %s602, %s600
      %s604 = smul.addr %s603, 4
      %s605 = scalar_lea.vmem %s3, %s604
      // Predicated region
      $region33: #{unipose_forward.12} parent=31 // pred_check
        %p606 = pneg %p124
      $region34: #{unipose_forward.12} parent=31 // pred_check_branch
        %608 = sbr.rel (%p606) target = $region36
      $region35: #{unipose_forward.12} parent=31 // pred_region
        %s609 = smul.u32 32, %s18
      $region36: #{unipose_forward.12} parent=31 // pred_fallthru
        _
    $region32: #{unipose_forward.12} parent=5 // pred_fallthru
      _
    %p610 = scmp.le.s32.totalorder 2, %s9
    // Predicated region
    $region37: #{unipose_forward.12} parent=5 // pred_check
      %p611 = pneg %p610
    $region38: #{unipose_forward.12} parent=5 // pred_check_branch
      %613 = sbr.rel (%p611) target = $region40
    $region39: #{unipose_forward.12} parent=5 // pred_region
      %s614 = ssub.s32 %s9, 2
      // Predicated region
      $region41: #{unipose_forward.12} parent=39 // pred_check
        %p615 = pneg %p130
      $region42: #{unipose_forward.12} parent=39 // pred_check_branch
        %617 = sbr.rel (%p615) target = $region44
      $region43: #{unipose_forward.12} parent=39 // pred_region
        %s618 = smul.u32 32, %s20
        %p619 = scmp.lt.s32.totalorder %s618, 63
        %s620 = scalar_select %p619, %s618, 63
        %p621 = scmp.lt.s32.totalorder %s21, 0
        %s622 = scalar_select %p621, %s21, 0
        %s623 = sadd.s32 %s622, %s620
        %s624 = smul.addr %s623, 4
        %s625 = scalar_lea.vmem %s3, %s624
      $region44: #{unipose_forward.12} parent=39 // pred_fallthru
        _
    $region40: #{unipose_forward.12} parent=5 // pred_fallthru
      _
  $region6: #{unipose_forward.12} parent=0 // loop_footer
    %s13 = sadd.s32 1, %s9
  $region7: #{unipose_forward.12} parent=0 // loop_footer_branch
    %8 = sbr.rel target = $region3
  $region8: #{unipose_forward.12} parent=0 // loop_exit
    _

// kernel: unipose_forward.13
$region0: #{unipose_forward.13}
  #allocation0 [shape = 'u32[]', space=smem, size = 0x4, offset = 0x4, fixed_abs, tag = 'smem constant byte address 0x4 - core index']
  #allocation1 [shape = 'u32[72,128]{1,0:T(1,128)}', space=vmem, size = 0x9000, scoped, tag = 'internal scratch']
  %s0 = inlined_call_operand.vmem [shape: bf16[128,72], index: 0, kind: input, shape index: {}]
  %s1 = inlined_call_operand.vmem [shape: bf16[72,128], index: 1, kind: input, shape index: {}]
  %s2 = inlined_call_operand.vmem [shape: f32[1,128], index: 2, kind: input, shape index: {}]
  %s3 = inlined_call_operand.vmem [shape: bf16[128,128], index: 3, kind: output, shape index: {}]
  %s4 = sld [smem:[#allocation0]]
  $region22: #{unipose_forward.13} parent=0
    _
  %s6 = ssub.s32 1, %s4
  %s7 = scalar_select 0, %s6, %s4
  // Predicated region
  $region2: #{unipose_forward.13} parent=0 // pred_check
    _
  $region3: #{unipose_forward.13} parent=0 // pred_check_branch
    %9 = sbr.rel (0) target = $region5
  $region4: #{unipose_forward.13} parent=0 // pred_region
    _
  $region5: #{unipose_forward.13} parent=0 // pred_fallthru
    _
  // Predicated region
  $region6: #{unipose_forward.13} parent=0 // pred_check
    _
  $region7: #{unipose_forward.13} parent=0 // pred_check_branch
    %11 = sbr.rel (0) target = $region9
  $region8: #{unipose_forward.13} parent=0 // pred_region
    _
  $region9: #{unipose_forward.13} parent=0 // pred_fallthru
    _
  // Predicated region
  $region10: #{unipose_forward.13} parent=0 // pred_check
    _
  $region11: #{unipose_forward.13} parent=0 // pred_check_branch
    %13 = sbr.rel (0) target = $region13
  $region12: #{unipose_forward.13} parent=0 // pred_region
    _
  $region13: #{unipose_forward.13} parent=0 // pred_fallthru
    _
  %v15 = vld [vmem:[%s0] sm:$0xf]
  %v16 = vld [vmem:[%s0 + $0x4] sm:$0xf]
  %v17 = vld [vmem:[%s0 + $0x8] sm:$0xf]
  %v18 = vld [vmem:[%s0 + $0xc] sm:$0xf]
  %v19 = vld [vmem:[%s0 + $0x10] sm:$0xf]
  %v20 = vld [vmem:[%s0 + $0x14] sm:$0xf]
  %v21 = vld [vmem:[%s0 + $0x18] sm:$0xf]
  %v22 = vld [vmem:[%s0 + $0x1c] sm:$0xf]
  %v23 = vld [vmem:[%s0 + $0x20] sm:$0xf]
  %v24 = vld [vmem:[%s0 + $0x24] sm:$0xf]
  %v25 = vld [vmem:[%s0 + $0x28] sm:$0xf]
  %v26 = vld [vmem:[%s0 + $0x2c] sm:$0xf]
  %v27 = vld [vmem:[%s0 + $0x30] sm:$0xf]
  %v28 = vld [vmem:[%s0 + $0x34] sm:$0xf]
  %v29 = vld [vmem:[%s0 + $0x38] sm:$0xf]
  %v30 = vld [vmem:[%s0 + $0x3c] sm:$0xf]
  %v31 = vld [vmem:[%s1] sm:$0xf]
  %v32 = vld [vmem:[%s1 + $0x4] sm:$0xf]
  %v33 = vld [vmem:[%s1 + $0x8] sm:$0xf]
  %v34 = vld [vmem:[%s1 + $0xc] sm:$0xf]
  %v35 = vld [vmem:[%s1 + $0x10] sm:$0xf]
  %v36 = vld [vmem:[%s1 + $0x14] sm:$0xf]
  %v37 = vld [vmem:[%s1 + $0x18] sm:$0xf]
  %v38 = vld [vmem:[%s1 + $0x1c] sm:$0xf]
  %v39 = vld [vmem:[%s1 + $0x20] sm:$0xf]
  %v40 = vld [vmem:[%s2] sm:$0x1]
  %v42 = vperm.slane %v40, 0
  %v60 = vunpack.c.l.b16 %v15
  %v61 = vunpack.c.l.b16 %v16
  %v62 = vunpack.c.l.b16 %v17
  %v63 = vunpack.c.l.b16 %v18
  %v64 = vunpack.c.l.b16 %v19
  %v65 = vunpack.c.l.b16 %v20
  %v66 = vunpack.c.l.b16 %v21
  %v67 = vunpack.c.l.b16 %v22
  %v68 = vunpack.c.l.b16 %v23
  %v69 = vunpack.c.l.b16 %v24
  %v70 = vunpack.c.l.b16 %v25
  %v71 = vunpack.c.l.b16 %v26
  %v72 = vunpack.c.l.b16 %v27
  %v73 = vunpack.c.l.b16 %v28
  %v74 = vunpack.c.l.b16 %v29
  %v75 = vunpack.c.l.b16 %v30
  %v76 = vpack.c.b16 %v61, %v60
  %v77 = vpack.c.b16 %v63, %v62
  %v78 = vpack.c.b16 %v65, %v64
  %v79 = vpack.c.b16 %v67, %v66
  %v80 = vpack.c.b16 %v69, %v68
  %v81 = vpack.c.b16 %v71, %v70
  %v82 = vpack.c.b16 %v73, %v72
  %v83 = vpack.c.b16 %v75, %v74
  %v93 = vunpack.c.l.b16 %v31
  %v94 = vunpack.c.l.b16 %v32
  %v95 = vunpack.c.l.b16 %v33
  %v96 = vunpack.c.l.b16 %v34
  %v97 = vunpack.c.l.b16 %v35
  %v98 = vunpack.c.l.b16 %v36
  %v99 = vunpack.c.l.b16 %v37
  %v100 = vunpack.c.l.b16 %v38
  %v101 = vunpack.c.l.b16 %v39
  %v102 = vpack.c.b16 %v94, %v93
  %v103 = vpack.c.b16 %v96, %v95
  %v104 = vpack.c.b16 %v98, %v97
  %v105 = vpack.c.b16 %v100, %v99
  %v106 = vpack.c.b16 %v101, %v101
  %vm111 = vcmask 588800
  %v113 = vsel %vm111, %v76, 0
  %v116 = vsel %vm111, %v77, 0
  %v119 = vsel %vm111, %v78, 0
  %v122 = vsel %vm111, %v79, 0
  %v125 = vsel %vm111, %v80, 0
  %v128 = vsel %vm111, %v81, 0
  %v131 = vsel %vm111, %v82, 0
  %v134 = vsel %vm111, %v83, 0
  %vm136 = vcmask 1043456
  %v138 = vsel %vm136, %v106, 0
  %140 = vmatpush.bf16.msra.mxu0 0
  %141 = vmatpush.bf16.msra.mxu0 0
  %142 = vmatpush.bf16.msra.mxu0 0
  %143 = vmatpush.bf16.msra.mxu0 %v138
  %144 = vmatpush.bf16.msra.mxu0 %v105
  %145 = vmatpush.bf16.msra.mxu0 %v104
  %146 = vmatpush.bf16.msra.mxu0 %v103
  %147 = vmatpush.bf16.msra.mxu0 %v102
  %148 = vmatmul.bf16.gmra.mxu0 %v113
  %v149 = vpop.f32.mrf.mxu0
  %v150 = vadd.f32 %v42, %v149
  %v151 = vpop.f32.mrf.mxu0
  %v152 = vadd.f32 %v42, %v151
  %153 = vmatmul.bf16.gmra.mxu0 %v116
  %v154 = vpop.f32.mrf.mxu0
  %v155 = vadd.f32 %v42, %v154
  %v156 = vpop.f32.mrf.mxu0
  %v157 = vadd.f32 %v42, %v156
  %158 = vmatmul.bf16.gmra.mxu0 %v119
  %v159 = vpop.f32.mrf.mxu0
  %v160 = vadd.f32 %v42, %v159
  %v161 = vpop.f32.mrf.mxu0
  %v162 = vadd.f32 %v42, %v161
  %163 = vmatmul.bf16.gmra.mxu0 %v122
  %v164 = vpop.f32.mrf.mxu0
  %v165 = vadd.f32 %v42, %v164
  %v166 = vpop.f32.mrf.mxu0
  %v167 = vadd.f32 %v42, %v166
  %168 = vmatmul.bf16.gmra.mxu0 %v125
  %v169 = vpop.f32.mrf.mxu0
  %v170 = vadd.f32 %v42, %v169
  %v171 = vpop.f32.mrf.mxu0
  %v172 = vadd.f32 %v42, %v171
  %173 = vmatmul.bf16.gmra.mxu0 %v128
  %v174 = vpop.f32.mrf.mxu0
  %v175 = vadd.f32 %v42, %v174
  %v176 = vpop.f32.mrf.mxu0
  %v177 = vadd.f32 %v42, %v176
  %178 = vmatmul.bf16.gmra.mxu0 %v131
  %v179 = vpop.f32.mrf.mxu0
  %v180 = vadd.f32 %v42, %v179
  %v181 = vpop.f32.mrf.mxu0
  %v182 = vadd.f32 %v42, %v181
  %183 = vmatmul.bf16.gmra.mxu0 %v134
  %v184 = vpop.f32.mrf.mxu0
  %v185 = vadd.f32 %v42, %v184
  %v186 = vpop.f32.mrf.mxu0
  %v187 = vadd.f32 %v42, %v186
  %188 = vdwg.mxu0
  %v189 = vmax.f32 %v150, 0.0
  %v190 = vmax.f32 %v152, 0.0
  %v191 = vmax.f32 %v155, 0.0
  %v192 = vmax.f32 %v157, 0.0
  %v193 = vmax.f32 %v160, 0.0
  %v194 = vmax.f32 %v162, 0.0
  %v195 = vmax.f32 %v165, 0.0
  %v196 = vmax.f32 %v167, 0.0
  %v197 = vmax.f32 %v170, 0.0
  %v198 = vmax.f32 %v172, 0.0
  %v199 = vmax.f32 %v175, 0.0
  %v200 = vmax.f32 %v177, 0.0
  %v201 = vmax.f32 %v180, 0.0
  %v202 = vmax.f32 %v182, 0.0
  %v203 = vmax.f32 %v185, 0.0
  %v204 = vmax.f32 %v187, 0.0
  %v205 = vpack.c.bf16 %v189, %v189
  %v206 = vpack.c.bf16 %v190, %v190
  %v207 = vpack.c.bf16 %v191, %v191
  %v208 = vpack.c.bf16 %v192, %v192
  %v209 = vpack.c.bf16 %v193, %v193
  %v210 = vpack.c.bf16 %v194, %v194
  %v211 = vpack.c.bf16 %v195, %v195
  %v212 = vpack.c.bf16 %v196, %v196
  %v213 = vpack.c.bf16 %v197, %v197
  %v214 = vpack.c.bf16 %v198, %v198
  %v215 = vpack.c.bf16 %v199, %v199
  %v216 = vpack.c.bf16 %v200, %v200
  %v217 = vpack.c.bf16 %v201, %v201
  %v218 = vpack.c.bf16 %v202, %v202
  %v219 = vpack.c.bf16 %v203, %v203
  %v220 = vpack.c.bf16 %v204, %v204
  %221 = vst [vmem:[%s3] sm:$0xf] %v205
  %222 = vst [vmem:[%s3 + $0x4] sm:$0xf] %v206
  %223 = vst [vmem:[%s3 + $0x8] sm:$0xf] %v207
  %224 = vst [vmem:[%s3 + $0xc] sm:$0xf] %v208
  %225 = vst [vmem:[%s3 + $0x10] sm:$0xf] %v209
  %226 = vst [vmem:[%s3 + $0x14] sm:$0xf] %v210
  %227 = vst [vmem:[%s3 + $0x18] sm:$0xf] %v211
  %228 = vst [vmem:[%s3 + $0x1c] sm:$0xf] %v212
  %229 = vst [vmem:[%s3 + $0x20] sm:$0xf] %v213
  %230 = vst [vmem:[%s3 + $0x24] sm:$0xf] %v214
  %231 = vst [vmem:[%s3 + $0x28] sm:$0xf] %v215
  %232 = vst [vmem:[%s3 + $0x2c] sm:$0xf] %v216
  %233 = vst [vmem:[%s3 + $0x30] sm:$0xf] %v217
  %234 = vst [vmem:[%s3 + $0x34] sm:$0xf] %v218
  %235 = vst [vmem:[%s3 + $0x38] sm:$0xf] %v219
  %236 = vst [vmem:[%s3 + $0x3c] sm:$0xf] %v220
  // Predicated region
  $region14: #{unipose_forward.13} parent=0 // pred_check
    _
  $region15: #{unipose_forward.13} parent=0 // pred_check_branch
    %238 = sbr.rel (0) target = $region17
  $region16: #{unipose_forward.13} parent=0 // pred_region
    _
  $region17: #{unipose_forward.13} parent=0 // pred_fallthru
    _
  // Predicated region
  $region18: #{unipose_forward.13} parent=0 // pred_check
    _
  $region19: #{unipose_forward.13} parent=0 // pred_check_branch
    %240 = sbr.rel (0) target = $region21
  $region20: #{unipose_forward.13} parent=0 // pred_region
    _
  $region21: #{unipose_forward.13} parent=0 // pred_fallthru
    _

// kernel: unipose_forward.20
$region0: #{unipose_forward.20}
  #allocation0 [shape = 'u32[]', space=smem, size = 0x4, offset = 0x4, fixed_abs, tag = 'smem constant byte address 0x4 - core index']
  #allocation1 [shape = 'u32[72,128]{1,0:T(1,128)}', space=vmem, size = 0x9000, scoped, tag = 'internal scratch']
  %s0 = inlined_call_operand.vmem [shape: bf16[128,16], index: 0, kind: input, shape index: {}]
  %s1 = inlined_call_operand.vmem [shape: bf16[16,128], index: 1, kind: input, shape index: {}]
  %s2 = inlined_call_operand.vmem [shape: f32[1,128], index: 2, kind: input, shape index: {}]
  %s3 = inlined_call_operand.vmem [shape: bf16[128,128], index: 3, kind: output, shape index: {}]
  %s4 = sld [smem:[#allocation0]]
  $region22: #{unipose_forward.20} parent=0
    _
  %s6 = ssub.s32 1, %s4
  %s7 = scalar_select 0, %s6, %s4
  // Predicated region
  $region2: #{unipose_forward.20} parent=0 // pred_check
    _
  $region3: #{unipose_forward.20} parent=0 // pred_check_branch
    %9 = sbr.rel (0) target = $region5
  $region4: #{unipose_forward.20} parent=0 // pred_region
    _
  $region5: #{unipose_forward.20} parent=0 // pred_fallthru
    _
  // Predicated region
  $region6: #{unipose_forward.20} parent=0 // pred_check
    _
  $region7: #{unipose_forward.20} parent=0 // pred_check_branch
    %11 = sbr.rel (0) target = $region9
  $region8: #{unipose_forward.20} parent=0 // pred_region
    _
  $region9: #{unipose_forward.20} parent=0 // pred_fallthru
    _
  // Predicated region
  $region10: #{unipose_forward.20} parent=0 // pred_check
    _
  $region11: #{unipose_forward.20} parent=0 // pred_check_branch
    %13 = sbr.rel (0) target = $region13
  $region12: #{unipose_forward.20} parent=0 // pred_region
    _
  $region13: #{unipose_forward.20} parent=0 // pred_fallthru
    _
  %v15 = vld [vmem:[%s0] sm:$0xf]
  %v16 = vld [vmem:[%s0 + $0x4] sm:$0xf]
  %v17 = vld [vmem:[%s0 + $0x8] sm:$0xf]
  %v18 = vld [vmem:[%s0 + $0xc] sm:$0xf]
  %v19 = vld [vmem:[%s0 + $0x10] sm:$0xf]
  %v20 = vld [vmem:[%s0 + $0x14] sm:$0xf]
  %v21 = vld [vmem:[%s0 + $0x18] sm:$0xf]
  %v22 = vld [vmem:[%s0 + $0x1c] sm:$0xf]
  %v23 = vld [vmem:[%s0 + $0x20] sm:$0xf]
  %v24 = vld [vmem:[%s0 + $0x24] sm:$0xf]
  %v25 = vld [vmem:[%s0 + $0x28] sm:$0xf]
  %v26 = vld [vmem:[%s0 + $0x2c] sm:$0xf]
  %v27 = vld [vmem:[%s0 + $0x30] sm:$0xf]
  %v28 = vld [vmem:[%s0 + $0x34] sm:$0xf]
  %v29 = vld [vmem:[%s0 + $0x38] sm:$0xf]
  %v30 = vld [vmem:[%s0 + $0x3c] sm:$0xf]
  %v31 = vld [vmem:[%s1] sm:$0xf]
  %v32 = vld [vmem:[%s1 + $0x4] sm:$0xf]
  %v33 = vld [vmem:[%s2] sm:$0x1]
  %v35 = vperm.slane %v33, 0
  %v53 = vunpack.c.l.b16 %v15
  %v54 = vunpack.c.l.b16 %v16
  %v55 = vunpack.c.l.b16 %v17
  %v56 = vunpack.c.l.b16 %v18
  %v57 = vunpack.c.l.b16 %v19
  %v58 = vunpack.c.l.b16 %v20
  %v59 = vunpack.c.l.b16 %v21
  %v60 = vunpack.c.l.b16 %v22
  %v61 = vunpack.c.l.b16 %v23
  %v62 = vunpack.c.l.b16 %v24
  %v63 = vunpack.c.l.b16 %v25
  %v64 = vunpack.c.l.b16 %v26
  %v65 = vunpack.c.l.b16 %v27
  %v66 = vunpack.c.l.b16 %v28
  %v67 = vunpack.c.l.b16 %v29
  %v68 = vunpack.c.l.b16 %v30
  %v69 = vpack.c.b16 %v54, %v53
  %v70 = vpack.c.b16 %v56, %v55
  %v71 = vpack.c.b16 %v58, %v57
  %v72 = vpack.c.b16 %v60, %v59
  %v73 = vpack.c.b16 %v62, %v61
  %v74 = vpack.c.b16 %v64, %v63
  %v75 = vpack.c.b16 %v66, %v65
  %v76 = vpack.c.b16 %v68, %v67
  %v79 = vunpack.c.l.b16 %v31
  %v80 = vunpack.c.l.b16 %v32
  %v81 = vpack.c.b16 %v80, %v79
  %vm83 = vcmask 130048
  %v85 = vsel %vm83, %v69, 0
  %v88 = vsel %vm83, %v70, 0
  %v91 = vsel %vm83, %v71, 0
  %v94 = vsel %vm83, %v72, 0
  %v97 = vsel %vm83, %v73, 0
  %v100 = vsel %vm83, %v74, 0
  %v103 = vsel %vm83, %v75, 0
  %v106 = vsel %vm83, %v76, 0
  %108 = vmatpush.bf16.msra.mxu0 0
  %109 = vmatpush.bf16.msra.mxu0 0
  %110 = vmatpush.bf16.msra.mxu0 0
  %111 = vmatpush.bf16.msra.mxu0 0
  %112 = vmatpush.bf16.msra.mxu0 0
  %113 = vmatpush.bf16.msra.mxu0 0
  %114 = vmatpush.bf16.msra.mxu0 0
  %115 = vmatpush.bf16.msra.mxu0 %v81
  %116 = vmatmul.bf16.gmra.mxu0 %v85
  %v117 = vpop.f32.mrf.mxu0
  %v118 = vadd.f32 %v35, %v117
  %v119 = vpop.f32.mrf.mxu0
  %v120 = vadd.f32 %v35, %v119
  %121 = vmatmul.bf16.gmra.mxu0 %v88
  %v122 = vpop.f32.mrf.mxu0
  %v123 = vadd.f32 %v35, %v122
  %v124 = vpop.f32.mrf.mxu0
  %v125 = vadd.f32 %v35, %v124
  %126 = vmatmul.bf16.gmra.mxu0 %v91
  %v127 = vpop.f32.mrf.mxu0
  %v128 = vadd.f32 %v35, %v127
  %v129 = vpop.f32.mrf.mxu0
  %v130 = vadd.f32 %v35, %v129
  %131 = vmatmul.bf16.gmra.mxu0 %v94
  %v132 = vpop.f32.mrf.mxu0
  %v133 = vadd.f32 %v35, %v132
  %v134 = vpop.f32.mrf.mxu0
  %v135 = vadd.f32 %v35, %v134
  %136 = vmatmul.bf16.gmra.mxu0 %v97
  %v137 = vpop.f32.mrf.mxu0
  %v138 = vadd.f32 %v35, %v137
  %v139 = vpop.f32.mrf.mxu0
  %v140 = vadd.f32 %v35, %v139
  %141 = vmatmul.bf16.gmra.mxu0 %v100
  %v142 = vpop.f32.mrf.mxu0
  %v143 = vadd.f32 %v35, %v142
  %v144 = vpop.f32.mrf.mxu0
  %v145 = vadd.f32 %v35, %v144
  %146 = vmatmul.bf16.gmra.mxu0 %v103
  %v147 = vpop.f32.mrf.mxu0
  %v148 = vadd.f32 %v35, %v147
  %v149 = vpop.f32.mrf.mxu0
  %v150 = vadd.f32 %v35, %v149
  %151 = vmatmul.bf16.gmra.mxu0 %v106
  %v152 = vpop.f32.mrf.mxu0
  %v153 = vadd.f32 %v35, %v152
  %v154 = vpop.f32.mrf.mxu0
  %v155 = vadd.f32 %v35, %v154
  %156 = vdwg.mxu0
  %v157 = vmax.f32 %v118, 0.0
  %v158 = vmax.f32 %v120, 0.0
  %v159 = vmax.f32 %v123, 0.0
  %v160 = vmax.f32 %v125, 0.0
  %v161 = vmax.f32 %v128, 0.0
  %v162 = vmax.f32 %v130, 0.0
  %v163 = vmax.f32 %v133, 0.0
  %v164 = vmax.f32 %v135, 0.0
  %v165 = vmax.f32 %v138, 0.0
  %v166 = vmax.f32 %v140, 0.0
  %v167 = vmax.f32 %v143, 0.0
  %v168 = vmax.f32 %v145, 0.0
  %v169 = vmax.f32 %v148, 0.0
  %v170 = vmax.f32 %v150, 0.0
  %v171 = vmax.f32 %v153, 0.0
  %v172 = vmax.f32 %v155, 0.0
  %v173 = vpack.c.bf16 %v157, %v157
  %v174 = vpack.c.bf16 %v158, %v158
  %v175 = vpack.c.bf16 %v159, %v159
  %v176 = vpack.c.bf16 %v160, %v160
  %v177 = vpack.c.bf16 %v161, %v161
  %v178 = vpack.c.bf16 %v162, %v162
  %v179 = vpack.c.bf16 %v163, %v163
  %v180 = vpack.c.bf16 %v164, %v164
  %v181 = vpack.c.bf16 %v165, %v165
  %v182 = vpack.c.bf16 %v166, %v166
  %v183 = vpack.c.bf16 %v167, %v167
  %v184 = vpack.c.bf16 %v168, %v168
  %v185 = vpack.c.bf16 %v169, %v169
  %v186 = vpack.c.bf16 %v170, %v170
  %v187 = vpack.c.bf16 %v171, %v171
  %v188 = vpack.c.bf16 %v172, %v172
  %189 = vst [vmem:[%s3] sm:$0xf] %v173
  %190 = vst [vmem:[%s3 + $0x4] sm:$0xf] %v174
  %191 = vst [vmem:[%s3 + $0x8] sm:$0xf] %v175
  %192 = vst [vmem:[%s3 + $0xc] sm:$0xf] %v176
  %193 = vst [vmem:[%s3 + $0x10] sm:$0xf] %v177
  %194 = vst [vmem:[%s3 + $0x14] sm:$0xf] %v178
  %195 = vst [vmem:[%s3 + $0x18] sm:$0xf] %v179
  %196 = vst [vmem:[%s3 + $0x1c] sm:$0xf] %v180
  %197 = vst [vmem:[%s3 + $0x20] sm:$0xf] %v181
  %198 = vst [vmem:[%s3 + $0x24] sm:$0xf] %v182
  %199 = vst [vmem:[%s3 + $0x28] sm:$0xf] %v183
  %200 = vst [vmem:[%s3 + $0x2c] sm:$0xf] %v184
  %201 = vst [vmem:[%s3 + $0x30] sm:$0xf] %v185
  %202 = vst [vmem:[%s3 + $0x34] sm:$0xf] %v186
  %203 = vst [vmem:[%s3 + $0x38] sm:$0xf] %v187
  %204 = vst [vmem:[%s3 + $0x3c] sm:$0xf] %v188
  // Predicated region
  $region14: #{unipose_forward.20} parent=0 // pred_check
    _
  $region15: #{unipose_forward.20} parent=0 // pred_check_branch
    %206 = sbr.rel (0) target = $region17
  $region16: #{unipose_forward.20} parent=0 // pred_region
    _
  $region17: #{unipose_forward.20} parent=0 // pred_fallthru
    _
  // Predicated region
  $region18: #{unipose_forward.20} parent=0 // pred_check
    _
  $region19: #{unipose_forward.20} parent=0 // pred_check_branch
    %208 = sbr.rel (0) target = $region21
  $region20: #{unipose_forward.20} parent=0 // pred_region
    _
  $region21: #{unipose_forward.20} parent=0 // pred_fallthru
    _

// kernel: unipose_forward.14
$region0: #{unipose_forward.14}
  #allocation0 [shape = 'u32[]', space=smem, size = 0x4, offset = 0x4, fixed_abs, tag = 'smem constant byte address 0x4 - core index']
  #allocation1 [shape = 'u32[72,128]{1,0:T(1,128)}', space=vmem, size = 0x9000, scoped, tag = 'internal scratch']
  %s0 = inlined_call_operand.vmem [shape: bf16[32,144], index: 0, kind: input, shape index: {}]
  %s1 = inlined_call_operand.vmem [shape: bf16[144,128], index: 1, kind: input, shape index: {}]
  %s2 = inlined_call_operand.vmem [shape: f32[1,128], index: 2, kind: input, shape index: {}]
  %s3 = inlined_call_operand.vmem [shape: bf16[32,128], index: 3, kind: output, shape index: {}]
  %s4 = sld [smem:[#allocation0]]
  $region22: #{unipose_forward.14} parent=0
    _
  %s6 = ssub.s32 1, %s4
  %s7 = scalar_select 0, %s6, %s4
  // Predicated region
  $region2: #{unipose_forward.14} parent=0 // pred_check
    _
  $region3: #{unipose_forward.14} parent=0 // pred_check_branch
    %9 = sbr.rel (0) target = $region5
  $region4: #{unipose_forward.14} parent=0 // pred_region
    _
  $region5: #{unipose_forward.14} parent=0 // pred_fallthru
    _
  // Predicated region
  $region6: #{unipose_forward.14} parent=0 // pred_check
    _
  $region7: #{unipose_forward.14} parent=0 // pred_check_branch
    %11 = sbr.rel (0) target = $region9
  $region8: #{unipose_forward.14} parent=0 // pred_region
    _
  $region9: #{unipose_forward.14} parent=0 // pred_fallthru
    _
  // Predicated region
  $region10: #{unipose_forward.14} parent=0 // pred_check
    _
  $region11: #{unipose_forward.14} parent=0 // pred_check_branch
    %13 = sbr.rel (0) target = $region13
  $region12: #{unipose_forward.14} parent=0 // pred_region
    _
  $region13: #{unipose_forward.14} parent=0 // pred_fallthru
    _
  %v15 = vld [vmem:[%s0] sm:$0xff]
  %v16 = vld [vmem:[%s0 + $0x8] sm:$0xff]
  %v17 = vld [vmem:[%s0 + $0x10] sm:$0xff]
  %v18 = vld [vmem:[%s0 + $0x18] sm:$0xff]
  %v19 = vld [vmem:[%s1] sm:$0xf]
  %v20 = vld [vmem:[%s1 + $0x4] sm:$0xf]
  %v21 = vld [vmem:[%s1 + $0x8] sm:$0xf]
  %v22 = vld [vmem:[%s1 + $0xc] sm:$0xf]
  %v23 = vld [vmem:[%s1 + $0x10] sm:$0xf]
  %v24 = vld [vmem:[%s1 + $0x14] sm:$0xf]
  %v25 = vld [vmem:[%s1 + $0x18] sm:$0xf]
  %v26 = vld [vmem:[%s1 + $0x1c] sm:$0xf]
  %v27 = vld [vmem:[%s1 + $0x20] sm:$0xf]
  %v28 = vld [vmem:[%s1 + $0x24] sm:$0xf]
  %v29 = vld [vmem:[%s1 + $0x28] sm:$0xf]
  %v30 = vld [vmem:[%s1 + $0x2c] sm:$0xf]
  %v31 = vld [vmem:[%s1 + $0x30] sm:$0xf]
  %v32 = vld [vmem:[%s1 + $0x34] sm:$0xf]
  %v33 = vld [vmem:[%s1 + $0x38] sm:$0xf]
  %v34 = vld [vmem:[%s1 + $0x3c] sm:$0xf]
  %v35 = vld [vmem:[%s1 + $0x40] sm:$0xf]
  %v36 = vld [vmem:[%s1 + $0x44] sm:$0xf]
  %v37 = vld [vmem:[%s2] sm:$0x1]
  %v39 = vperm.slane %v37, 0
  %v45 = vunpack.c.l.b16 %v15
  %v46 = vunpack.c.h.b16 %v15
  %v47 = vunpack.c.l.b16 %v16
  %v48 = vunpack.c.h.b16 %v16
  %v49 = vunpack.c.l.b16 %v17
  %v50 = vunpack.c.h.b16 %v17
  %v51 = vunpack.c.l.b16 %v18
  %v52 = vunpack.c.h.b16 %v18
  %v53 = vpack.c.b16 %v47, %v45
  %v54 = vpack.c.b16 %v48, %v46
  %v55 = vpack.c.b16 %v51, %v49
  %v56 = vpack.c.b16 %v52, %v50
  %v77 = vunpack.c.l.b16 %v19
  %v78 = vunpack.c.l.b16 %v20
  %v79 = vunpack.c.l.b16 %v21
  %v80 = vunpack.c.l.b16 %v22
  %v81 = vunpack.c.l.b16 %v23
  %v82 = vunpack.c.l.b16 %v24
  %v83 = vunpack.c.l.b16 %v25
  %v84 = vunpack.c.l.b16 %v26
  %v85 = vunpack.c.l.b16 %v27
  %v86 = vunpack.c.l.b16 %v28
  %v87 = vunpack.c.l.b16 %v29
  %v88 = vunpack.c.l.b16 %v30
  %v89 = vunpack.c.l.b16 %v31
  %v90 = vunpack.c.l.b16 %v32
  %v91 = vunpack.c.l.b16 %v33
  %v92 = vunpack.c.l.b16 %v34
  %v93 = vunpack.c.l.b16 %v35
  %v94 = vunpack.c.l.b16 %v36
  %v95 = vpack.c.b16 %v78, %v77
  %v96 = vpack.c.b16 %v80, %v79
  %v97 = vpack.c.b16 %v82, %v81
  %v98 = vpack.c.b16 %v84, %v83
  %v99 = vpack.c.b16 %v86, %v85
  %v100 = vpack.c.b16 %v88, %v87
  %v101 = vpack.c.b16 %v90, %v89
  %v102 = vpack.c.b16 %v92, %v91
  %v103 = vpack.c.b16 %v94, %v93
  %vm113 = vcmask 130048
  %v115 = vsel %vm113, %v54, 0
  %v118 = vsel %vm113, %v56, 0
  %120 = vmatpush.bf16.msra.mxu0 %v102
  %121 = vmatpush.bf16.msra.mxu0 %v101
  %122 = vmatpush.bf16.msra.mxu0 %v100
  %123 = vmatpush.bf16.msra.mxu0 %v99
  %124 = vmatpush.bf16.msra.mxu0 %v98
  %125 = vmatpush.bf16.msra.mxu0 %v97
  %126 = vmatpush.bf16.msra.mxu0 %v96
  %127 = vmatpush.bf16.msra.mxu0 %v95
  %128 = vmatmul.bf16.gmra.mxu0 %v53
  %v129 = vpop.f32.mrf.mxu0
  %v130 = vadd.f32 %v39, %v129
  %v131 = vpop.f32.mrf.mxu0
  %v132 = vadd.f32 %v39, %v131
  %133 = vmatmul.bf16.gmra.mxu0 %v55
  %v134 = vpop.f32.mrf.mxu0
  %v135 = vadd.f32 %v39, %v134
  %v136 = vpop.f32.mrf.mxu0
  %v137 = vadd.f32 %v39, %v136
  %138 = vdwg.mxu0
  %139 = vmatpush.bf16.msra.mxu0 0
  %140 = vmatpush.bf16.msra.mxu0 0
  %141 = vmatpush.bf16.msra.mxu0 0
  %142 = vmatpush.bf16.msra.mxu0 0
  %143 = vmatpush.bf16.msra.mxu0 0
  %144 = vmatpush.bf16.msra.mxu0 0
  %145 = vmatpush.bf16.msra.mxu0 0
  %146 = vmatpush.bf16.msra.mxu0 %v103
  %147 = vmatmul.bf16.gmra.mxu0 %v115
  %v148 = vpop.f32.mrf.mxu0
  %v149 = vadd.f32 %v130, %v148
  %v150 = vpop.f32.mrf.mxu0
  %v151 = vadd.f32 %v132, %v150
  %152 = vmatmul.bf16.gmra.mxu0 %v118
  %v153 = vpop.f32.mrf.mxu0
  %v154 = vadd.f32 %v135, %v153
  %v155 = vpop.f32.mrf.mxu0
  %v156 = vadd.f32 %v137, %v155
  %157 = vdwg.mxu0
  %v158 = vmax.f32 %v149, 0.0
  %v159 = vmax.f32 %v151, 0.0
  %v160 = vmax.f32 %v154, 0.0
  %v161 = vmax.f32 %v156, 0.0
  %v162 = vpack.c.bf16 %v158, %v158
  %v163 = vpack.c.bf16 %v159, %v159
  %v164 = vpack.c.bf16 %v160, %v160
  %v165 = vpack.c.bf16 %v161, %v161
  %166 = vst [vmem:[%s3] sm:$0xf] %v162
  %167 = vst [vmem:[%s3 + $0x4] sm:$0xf] %v163
  %168 = vst [vmem:[%s3 + $0x8] sm:$0xf] %v164
  %169 = vst [vmem:[%s3 + $0xc] sm:$0xf] %v165
  // Predicated region
  $region14: #{unipose_forward.14} parent=0 // pred_check
    _
  $region15: #{unipose_forward.14} parent=0 // pred_check_branch
    %171 = sbr.rel (0) target = $region17
  $region16: #{unipose_forward.14} parent=0 // pred_region
    _
  $region17: #{unipose_forward.14} parent=0 // pred_fallthru
    _
  // Predicated region
  $region18: #{unipose_forward.14} parent=0 // pred_check
    _
  $region19: #{unipose_forward.14} parent=0 // pred_check_branch
    %173 = sbr.rel (0) target = $region21
  $region20: #{unipose_forward.14} parent=0 // pred_region
    _
  $region21: #{unipose_forward.14} parent=0 // pred_fallthru
    _

// kernel: unipose_forward.15
$region0: #{unipose_forward.15}
  #allocation0 [shape = 'u32[]', space=smem, size = 0x4, offset = 0x4, fixed_abs, tag = 'smem constant byte address 0x4 - core index']
  #allocation1 [shape = 'u32[72,128]{1,0:T(1,128)}', space=vmem, size = 0x9000, scoped, tag = 'internal scratch']
  %s0 = inlined_call_operand.vmem [shape: bf16[32,288], index: 0, kind: input, shape index: {}]
  %s1 = inlined_call_operand.vmem [shape: bf16[288,128], index: 1, kind: input, shape index: {}]
  %s2 = inlined_call_operand.vmem [shape: f32[1,128], index: 2, kind: input, shape index: {}]
  %s3 = inlined_call_operand.vmem [shape: bf16[32,128], index: 3, kind: output, shape index: {}]
  %s4 = sld [smem:[#allocation0]]
  $region22: #{unipose_forward.15} parent=0
    _
  %s6 = ssub.s32 1, %s4
  %s7 = scalar_select 0, %s6, %s4
  // Predicated region
  $region2: #{unipose_forward.15} parent=0 // pred_check
    _
  $region3: #{unipose_forward.15} parent=0 // pred_check_branch
    %9 = sbr.rel (0) target = $region5
  $region4: #{unipose_forward.15} parent=0 // pred_region
    _
  $region5: #{unipose_forward.15} parent=0 // pred_fallthru
    _
  // Predicated region
  $region6: #{unipose_forward.15} parent=0 // pred_check
    _
  $region7: #{unipose_forward.15} parent=0 // pred_check_branch
    %11 = sbr.rel (0) target = $region9
  $region8: #{unipose_forward.15} parent=0 // pred_region
    _
  $region9: #{unipose_forward.15} parent=0 // pred_fallthru
    _
  // Predicated region
  $region10: #{unipose_forward.15} parent=0 // pred_check
    _
  $region11: #{unipose_forward.15} parent=0 // pred_check_branch
    %13 = sbr.rel (0) target = $region13
  $region12: #{unipose_forward.15} parent=0 // pred_region
    _
  $region13: #{unipose_forward.15} parent=0 // pred_fallthru
    _
  %v15 = vld [vmem:[%s0] sm:$0xff]
  %v16 = vld [vmem:[%s0 + $0x8] sm:$0xf]
  %v17 = vld [vmem:[%s0 + $0xc] sm:$0xff]
  %v18 = vld [vmem:[%s0 + $0x14] sm:$0xf]
  %v19 = vld [vmem:[%s0 + $0x18] sm:$0xff]
  %v20 = vld [vmem:[%s0 + $0x20] sm:$0xf]
  %v21 = vld [vmem:[%s0 + $0x24] sm:$0xff]
  %v22 = vld [vmem:[%s0 + $0x2c] sm:$0xf]
  %v23 = vld [vmem:[%s1] sm:$0xf]
  %v24 = vld [vmem:[%s1 + $0x4] sm:$0xf]
  %v25 = vld [vmem:[%s1 + $0x8] sm:$0xf]
  %v26 = vld [vmem:[%s1 + $0xc] sm:$0xf]
  %v27 = vld [vmem:[%s1 + $0x10] sm:$0xf]
  %v28 = vld [vmem:[%s1 + $0x14] sm:$0xf]
  %v29 = vld [vmem:[%s1 + $0x18] sm:$0xf]
  %v30 = vld [vmem:[%s1 + $0x1c] sm:$0xf]
  %v31 = vld [vmem:[%s1 + $0x20] sm:$0xf]
  %v32 = vld [vmem:[%s1 + $0x24] sm:$0xf]
  %v33 = vld [vmem:[%s1 + $0x28] sm:$0xf]
  %v34 = vld [vmem:[%s1 + $0x2c] sm:$0xf]
  %v35 = vld [vmem:[%s1 + $0x30] sm:$0xf]
  %v36 = vld [vmem:[%s1 + $0x34] sm:$0xf]
  %v37 = vld [vmem:[%s1 + $0x38] sm:$0xf]
  %v38 = vld [vmem:[%s1 + $0x3c] sm:$0xf]
  %v39 = vld [vmem:[%s1 + $0x40] sm:$0xf]
  %v40 = vld [vmem:[%s1 + $0x44] sm:$0xf]
  %v41 = vld [vmem:[%s1 + $0x48] sm:$0xf]
  %v42 = vld [vmem:[%s1 + $0x4c] sm:$0xf]
  %v43 = vld [vmem:[%s1 + $0x50] sm:$0xf]
  %v44 = vld [vmem:[%s1 + $0x54] sm:$0xf]
  %v45 = vld [vmem:[%s1 + $0x58] sm:$0xf]
  %v46 = vld [vmem:[%s1 + $0x5c] sm:$0xf]
  %v47 = vld [vmem:[%s1 + $0x60] sm:$0xf]
  %v48 = vld [vmem:[%s1 + $0x64] sm:$0xf]
  %v49 = vld [vmem:[%s1 + $0x68] sm:$0xf]
  %v50 = vld [vmem:[%s1 + $0x6c] sm:$0xf]
  %v51 = vld [vmem:[%s1 + $0x70] sm:$0xf]
  %v52 = vld [vmem:[%s1 + $0x74] sm:$0xf]
  %v53 = vld [vmem:[%s1 + $0x78] sm:$0xf]
  %v54 = vld [vmem:[%s1 + $0x7c] sm:$0xf]
  %v55 = vld [vmem:[%s1 + $0x80] sm:$0xf]
  %v56 = vld [vmem:[%s1 + $0x84] sm:$0xf]
  %v57 = vld [vmem:[%s1 + $0x88] sm:$0xf]
  %v58 = vld [vmem:[%s1 + $0x8c] sm:$0xf]
  %v59 = vld [vmem:[%s2] sm:$0x1]
  %v61 = vperm.slane %v59, 0
  %v71 = vunpack.c.l.b16 %v15
  %v72 = vunpack.c.h.b16 %v15
  %v73 = vunpack.c.l.b16 %v16
  %v74 = vunpack.c.l.b16 %v17
  %v75 = vunpack.c.h.b16 %v17
  %v76 = vunpack.c.l.b16 %v18
  %v77 = vunpack.c.l.b16 %v19
  %v78 = vunpack.c.h.b16 %v19
  %v79 = vunpack.c.l.b16 %v20
  %v80 = vunpack.c.l.b16 %v21
  %v81 = vunpack.c.h.b16 %v21
  %v82 = vunpack.c.l.b16 %v22
  %v83 = vpack.c.b16 %v74, %v71
  %v84 = vpack.c.b16 %v75, %v72
  %v85 = vpack.c.b16 %v76, %v73
  %v86 = vpack.c.b16 %v80, %v77
  %v87 = vpack.c.b16 %v81, %v78
  %v88 = vpack.c.b16 %v82, %v79
  %v129 = vunpack.c.l.b16 %v23
  %v130 = vunpack.c.l.b16 %v24
  %v131 = vunpack.c.l.b16 %v25
  %v132 = vunpack.c.l.b16 %v26
  %v133 = vunpack.c.l.b16 %v27
  %v134 = vunpack.c.l.b16 %v28
  %v135 = vunpack.c.l.b16 %v29
  %v136 = vunpack.c.l.b16 %v30
  %v137 = vunpack.c.l.b16 %v31
  %v138 = vunpack.c.l.b16 %v32
  %v139 = vunpack.c.l.b16 %v33
  %v140 = vunpack.c.l.b16 %v34
  %v141 = vunpack.c.l.b16 %v35
  %v142 = vunpack.c.l.b16 %v36
  %v143 = vunpack.c.l.b16 %v37
  %v144 = vunpack.c.l.b16 %v38
  %v145 = vunpack.c.l.b16 %v39
  %v146 = vunpack.c.l.b16 %v40
  %v147 = vunpack.c.l.b16 %v41
  %v148 = vunpack.c.l.b16 %v42
  %v149 = vunpack.c.l.b16 %v43
  %v150 = vunpack.c.l.b16 %v44
  %v151 = vunpack.c.l.b16 %v45
  %v152 = vunpack.c.l.b16 %v46
  %v153 = vunpack.c.l.b16 %v47
  %v154 = vunpack.c.l.b16 %v48
  %v155 = vunpack.c.l.b16 %v49
  %v156 = vunpack.c.l.b16 %v50
  %v157 = vunpack.c.l.b16 %v51
  %v158 = vunpack.c.l.b16 %v52
  %v159 = vunpack.c.l.b16 %v53
  %v160 = vunpack.c.l.b16 %v54
  %v161 = vunpack.c.l.b16 %v55
  %v162 = vunpack.c.l.b16 %v56
  %v163 = vunpack.c.l.b16 %v57
  %v164 = vunpack.c.l.b16 %v58
  %v165 = vpack.c.b16 %v130, %v129
  %v166 = vpack.c.b16 %v132, %v131
  %v167 = vpack.c.b16 %v134, %v133
  %v168 = vpack.c.b16 %v136, %v135
  %v169 = vpack.c.b16 %v138, %v137
  %v170 = vpack.c.b16 %v140, %v139
  %v171 = vpack.c.b16 %v142, %v141
  %v172 = vpack.c.b16 %v144, %v143
  %v173 = vpack.c.b16 %v146, %v145
  %v174 = vpack.c.b16 %v148, %v147
  %v175 = vpack.c.b16 %v150, %v149
  %v176 = vpack.c.b16 %v152, %v151
  %v177 = vpack.c.b16 %v154, %v153
  %v178 = vpack.c.b16 %v156, %v155
  %v179 = vpack.c.b16 %v158, %v157
  %v180 = vpack.c.b16 %v160, %v159
  %v181 = vpack.c.b16 %v162, %v161
  %v182 = vpack.c.b16 %v164, %v163
  %vm201 = vcmask 261120
  %v203 = vsel %vm201, %v85, 0
  %v206 = vsel %vm201, %v88, 0
  %208 = vmatpush.bf16.msra.mxu0 %v172
  %209 = vmatpush.bf16.msra.mxu0 %v171
  %210 = vmatpush.bf16.msra.mxu0 %v170
  %211 = vmatpush.bf16.msra.mxu0 %v169
  %212 = vmatpush.bf16.msra.mxu0 %v168
  %213 = vmatpush.bf16.msra.mxu0 %v167
  %214 = vmatpush.bf16.msra.mxu0 %v166
  %215 = vmatpush.bf16.msra.mxu0 %v165
  %216 = vmatmul.bf16.gmra.mxu0 %v83
  %v217 = vpop.f32.mrf.mxu0
  %v218 = vadd.f32 %v61, %v217
  %v219 = vpop.f32.mrf.mxu0
  %v220 = vadd.f32 %v61, %v219
  %221 = vmatmul.bf16.gmra.mxu0 %v86
  %v222 = vpop.f32.mrf.mxu0
  %v223 = vadd.f32 %v61, %v222
  %v224 = vpop.f32.mrf.mxu0
  %v225 = vadd.f32 %v61, %v224
  %226 = vdwg.mxu0
  %227 = vmatpush.bf16.msra.mxu0 %v180
  %228 = vmatpush.bf16.msra.mxu0 %v179
  %229 = vmatpush.bf16.msra.mxu0 %v178
  %230 = vmatpush.bf16.msra.mxu0 %v177
  %231 = vmatpush.bf16.msra.mxu0 %v176
  %232 = vmatpush.bf16.msra.mxu0 %v175
  %233 = vmatpush.bf16.msra.mxu0 %v174
  %234 = vmatpush.bf16.msra.mxu0 %v173
  %235 = vmatmul.bf16.gmra.mxu0 %v84
  %v236 = vpop.f32.mrf.mxu0
  %v237 = vadd.f32 %v218, %v236
  %v238 = vpop.f32.mrf.mxu0
  %v239 = vadd.f32 %v220, %v238
  %240 = vmatmul.bf16.gmra.mxu0 %v87
  %v241 = vpop.f32.mrf.mxu0
  %v242 = vadd.f32 %v223, %v241
  %v243 = vpop.f32.mrf.mxu0
  %v244 = vadd.f32 %v225, %v243
  %245 = vdwg.mxu0
  %246 = vmatpush.bf16.msra.mxu0 0
  %247 = vmatpush.bf16.msra.mxu0 0
  %248 = vmatpush.bf16.msra.mxu0 0
  %249 = vmatpush.bf16.msra.mxu0 0
  %250 = vmatpush.bf16.msra.mxu0 0
  %251 = vmatpush.bf16.msra.mxu0 0
  %252 = vmatpush.bf16.msra.mxu0 %v182
  %253 = vmatpush.bf16.msra.mxu0 %v181
  %254 = vmatmul.bf16.gmra.mxu0 %v203
  %v255 = vpop.f32.mrf.mxu0
  %v256 = vadd.f32 %v237, %v255
  %v257 = vpop.f32.mrf.mxu0
  %v258 = vadd.f32 %v239, %v257
  %259 = vmatmul.bf16.gmra.mxu0 %v206
  %v260 = vpop.f32.mrf.mxu0
  %v261 = vadd.f32 %v242, %v260
  %v262 = vpop.f32.mrf.mxu0
  %v263 = vadd.f32 %v244, %v262
  %264 = vdwg.mxu0
  %v265 = vmax.f32 %v256, 0.0
  %v266 = vmax.f32 %v258, 0.0
  %v267 = vmax.f32 %v261, 0.0
  %v268 = vmax.f32 %v263, 0.0
  %v269 = vpack.c.bf16 %v265, %v265
  %v270 = vpack.c.bf16 %v266, %v266
  %v271 = vpack.c.bf16 %v267, %v267
  %v272 = vpack.c.bf16 %v268, %v268
  %273 = vst [vmem:[%s3] sm:$0xf] %v269
  %274 = vst [vmem:[%s3 + $0x4] sm:$0xf] %v270
  %275 = vst [vmem:[%s3 + $0x8] sm:$0xf] %v271
  %276 = vst [vmem:[%s3 + $0xc] sm:$0xf] %v272
  // Predicated region
  $region14: #{unipose_forward.15} parent=0 // pred_check
    _
  $region15: #{unipose_forward.15} parent=0 // pred_check_branch
    %278 = sbr.rel (0) target = $region17
  $region16: #{unipose_forward.15} parent=0 // pred_region
    _
  $region17: #{unipose_forward.15} parent=0 // pred_fallthru
    _
  // Predicated region
  $region18: #{unipose_forward.15} parent=0 // pred_check
    _
  $region19: #{unipose_forward.15} parent=0 // pred_check_branch
    %280 = sbr.rel (0) target = $region21
  $region20: #{unipose_forward.15} parent=0 // pred_region
    _
  $region21: #{unipose_forward.15} parent=0 // pred_fallthru
    _

// kernel: unipose_forward.19
$region0: #{unipose_forward.19}
  #allocation0 [shape = 'u32[]', space=smem, size = 0x4, offset = 0x4, fixed_abs, tag = 'smem constant byte address 0x4 - core index']
  #allocation1 [shape = 'u32[72,128]{1,0:T(1,128)}', space=vmem, size = 0x9000, scoped, tag = 'internal scratch']
  %s0 = inlined_call_operand.vmem [shape: bf16[32,32], index: 0, kind: input, shape index: {}]
  %s1 = inlined_call_operand.vmem [shape: bf16[32,32], index: 1, kind: input, shape index: {}]
  %s2 = inlined_call_operand.vmem [shape: bf16[32,32], index: 2, kind: input, shape index: {}]
  %s3 = inlined_call_operand.vmem [shape: bf16[32,32], index: 3, kind: input, shape index: {}]
  %s4 = inlined_call_operand.vmem [shape: bf16[32,128], index: 4, kind: input, shape index: {}]
  %s5 = inlined_call_operand.vmem [shape: bf16[32,128], index: 5, kind: input, shape index: {}]
  %s6 = inlined_call_operand.vmem [shape: bf16[32,128], index: 6, kind: input, shape index: {}]
  %s7 = inlined_call_operand.vmem [shape: bf16[32,128], index: 7, kind: input, shape index: {}]
  %s8 = inlined_call_operand.vmem [shape: f32[1,128], index: 8, kind: input, shape index: {}]
  %s9 = inlined_call_operand.vmem [shape: f32[32,128], index: 9, kind: output, shape index: {}]
  %s10 = sld [smem:[#allocation0]]
  $region46: #{unipose_forward.19} parent=0
    _
  %s12 = ssub.s32 1, %s10
  %s13 = scalar_select 0, %s12, %s10
  // Predicated region
  $region2: #{unipose_forward.19} parent=0 // pred_check
    _
  $region3: #{unipose_forward.19} parent=0 // pred_check_branch
    %15 = sbr.rel (0) target = $region5
  $region4: #{unipose_forward.19} parent=0 // pred_region
    _
  $region5: #{unipose_forward.19} parent=0 // pred_fallthru
    _
  // Predicated region
  $region6: #{unipose_forward.19} parent=0 // pred_check
    _
  $region7: #{unipose_forward.19} parent=0 // pred_check_branch
    %17 = sbr.rel (0) target = $region9
  $region8: #{unipose_forward.19} parent=0 // pred_region
    _
  $region9: #{unipose_forward.19} parent=0 // pred_fallthru
    _
  // Predicated region
  $region10: #{unipose_forward.19} parent=0 // pred_check
    _
  $region11: #{unipose_forward.19} parent=0 // pred_check_branch
    %19 = sbr.rel (0) target = $region13
  $region12: #{unipose_forward.19} parent=0 // pred_region
    _
  $region13: #{unipose_forward.19} parent=0 // pred_fallthru
    _
  // Predicated region
  $region14: #{unipose_forward.19} parent=0 // pred_check
    _
  $region15: #{unipose_forward.19} parent=0 // pred_check_branch
    %21 = sbr.rel (0) target = $region17
  $region16: #{unipose_forward.19} parent=0 // pred_region
    _
  $region17: #{unipose_forward.19} parent=0 // pred_fallthru
    _
  // Predicated region
  $region18: #{unipose_forward.19} parent=0 // pred_check
    _
  $region19: #{unipose_forward.19} parent=0 // pred_check_branch
    %23 = sbr.rel (0) target = $region21
  $region20: #{unipose_forward.19} parent=0 // pred_region
    _
  $region21: #{unipose_forward.19} parent=0 // pred_fallthru
    _
  // Predicated region
  $region22: #{unipose_forward.19} parent=0 // pred_check
    _
  $region23: #{unipose_forward.19} parent=0 // pred_check_branch
    %25 = sbr.rel (0) target = $region25
  $region24: #{unipose_forward.19} parent=0 // pred_region
    _
  $region25: #{unipose_forward.19} parent=0 // pred_fallthru
    _
  // Predicated region
  $region26: #{unipose_forward.19} parent=0 // pred_check
    _
  $region27: #{unipose_forward.19} parent=0 // pred_check_branch
    %27 = sbr.rel (0) target = $region29
  $region28: #{unipose_forward.19} parent=0 // pred_region
    _
  $region29: #{unipose_forward.19} parent=0 // pred_fallthru
    _
  // Predicated region
  $region30: #{unipose_forward.19} parent=0 // pred_check
    _
  $region31: #{unipose_forward.19} parent=0 // pred_check_branch
    %29 = sbr.rel (0) target = $region33
  $region32: #{unipose_forward.19} parent=0 // pred_region
    _
  $region33: #{unipose_forward.19} parent=0 // pred_fallthru
    _
  // Predicated region
  $region34: #{unipose_forward.19} parent=0 // pred_check
    _
  $region35: #{unipose_forward.19} parent=0 // pred_check_branch
    %31 = sbr.rel (0) target = $region37
  $region36: #{unipose_forward.19} parent=0 // pred_region
    _
  $region37: #{unipose_forward.19} parent=0 // pred_fallthru
    _
  %v33 = vld [vmem:[%s0] sm:$0xf]
  %v34 = vld [vmem:[%s0 + $0x4] sm:$0xf]
  %v35 = vld [vmem:[%s0 + $0x8] sm:$0xf]
  %v36 = vld [vmem:[%s0 + $0xc] sm:$0xf]
  %v37 = vld [vmem:[%s4] sm:$0xf]
  %v38 = vld [vmem:[%s4 + $0x4] sm:$0xf]
  %v39 = vld [vmem:[%s4 + $0x8] sm:$0xf]
  %v40 = vld [vmem:[%s4 + $0xc] sm:$0xf]
  %v41 = vld [vmem:[%s1] sm:$0xf]
  %v42 = vld [vmem:[%s1 + $0x4] sm:$0xf]
  %v43 = vld [vmem:[%s1 + $0x8] sm:$0xf]
  %v44 = vld [vmem:[%s1 + $0xc] sm:$0xf]
  %v45 = vld [vmem:[%s5] sm:$0xf]
  %v46 = vld [vmem:[%s5 + $0x4] sm:$0xf]
  %v47 = vld [vmem:[%s5 + $0x8] sm:$0xf]
  %v48 = vld [vmem:[%s5 + $0xc] sm:$0xf]
  %v53 = vunpack.c.l.b16 %v41
  %v54 = vunpack.c.l.b16 %v42
  %v55 = vunpack.c.l.b16 %v43
  %v56 = vunpack.c.l.b16 %v44
  %v57 = vpack.c.b16 %v54, %v53
  %v58 = vpack.c.b16 %v56, %v55
  %v63 = vunpack.c.l.b16 %v45
  %v64 = vunpack.c.l.b16 %v46
  %v65 = vunpack.c.l.b16 %v47
  %v66 = vunpack.c.l.b16 %v48
  %v67 = vpack.c.b16 %v64, %v63
  %v68 = vpack.c.b16 %v66, %v65
  %vm71 = vcmask 261120
  %v73 = vsel %vm71, %v57, 0
  %v76 = vsel %vm71, %v58, 0
  %78 = vmatpush.bf16.msra.mxu0 0
  %79 = vmatpush.bf16.msra.mxu0 0
  %80 = vmatpush.bf16.msra.mxu0 0
  %81 = vmatpush.bf16.msra.mxu0 0
  %82 = vmatpush.bf16.msra.mxu0 0
  %83 = vmatpush.bf16.msra.mxu0 0
  %84 = vmatpush.bf16.msra.mxu0 %v68
  %85 = vmatpush.bf16.msra.mxu0 %v67
  %86 = vmatmul.bf16.gmra.mxu0 %v73
  %v87 = vpop.f32.mrf.mxu0
  %v88 = vadd.f32 0.0, %v87
  %v89 = vpop.f32.mrf.mxu0
  %v90 = vadd.f32 0.0, %v89
  %91 = vmatmul.bf16.gmra.mxu0 %v76
  %v92 = vpop.f32.mrf.mxu0
  %v93 = vadd.f32 0.0, %v92
  %v94 = vpop.f32.mrf.mxu0
  %v95 = vadd.f32 0.0, %v94
  %96 = vdwg.mxu0
  %v101 = vunpack.c.l.b16 %v33
  %v102 = vunpack.c.l.b16 %v34
  %v103 = vunpack.c.l.b16 %v35
  %v104 = vunpack.c.l.b16 %v36
  %v105 = vpack.c.b16 %v102, %v101
  %v106 = vpack.c.b16 %v104, %v103
  %v111 = vunpack.c.l.b16 %v37
  %v112 = vunpack.c.l.b16 %v38
  %v113 = vunpack.c.l.b16 %v39
  %v114 = vunpack.c.l.b16 %v40
  %v115 = vpack.c.b16 %v112, %v111
  %v116 = vpack.c.b16 %v114, %v113
  %v120 = vsel %vm71, %v105, 0
  %v123 = vsel %vm71, %v106, 0
  %125 = vmatpush.bf16.msra.mxu0 0
  %126 = vmatpush.bf16.msra.mxu0 0
  %127 = vmatpush.bf16.msra.mxu0 0
  %128 = vmatpush.bf16.msra.mxu0 0
  %129 = vmatpush.bf16.msra.mxu0 0
  %130 = vmatpush.bf16.msra.mxu0 0
  %131 = vmatpush.bf16.msra.mxu0 %v116
  %132 = vmatpush.bf16.msra.mxu0 %v115
  %133 = vmatmul.bf16.gmra.mxu0 %v120
  %v134 = vpop.f32.mrf.mxu0
  %v135 = vadd.f32 %v88, %v134
  %v136 = vpop.f32.mrf.mxu0
  %v137 = vadd.f32 %v90, %v136
  %138 = vmatmul.bf16.gmra.mxu0 %v123
  %v139 = vpop.f32.mrf.mxu0
  %v140 = vadd.f32 %v93, %v139
  %v141 = vpop.f32.mrf.mxu0
  %v142 = vadd.f32 %v95, %v141
  %143 = vdwg.mxu0
  %v144 = vld [vmem:[%s2] sm:$0xf]
  %v145 = vld [vmem:[%s2 + $0x4] sm:$0xf]
  %v146 = vld [vmem:[%s2 + $0x8] sm:$0xf]
  %v147 = vld [vmem:[%s2 + $0xc] sm:$0xf]
  %v148 = vld [vmem:[%s6] sm:$0xf]
  %v149 = vld [vmem:[%s6 + $0x4] sm:$0xf]
  %v150 = vld [vmem:[%s6 + $0x8] sm:$0xf]
  %v151 = vld [vmem:[%s6 + $0xc] sm:$0xf]
  %v156 = vunpack.c.l.b16 %v144
  %v157 = vunpack.c.l.b16 %v145
  %v158 = vunpack.c.l.b16 %v146
  %v159 = vunpack.c.l.b16 %v147
  %v160 = vpack.c.b16 %v157, %v156
  %v161 = vpack.c.b16 %v159, %v158
  %v166 = vunpack.c.l.b16 %v148
  %v167 = vunpack.c.l.b16 %v149
  %v168 = vunpack.c.l.b16 %v150
  %v169 = vunpack.c.l.b16 %v151
  %v170 = vpack.c.b16 %v167, %v166
  %v171 = vpack.c.b16 %v169, %v168
  %v175 = vsel %vm71, %v160, 0
  %v178 = vsel %vm71, %v161, 0
  %180 = vmatpush.bf16.msra.mxu0 0
  %181 = vmatpush.bf16.msra.mxu0 0
  %182 = vmatpush.bf16.msra.mxu0 0
  %183 = vmatpush.bf16.msra.mxu0 0
  %184 = vmatpush.bf16.msra.mxu0 0
  %185 = vmatpush.bf16.msra.mxu0 0
  %186 = vmatpush.bf16.msra.mxu0 %v171
  %187 = vmatpush.bf16.msra.mxu0 %v170
  %188 = vmatmul.bf16.gmra.mxu0 %v175
  %v189 = vpop.f32.mrf.mxu0
  %v190 = vadd.f32 0.0, %v189
  %v191 = vpop.f32.mrf.mxu0
  %v192 = vadd.f32 0.0, %v191
  %193 = vmatmul.bf16.gmra.mxu0 %v178
  %v194 = vpop.f32.mrf.mxu0
  %v195 = vadd.f32 0.0, %v194
  %v196 = vpop.f32.mrf.mxu0
  %v197 = vadd.f32 0.0, %v196
  %198 = vdwg.mxu0
  %v199 = vadd.f32 %v135, %v190
  %v200 = vadd.f32 %v137, %v192
  %v201 = vadd.f32 %v140, %v195
  %v202 = vadd.f32 %v142, %v197
  %v203 = vld [vmem:[%s3] sm:$0xf]
  %v204 = vld [vmem:[%s3 + $0x4] sm:$0xf]
  %v205 = vld [vmem:[%s3 + $0x8] sm:$0xf]
  %v206 = vld [vmem:[%s3 + $0xc] sm:$0xf]
  %v207 = vld [vmem:[%s7] sm:$0xf]
  %v208 = vld [vmem:[%s7 + $0x4] sm:$0xf]
  %v209 = vld [vmem:[%s7 + $0x8] sm:$0xf]
  %v210 = vld [vmem:[%s7 + $0xc] sm:$0xf]
  %v215 = vunpack.c.l.b16 %v203
  %v216 = vunpack.c.l.b16 %v204
  %v217 = vunpack.c.l.b16 %v205
  %v218 = vunpack.c.l.b16 %v206
  %v219 = vpack.c.b16 %v216, %v215
  %v220 = vpack.c.b16 %v218, %v217
  %v225 = vunpack.c.l.b16 %v207
  %v226 = vunpack.c.l.b16 %v208
  %v227 = vunpack.c.l.b16 %v209
  %v228 = vunpack.c.l.b16 %v210
  %v229 = vpack.c.b16 %v226, %v225
  %v230 = vpack.c.b16 %v228, %v227
  %v234 = vsel %vm71, %v219, 0
  %v237 = vsel %vm71, %v220, 0
  %239 = vmatpush.bf16.msra.mxu0 0
  %240 = vmatpush.bf16.msra.mxu0 0
  %241 = vmatpush.bf16.msra.mxu0 0
  %242 = vmatpush.bf16.msra.mxu0 0
  %243 = vmatpush.bf16.msra.mxu0 0
  %244 = vmatpush.bf16.msra.mxu0 0
  %245 = vmatpush.bf16.msra.mxu0 %v230
  %246 = vmatpush.bf16.msra.mxu0 %v229
  %247 = vmatmul.bf16.gmra.mxu0 %v234
  %v248 = vpop.f32.mrf.mxu0
  %v249 = vadd.f32 0.0, %v248
  %v250 = vpop.f32.mrf.mxu0
  %v251 = vadd.f32 0.0, %v250
  %252 = vmatmul.bf16.gmra.mxu0 %v237
  %v253 = vpop.f32.mrf.mxu0
  %v254 = vadd.f32 0.0, %v253
  %v255 = vpop.f32.mrf.mxu0
  %v256 = vadd.f32 0.0, %v255
  %257 = vdwg.mxu0
  %v258 = vadd.f32 %v199, %v249
  %v259 = vadd.f32 %v200, %v251
  %v260 = vadd.f32 %v201, %v254
  %v261 = vadd.f32 %v202, %v256
  %v262 = vld [vmem:[%s8] sm:$0x1]
  %v264 = vperm.slane %v262, 0
  %v266 = vadd.f32 %v258, %v264
  %v267 = vadd.f32 %v259, %v264
  %v268 = vadd.f32 %v260, %v264
  %v269 = vadd.f32 %v261, %v264
  %270 = vst [vmem:[%s9] sm:$0xff] %v266
  %271 = vst [vmem:[%s9 + $0x8] sm:$0xff] %v267
  %272 = vst [vmem:[%s9 + $0x10] sm:$0xff] %v268
  %273 = vst [vmem:[%s9 + $0x18] sm:$0xff] %v269
  // Predicated region
  $region38: #{unipose_forward.19} parent=0 // pred_check
    _
  $region39: #{unipose_forward.19} parent=0 // pred_check_branch
    %275 = sbr.rel (0) target = $region41
  $region40: #{unipose_forward.19} parent=0 // pred_region
    _
  $region41: #{unipose_forward.19} parent=0 // pred_fallthru
    _
  // Predicated region
  $region42: #{unipose_forward.19} parent=0 // pred_check
    _
  $region43: #{unipose_forward.19} parent=0 // pred_check_branch
    %277 = sbr.rel (0) target = $region45
  $region44: #{unipose_forward.19} parent=0 // pred_region
    _
  $region45: #{unipose_forward.19} parent=0 // pred_fallthru
    _

// kernel: unipose_forward.22
$region0: #{unipose_forward.22}
  #allocation0 [shape = 'u32[]', space=smem, size = 0x4, offset = 0x4, fixed_abs, tag = 'smem constant byte address 0x4 - core index']
  #allocation1 [shape = 'u32[72,128]{1,0:T(1,128)}', space=vmem, size = 0x9000, scoped, tag = 'internal scratch']
  %s0 = inlined_call_operand.vmem [shape: bf16[128,288], index: 0, kind: input, shape index: {}]
  %s1 = inlined_call_operand.vmem [shape: bf16[288,128], index: 1, kind: input, shape index: {}]
  %s2 = inlined_call_operand.vmem [shape: f32[1,128], index: 2, kind: input, shape index: {}]
  %s3 = inlined_call_operand.vmem [shape: bf16[128,128], index: 3, kind: output, shape index: {}]
  %s4 = sld [smem:[#allocation0]]
  $region22: #{unipose_forward.22} parent=0
    _
  %s6 = ssub.s32 1, %s4
  %s7 = scalar_select 0, %s6, %s4
  // Predicated region
  $region2: #{unipose_forward.22} parent=0 // pred_check
    _
  $region3: #{unipose_forward.22} parent=0 // pred_check_branch
    %9 = sbr.rel (0) target = $region5
  $region4: #{unipose_forward.22} parent=0 // pred_region
    _
  $region5: #{unipose_forward.22} parent=0 // pred_fallthru
    _
  // Predicated region
  $region6: #{unipose_forward.22} parent=0 // pred_check
    _
  $region7: #{unipose_forward.22} parent=0 // pred_check_branch
    %11 = sbr.rel (0) target = $region9
  $region8: #{unipose_forward.22} parent=0 // pred_region
    _
  $region9: #{unipose_forward.22} parent=0 // pred_fallthru
    _
  // Predicated region
  $region10: #{unipose_forward.22} parent=0 // pred_check
    _
  $region11: #{unipose_forward.22} parent=0 // pred_check_branch
    %13 = sbr.rel (0) target = $region13
  $region12: #{unipose_forward.22} parent=0 // pred_region
    _
  $region13: #{unipose_forward.22} parent=0 // pred_fallthru
    _
  %v15 = vld [vmem:[%s0] sm:$0xff]
  %v16 = vld [vmem:[%s0 + $0x8] sm:$0xf]
  %v17 = vld [vmem:[%s0 + $0xc] sm:$0xff]
  %v18 = vld [vmem:[%s0 + $0x14] sm:$0xf]
  %v19 = vld [vmem:[%s0 + $0x18] sm:$0xff]
  %v20 = vld [vmem:[%s0 + $0x20] sm:$0xf]
  %v21 = vld [vmem:[%s0 + $0x24] sm:$0xff]
  %v22 = vld [vmem:[%s0 + $0x2c] sm:$0xf]
  %v23 = vld [vmem:[%s0 + $0x30] sm:$0xff]
  %v24 = vld [vmem:[%s0 + $0x38] sm:$0xf]
  %v25 = vld [vmem:[%s0 + $0x3c] sm:$0xff]
  %v26 = vld [vmem:[%s0 + $0x44] sm:$0xf]
  %v27 = vld [vmem:[%s0 + $0x48] sm:$0xff]
  %v28 = vld [vmem:[%s0 + $0x50] sm:$0xf]
  %v29 = vld [vmem:[%s0 + $0x54] sm:$0xff]
  %v30 = vld [vmem:[%s0 + $0x5c] sm:$0xf]
  %v31 = vld [vmem:[%s0 + $0x60] sm:$0xff]
  %v32 = vld [vmem:[%s0 + $0x68] sm:$0xf]
  %v33 = vld [vmem:[%s0 + $0x6c] sm:$0xff]
  %v34 = vld [vmem:[%s0 + $0x74] sm:$0xf]
  %v35 = vld [vmem:[%s0 + $0x78] sm:$0xff]
  %v36 = vld [vmem:[%s0 + $0x80] sm:$0xf]
  %v37 = vld [vmem:[%s0 + $0x84] sm:$0xff]
  %v38 = vld [vmem:[%s0 + $0x8c] sm:$0xf]
  %v39 = vld [vmem:[%s0 + $0x90] sm:$0xff]
  %v40 = vld [vmem:[%s0 + $0x98] sm:$0xf]
  %v41 = vld [vmem:[%s0 + $0x9c] sm:$0xff]
  %v42 = vld [vmem:[%s0 + $0xa4] sm:$0xf]
  %v43 = vld [vmem:[%s0 + $0xa8] sm:$0xff]
  %v44 = vld [vmem:[%s0 + $0xb0] sm:$0xf]
  %v45 = vld [vmem:[%s0 + $0xb4] sm:$0xff]
  %v46 = vld [vmem:[%s0 + $0xbc] sm:$0xf]
  %v47 = vld [vmem:[%s1] sm:$0xf]
  %v48 = vld [vmem:[%s1 + $0x4] sm:$0xf]
  %v49 = vld [vmem:[%s1 + $0x8] sm:$0xf]
  %v50 = vld [vmem:[%s1 + $0xc] sm:$0xf]
  %v51 = vld [vmem:[%s1 + $0x10] sm:$0xf]
  %v52 = vld [vmem:[%s1 + $0x14] sm:$0xf]
  %v53 = vld [vmem:[%s1 + $0x18] sm:$0xf]
  %v54 = vld [vmem:[%s1 + $0x1c] sm:$0xf]
  %v55 = vld [vmem:[%s1 + $0x20] sm:$0xf]
  %v56 = vld [vmem:[%s1 + $0x24] sm:$0xf]
  %v57 = vld [vmem:[%s1 + $0x28] sm:$0xf]
  %v58 = vld [vmem:[%s1 + $0x2c] sm:$0xf]
  %v59 = vld [vmem:[%s1 + $0x30] sm:$0xf]
  %v60 = vld [vmem:[%s1 + $0x34] sm:$0xf]
  %v61 = vld [vmem:[%s1 + $0x38] sm:$0xf]
  %v62 = vld [vmem:[%s1 + $0x3c] sm:$0xf]
  %v63 = vld [vmem:[%s1 + $0x40] sm:$0xf]
  %v64 = vld [vmem:[%s1 + $0x44] sm:$0xf]
  %v65 = vld [vmem:[%s1 + $0x48] sm:$0xf]
  %v66 = vld [vmem:[%s1 + $0x4c] sm:$0xf]
  %v67 = vld [vmem:[%s1 + $0x50] sm:$0xf]
  %v68 = vld [vmem:[%s1 + $0x54] sm:$0xf]
  %v69 = vld [vmem:[%s1 + $0x58] sm:$0xf]
  %v70 = vld [vmem:[%s1 + $0x5c] sm:$0xf]
  %v71 = vld [vmem:[%s1 + $0x60] sm:$0xf]
  %v72 = vld [vmem:[%s1 + $0x64] sm:$0xf]
  %v73 = vld [vmem:[%s1 + $0x68] sm:$0xf]
  %v74 = vld [vmem:[%s1 + $0x6c] sm:$0xf]
  %v75 = vld [vmem:[%s1 + $0x70] sm:$0xf]
  %v76 = vld [vmem:[%s1 + $0x74] sm:$0xf]
  %v77 = vld [vmem:[%s1 + $0x78] sm:$0xf]
  %v78 = vld [vmem:[%s1 + $0x7c] sm:$0xf]
  %v79 = vld [vmem:[%s1 + $0x80] sm:$0xf]
  %v80 = vld [vmem:[%s1 + $0x84] sm:$0xf]
  %v81 = vld [vmem:[%s1 + $0x88] sm:$0xf]
  %v82 = vld [vmem:[%s1 + $0x8c] sm:$0xf]
  %v83 = vld [vmem:[%s2] sm:$0x1]
  %v85 = vperm.slane %v83, 0
  %v119 = vunpack.c.l.b16 %v15
  %v120 = vunpack.c.h.b16 %v15
  %v121 = vunpack.c.l.b16 %v16
  %v122 = vunpack.c.l.b16 %v17
  %v123 = vunpack.c.h.b16 %v17
  %v124 = vunpack.c.l.b16 %v18
  %v125 = vunpack.c.l.b16 %v19
  %v126 = vunpack.c.h.b16 %v19
  %v127 = vunpack.c.l.b16 %v20
  %v128 = vunpack.c.l.b16 %v21
  %v129 = vunpack.c.h.b16 %v21
  %v130 = vunpack.c.l.b16 %v22
  %v131 = vunpack.c.l.b16 %v23
  %v132 = vunpack.c.h.b16 %v23
  %v133 = vunpack.c.l.b16 %v24
  %v134 = vunpack.c.l.b16 %v25
  %v135 = vunpack.c.h.b16 %v25
  %v136 = vunpack.c.l.b16 %v26
  %v137 = vunpack.c.l.b16 %v27
  %v138 = vunpack.c.h.b16 %v27
  %v139 = vunpack.c.l.b16 %v28
  %v140 = vunpack.c.l.b16 %v29
  %v141 = vunpack.c.h.b16 %v29
  %v142 = vunpack.c.l.b16 %v30
  %v143 = vunpack.c.l.b16 %v31
  %v144 = vunpack.c.h.b16 %v31
  %v145 = vunpack.c.l.b16 %v32
  %v146 = vunpack.c.l.b16 %v33
  %v147 = vunpack.c.h.b16 %v33
  %v148 = vunpack.c.l.b16 %v34
  %v149 = vunpack.c.l.b16 %v35
  %v150 = vunpack.c.h.b16 %v35
  %v151 = vunpack.c.l.b16 %v36
  %v152 = vunpack.c.l.b16 %v37
  %v153 = vunpack.c.h.b16 %v37
  %v154 = vunpack.c.l.b16 %v38
  %v155 = vunpack.c.l.b16 %v39
  %v156 = vunpack.c.h.b16 %v39
  %v157 = vunpack.c.l.b16 %v40
  %v158 = vunpack.c.l.b16 %v41
  %v159 = vunpack.c.h.b16 %v41
  %v160 = vunpack.c.l.b16 %v42
  %v161 = vunpack.c.l.b16 %v43
  %v162 = vunpack.c.h.b16 %v43
  %v163 = vunpack.c.l.b16 %v44
  %v164 = vunpack.c.l.b16 %v45
  %v165 = vunpack.c.h.b16 %v45
  %v166 = vunpack.c.l.b16 %v46
  %v167 = vpack.c.b16 %v122, %v119
  %v168 = vpack.c.b16 %v123, %v120
  %v169 = vpack.c.b16 %v124, %v121
  %v170 = vpack.c.b16 %v128, %v125
  %v171 = vpack.c.b16 %v129, %v126
  %v172 = vpack.c.b16 %v130, %v127
  %v173 = vpack.c.b16 %v134, %v131
  %v174 = vpack.c.b16 %v135, %v132
  %v175 = vpack.c.b16 %v136, %v133
  %v176 = vpack.c.b16 %v140, %v137
  %v177 = vpack.c.b16 %v141, %v138
  %v178 = vpack.c.b16 %v142, %v139
  %v179 = vpack.c.b16 %v146, %v143
  %v180 = vpack.c.b16 %v147, %v144
  %v181 = vpack.c.b16 %v148, %v145
  %v182 = vpack.c.b16 %v152, %v149
  %v183 = vpack.c.b16 %v153, %v150
  %v184 = vpack.c.b16 %v154, %v151
  %v185 = vpack.c.b16 %v158, %v155
  %v186 = vpack.c.b16 %v159, %v156
  %v187 = vpack.c.b16 %v160, %v157
  %v188 = vpack.c.b16 %v164, %v161
  %v189 = vpack.c.b16 %v165, %v162
  %v190 = vpack.c.b16 %v166, %v163
  %v243 = vunpack.c.l.b16 %v47
  %v244 = vunpack.c.l.b16 %v48
  %v245 = vunpack.c.l.b16 %v49
  %v246 = vunpack.c.l.b16 %v50
  %v247 = vunpack.c.l.b16 %v51
  %v248 = vunpack.c.l.b16 %v52
  %v249 = vunpack.c.l.b16 %v53
  %v250 = vunpack.c.l.b16 %v54
  %v251 = vunpack.c.l.b16 %v55
  %v252 = vunpack.c.l.b16 %v56
  %v253 = vunpack.c.l.b16 %v57
  %v254 = vunpack.c.l.b16 %v58
  %v255 = vunpack.c.l.b16 %v59
  %v256 = vunpack.c.l.b16 %v60
  %v257 = vunpack.c.l.b16 %v61
  %v258 = vunpack.c.l.b16 %v62
  %v259 = vunpack.c.l.b16 %v63
  %v260 = vunpack.c.l.b16 %v64
  %v261 = vunpack.c.l.b16 %v65
  %v262 = vunpack.c.l.b16 %v66
  %v263 = vunpack.c.l.b16 %v67
  %v264 = vunpack.c.l.b16 %v68
  %v265 = vunpack.c.l.b16 %v69
  %v266 = vunpack.c.l.b16 %v70
  %v267 = vunpack.c.l.b16 %v71
  %v268 = vunpack.c.l.b16 %v72
  %v269 = vunpack.c.l.b16 %v73
  %v270 = vunpack.c.l.b16 %v74
  %v271 = vunpack.c.l.b16 %v75
  %v272 = vunpack.c.l.b16 %v76
  %v273 = vunpack.c.l.b16 %v77
  %v274 = vunpack.c.l.b16 %v78
  %v275 = vunpack.c.l.b16 %v79
  %v276 = vunpack.c.l.b16 %v80
  %v277 = vunpack.c.l.b16 %v81
  %v278 = vunpack.c.l.b16 %v82
  %v279 = vpack.c.b16 %v244, %v243
  %v280 = vpack.c.b16 %v246, %v245
  %v281 = vpack.c.b16 %v248, %v247
  %v282 = vpack.c.b16 %v250, %v249
  %v283 = vpack.c.b16 %v252, %v251
  %v284 = vpack.c.b16 %v254, %v253
  %v285 = vpack.c.b16 %v256, %v255
  %v286 = vpack.c.b16 %v258, %v257
  %v287 = vpack.c.b16 %v260, %v259
  %v288 = vpack.c.b16 %v262, %v261
  %v289 = vpack.c.b16 %v264, %v263
  %v290 = vpack.c.b16 %v266, %v265
  %v291 = vpack.c.b16 %v268, %v267
  %v292 = vpack.c.b16 %v270, %v269
  %v293 = vpack.c.b16 %v272, %v271
  %v294 = vpack.c.b16 %v274, %v273
  %v295 = vpack.c.b16 %v276, %v275
  %v296 = vpack.c.b16 %v278, %v277
  %vm315 = vcmask 261120
  %v317 = vsel %vm315, %v169, 0
  %v320 = vsel %vm315, %v172, 0
  %v323 = vsel %vm315, %v175, 0
  %v326 = vsel %vm315, %v178, 0
  %v329 = vsel %vm315, %v181, 0
  %v332 = vsel %vm315, %v184, 0
  %v335 = vsel %vm315, %v187, 0
  %v338 = vsel %vm315, %v190, 0
  %340 = vmatpush.bf16.msra.mxu0 %v286
  %341 = vmatpush.bf16.msra.mxu0 %v285
  %342 = vmatpush.bf16.msra.mxu0 %v284
  %343 = vmatpush.bf16.msra.mxu0 %v283
  %344 = vmatpush.bf16.msra.mxu0 %v282
  %345 = vmatpush.bf16.msra.mxu0 %v281
  %346 = vmatpush.bf16.msra.mxu0 %v280
  %347 = vmatpush.bf16.msra.mxu0 %v279
  %348 = vmatmul.bf16.gmra.mxu0 %v167
  %v349 = vpop.f32.mrf.mxu0
  %v350 = vadd.f32 %v85, %v349
  %v351 = vpop.f32.mrf.mxu0
  %v352 = vadd.f32 %v85, %v351
  %353 = vmatmul.bf16.gmra.mxu0 %v170
  %v354 = vpop.f32.mrf.mxu0
  %v355 = vadd.f32 %v85, %v354
  %v356 = vpop.f32.mrf.mxu0
  %v357 = vadd.f32 %v85, %v356
  %358 = vmatmul.bf16.gmra.mxu0 %v173
  %v359 = vpop.f32.mrf.mxu0
  %v360 = vadd.f32 %v85, %v359
  %v361 = vpop.f32.mrf.mxu0
  %v362 = vadd.f32 %v85, %v361
  %363 = vmatmul.bf16.gmra.mxu0 %v176
  %v364 = vpop.f32.mrf.mxu0
  %v365 = vadd.f32 %v85, %v364
  %v366 = vpop.f32.mrf.mxu0
  %v367 = vadd.f32 %v85, %v366
  %368 = vmatmul.bf16.gmra.mxu0 %v179
  %v369 = vpop.f32.mrf.mxu0
  %v370 = vadd.f32 %v85, %v369
  %v371 = vpop.f32.mrf.mxu0
  %v372 = vadd.f32 %v85, %v371
  %373 = vmatmul.bf16.gmra.mxu0 %v182
  %v374 = vpop.f32.mrf.mxu0
  %v375 = vadd.f32 %v85, %v374
  %v376 = vpop.f32.mrf.mxu0
  %v377 = vadd.f32 %v85, %v376
  %378 = vmatmul.bf16.gmra.mxu0 %v185
  %v379 = vpop.f32.mrf.mxu0
  %v380 = vadd.f32 %v85, %v379
  %v381 = vpop.f32.mrf.mxu0
  %v382 = vadd.f32 %v85, %v381
  %383 = vmatmul.bf16.gmra.mxu0 %v188
  %v384 = vpop.f32.mrf.mxu0
  %v385 = vadd.f32 %v85, %v384
  %v386 = vpop.f32.mrf.mxu0
  %v387 = vadd.f32 %v85, %v386
  %388 = vdwg.mxu0
  %389 = vmatpush.bf16.msra.mxu0 %v294
  %390 = vmatpush.bf16.msra.mxu0 %v293
  %391 = vmatpush.bf16.msra.mxu0 %v292
  %392 = vmatpush.bf16.msra.mxu0 %v291
  %393 = vmatpush.bf16.msra.mxu0 %v290
  %394 = vmatpush.bf16.msra.mxu0 %v289
  %395 = vmatpush.bf16.msra.mxu0 %v288
  %396 = vmatpush.bf16.msra.mxu0 %v287
  %397 = vmatmul.bf16.gmra.mxu0 %v168
  %v398 = vpop.f32.mrf.mxu0
  %v399 = vadd.f32 %v350, %v398
  %v400 = vpop.f32.mrf.mxu0
  %v401 = vadd.f32 %v352, %v400
  %402 = vmatmul.bf16.gmra.mxu0 %v171
  %v403 = vpop.f32.mrf.mxu0
  %v404 = vadd.f32 %v355, %v403
  %v405 = vpop.f32.mrf.mxu0
  %v406 = vadd.f32 %v357, %v405
  %407 = vmatmul.bf16.gmra.mxu0 %v174
  %v408 = vpop.f32.mrf.mxu0
  %v409 = vadd.f32 %v360, %v408
  %v410 = vpop.f32.mrf.mxu0
  %v411 = vadd.f32 %v362, %v410
  %412 = vmatmul.bf16.gmra.mxu0 %v177
  %v413 = vpop.f32.mrf.mxu0
  %v414 = vadd.f32 %v365, %v413
  %v415 = vpop.f32.mrf.mxu0
  %v416 = vadd.f32 %v367, %v415
  %417 = vmatmul.bf16.gmra.mxu0 %v180
  %v418 = vpop.f32.mrf.mxu0
  %v419 = vadd.f32 %v370, %v418
  %v420 = vpop.f32.mrf.mxu0
  %v421 = vadd.f32 %v372, %v420
  %422 = vmatmul.bf16.gmra.mxu0 %v183
  %v423 = vpop.f32.mrf.mxu0
  %v424 = vadd.f32 %v375, %v423
  %v425 = vpop.f32.mrf.mxu0
  %v426 = vadd.f32 %v377, %v425
  %427 = vmatmul.bf16.gmra.mxu0 %v186
  %v428 = vpop.f32.mrf.mxu0
  %v429 = vadd.f32 %v380, %v428
  %v430 = vpop.f32.mrf.mxu0
  %v431 = vadd.f32 %v382, %v430
  %432 = vmatmul.bf16.gmra.mxu0 %v189
  %v433 = vpop.f32.mrf.mxu0
  %v434 = vadd.f32 %v385, %v433
  %v435 = vpop.f32.mrf.mxu0
  %v436 = vadd.f32 %v387, %v435
  %437 = vdwg.mxu0
  %438 = vmatpush.bf16.msra.mxu0 0
  %439 = vmatpush.bf16.msra.mxu0 0
  %440 = vmatpush.bf16.msra.mxu0 0
  %441 = vmatpush.bf16.msra.mxu0 0
  %442 = vmatpush.bf16.msra.mxu0 0
  %443 = vmatpush.bf16.msra.mxu0 0
  %444 = vmatpush.bf16.msra.mxu0 %v296
  %445 = vmatpush.bf16.msra.mxu0 %v295
  %446 = vmatmul.bf16.gmra.mxu0 %v317
  %v447 = vpop.f32.mrf.mxu0
  %v448 = vadd.f32 %v399, %v447
  %v449 = vpop.f32.mrf.mxu0
  %v450 = vadd.f32 %v401, %v449
  %451 = vmatmul.bf16.gmra.mxu0 %v320
  %v452 = vpop.f32.mrf.mxu0
  %v453 = vadd.f32 %v404, %v452
  %v454 = vpop.f32.mrf.mxu0
  %v455 = vadd.f32 %v406, %v454
  %456 = vmatmul.bf16.gmra.mxu0 %v323
  %v457 = vpop.f32.mrf.mxu0
  %v458 = vadd.f32 %v409, %v457
  %v459 = vpop.f32.mrf.mxu0
  %v460 = vadd.f32 %v411, %v459
  %461 = vmatmul.bf16.gmra.mxu0 %v326
  %v462 = vpop.f32.mrf.mxu0
  %v463 = vadd.f32 %v414, %v462
  %v464 = vpop.f32.mrf.mxu0
  %v465 = vadd.f32 %v416, %v464
  %466 = vmatmul.bf16.gmra.mxu0 %v329
  %v467 = vpop.f32.mrf.mxu0
  %v468 = vadd.f32 %v419, %v467
  %v469 = vpop.f32.mrf.mxu0
  %v470 = vadd.f32 %v421, %v469
  %471 = vmatmul.bf16.gmra.mxu0 %v332
  %v472 = vpop.f32.mrf.mxu0
  %v473 = vadd.f32 %v424, %v472
  %v474 = vpop.f32.mrf.mxu0
  %v475 = vadd.f32 %v426, %v474
  %476 = vmatmul.bf16.gmra.mxu0 %v335
  %v477 = vpop.f32.mrf.mxu0
  %v478 = vadd.f32 %v429, %v477
  %v479 = vpop.f32.mrf.mxu0
  %v480 = vadd.f32 %v431, %v479
  %481 = vmatmul.bf16.gmra.mxu0 %v338
  %v482 = vpop.f32.mrf.mxu0
  %v483 = vadd.f32 %v434, %v482
  %v484 = vpop.f32.mrf.mxu0
  %v485 = vadd.f32 %v436, %v484
  %486 = vdwg.mxu0
  %v487 = vmax.f32 %v448, 0.0
  %v488 = vmax.f32 %v450, 0.0
  %v489 = vmax.f32 %v453, 0.0
  %v490 = vmax.f32 %v455, 0.0
  %v491 = vmax.f32 %v458, 0.0
  %v492 = vmax.f32 %v460, 0.0
  %v493 = vmax.f32 %v463, 0.0
  %v494 = vmax.f32 %v465, 0.0
  %v495 = vmax.f32 %v468, 0.0
  %v496 = vmax.f32 %v470, 0.0
  %v497 = vmax.f32 %v473, 0.0
  %v498 = vmax.f32 %v475, 0.0
  %v499 = vmax.f32 %v478, 0.0
  %v500 = vmax.f32 %v480, 0.0
  %v501 = vmax.f32 %v483, 0.0
  %v502 = vmax.f32 %v485, 0.0
  %v503 = vpack.c.bf16 %v487, %v487
  %v504 = vpack.c.bf16 %v488, %v488
  %v505 = vpack.c.bf16 %v489, %v489
  %v506 = vpack.c.bf16 %v490, %v490
  %v507 = vpack.c.bf16 %v491, %v491
  %v508 = vpack.c.bf16 %v492, %v492
  %v509 = vpack.c.bf16 %v493, %v493
  %v510 = vpack.c.bf16 %v494, %v494
  %v511 = vpack.c.bf16 %v495, %v495
  %v512 = vpack.c.bf16 %v496, %v496
  %v513 = vpack.c.bf16 %v497, %v497
  %v514 = vpack.c.bf16 %v498, %v498
  %v515 = vpack.c.bf16 %v499, %v499
  %v516 = vpack.c.bf16 %v500, %v500
  %v517 = vpack.c.bf16 %v501, %v501
  %v518 = vpack.c.bf16 %v502, %v502
  %519 = vst [vmem:[%s3] sm:$0xf] %v503
  %520 = vst [vmem:[%s3 + $0x4] sm:$0xf] %v504
  %521 = vst [vmem:[%s3 + $0x8] sm:$0xf] %v505
  %522 = vst [vmem:[%s3 + $0xc] sm:$0xf] %v506
  %523 = vst [vmem:[%s3 + $0x10] sm:$0xf] %v507
  %524 = vst [vmem:[%s3 + $0x14] sm:$0xf] %v508
  %525 = vst [vmem:[%s3 + $0x18] sm:$0xf] %v509
  %526 = vst [vmem:[%s3 + $0x1c] sm:$0xf] %v510
  %527 = vst [vmem:[%s3 + $0x20] sm:$0xf] %v511
  %528 = vst [vmem:[%s3 + $0x24] sm:$0xf] %v512
  %529 = vst [vmem:[%s3 + $0x28] sm:$0xf] %v513
  %530 = vst [vmem:[%s3 + $0x2c] sm:$0xf] %v514
  %531 = vst [vmem:[%s3 + $0x30] sm:$0xf] %v515
  %532 = vst [vmem:[%s3 + $0x34] sm:$0xf] %v516
  %533 = vst [vmem:[%s3 + $0x38] sm:$0xf] %v517
  %534 = vst [vmem:[%s3 + $0x3c] sm:$0xf] %v518
  // Predicated region
  $region14: #{unipose_forward.22} parent=0 // pred_check
    _
  $region15: #{unipose_forward.22} parent=0 // pred_check_branch
    %536 = sbr.rel (0) target = $region17
  $region16: #{unipose_forward.22} parent=0 // pred_region
    _
  $region17: #{unipose_forward.22} parent=0 // pred_fallthru
    _
  // Predicated region
  $region18: #{unipose_forward.22} parent=0 // pred_check
    _
  $region19: #{unipose_forward.22} parent=0 // pred_check_branch
    %538 = sbr.rel (0) target = $region21
  $region20: #{unipose_forward.22} parent=0 // pred_region
    _
  $region21: #{unipose_forward.22} parent=0 // pred_fallthru
    _

// kernel: unipose_forward.21
$region0: #{unipose_forward.21}
  #allocation0 [shape = 'u32[]', space=smem, size = 0x4, offset = 0x4, fixed_abs, tag = 'smem constant byte address 0x4 - core index']
  #allocation1 [shape = 'u32[72,128]{1,0:T(1,128)}', space=vmem, size = 0x9000, scoped, tag = 'internal scratch']
  %s0 = inlined_call_operand.vmem [shape: bf16[128,288], index: 0, kind: input, shape index: {}]
  %s1 = inlined_call_operand.vmem [shape: bf16[128,72], index: 1, kind: input, shape index: {}]
  %s2 = inlined_call_operand.vmem [shape: bf16[288,128], index: 2, kind: input, shape index: {}]
  %s3 = inlined_call_operand.vmem [shape: bf16[72,128], index: 3, kind: input, shape index: {}]
  %s4 = inlined_call_operand.vmem [shape: f32[1,128], index: 4, kind: input, shape index: {}]
  %s5 = inlined_call_operand.vmem [shape: bf16[128,128], index: 5, kind: output, shape index: {}]
  %s6 = sld [smem:[#allocation0]]
  $region30: #{unipose_forward.21} parent=0
    _
  %s8 = ssub.s32 1, %s6
  %s9 = scalar_select 0, %s8, %s6
  // Predicated region
  $region2: #{unipose_forward.21} parent=0 // pred_check
    _
  $region3: #{unipose_forward.21} parent=0 // pred_check_branch
    %11 = sbr.rel (0) target = $region5
  $region4: #{unipose_forward.21} parent=0 // pred_region
    _
  $region5: #{unipose_forward.21} parent=0 // pred_fallthru
    _
  // Predicated region
  $region6: #{unipose_forward.21} parent=0 // pred_check
    _
  $region7: #{unipose_forward.21} parent=0 // pred_check_branch
    %13 = sbr.rel (0) target = $region9
  $region8: #{unipose_forward.21} parent=0 // pred_region
    _
  $region9: #{unipose_forward.21} parent=0 // pred_fallthru
    _
  // Predicated region
  $region10: #{unipose_forward.21} parent=0 // pred_check
    _
  $region11: #{unipose_forward.21} parent=0 // pred_check_branch
    %15 = sbr.rel (0) target = $region13
  $region12: #{unipose_forward.21} parent=0 // pred_region
    _
  $region13: #{unipose_forward.21} parent=0 // pred_fallthru
    _
  // Predicated region
  $region14: #{unipose_forward.21} parent=0 // pred_check
    _
  $region15: #{unipose_forward.21} parent=0 // pred_check_branch
    %17 = sbr.rel (0) target = $region17
  $region16: #{unipose_forward.21} parent=0 // pred_region
    _
  $region17: #{unipose_forward.21} parent=0 // pred_fallthru
    _
  // Predicated region
  $region18: #{unipose_forward.21} parent=0 // pred_check
    _
  $region19: #{unipose_forward.21} parent=0 // pred_check_branch
    %19 = sbr.rel (0) target = $region21
  $region20: #{unipose_forward.21} parent=0 // pred_region
    _
  $region21: #{unipose_forward.21} parent=0 // pred_fallthru
    _
  %v21 = vld [vmem:[%s0] sm:$0xff]
  %v22 = vld [vmem:[%s0 + $0x8] sm:$0xf]
  %v23 = vld [vmem:[%s0 + $0xc] sm:$0xff]
  %v24 = vld [vmem:[%s0 + $0x14] sm:$0xf]
  %v25 = vld [vmem:[%s0 + $0x18] sm:$0xff]
  %v26 = vld [vmem:[%s0 + $0x20] sm:$0xf]
  %v27 = vld [vmem:[%s0 + $0x24] sm:$0xff]
  %v28 = vld [vmem:[%s0 + $0x2c] sm:$0xf]
  %v29 = vld [vmem:[%s0 + $0x30] sm:$0xff]
  %v30 = vld [vmem:[%s0 + $0x38] sm:$0xf]
  %v31 = vld [vmem:[%s0 + $0x3c] sm:$0xff]
  %v32 = vld [vmem:[%s0 + $0x44] sm:$0xf]
  %v33 = vld [vmem:[%s0 + $0x48] sm:$0xff]
  %v34 = vld [vmem:[%s0 + $0x50] sm:$0xf]
  %v35 = vld [vmem:[%s0 + $0x54] sm:$0xff]
  %v36 = vld [vmem:[%s0 + $0x5c] sm:$0xf]
  %v37 = vld [vmem:[%s0 + $0x60] sm:$0xff]
  %v38 = vld [vmem:[%s0 + $0x68] sm:$0xf]
  %v39 = vld [vmem:[%s0 + $0x6c] sm:$0xff]
  %v40 = vld [vmem:[%s0 + $0x74] sm:$0xf]
  %v41 = vld [vmem:[%s0 + $0x78] sm:$0xff]
  %v42 = vld [vmem:[%s0 + $0x80] sm:$0xf]
  %v43 = vld [vmem:[%s0 + $0x84] sm:$0xff]
  %v44 = vld [vmem:[%s0 + $0x8c] sm:$0xf]
  %v45 = vld [vmem:[%s0 + $0x90] sm:$0xff]
  %v46 = vld [vmem:[%s0 + $0x98] sm:$0xf]
  %v47 = vld [vmem:[%s0 + $0x9c] sm:$0xff]
  %v48 = vld [vmem:[%s0 + $0xa4] sm:$0xf]
  %v49 = vld [vmem:[%s0 + $0xa8] sm:$0xff]
  %v50 = vld [vmem:[%s0 + $0xb0] sm:$0xf]
  %v51 = vld [vmem:[%s0 + $0xb4] sm:$0xff]
  %v52 = vld [vmem:[%s0 + $0xbc] sm:$0xf]
  %v53 = vld [vmem:[%s2] sm:$0xf]
  %v54 = vld [vmem:[%s2 + $0x4] sm:$0xf]
  %v55 = vld [vmem:[%s2 + $0x8] sm:$0xf]
  %v56 = vld [vmem:[%s2 + $0xc] sm:$0xf]
  %v57 = vld [vmem:[%s2 + $0x10] sm:$0xf]
  %v58 = vld [vmem:[%s2 + $0x14] sm:$0xf]
  %v59 = vld [vmem:[%s2 + $0x18] sm:$0xf]
  %v60 = vld [vmem:[%s2 + $0x1c] sm:$0xf]
  %v61 = vld [vmem:[%s2 + $0x20] sm:$0xf]
  %v62 = vld [vmem:[%s2 + $0x24] sm:$0xf]
  %v63 = vld [vmem:[%s2 + $0x28] sm:$0xf]
  %v64 = vld [vmem:[%s2 + $0x2c] sm:$0xf]
  %v65 = vld [vmem:[%s2 + $0x30] sm:$0xf]
  %v66 = vld [vmem:[%s2 + $0x34] sm:$0xf]
  %v67 = vld [vmem:[%s2 + $0x38] sm:$0xf]
  %v68 = vld [vmem:[%s2 + $0x3c] sm:$0xf]
  %v69 = vld [vmem:[%s2 + $0x40] sm:$0xf]
  %v70 = vld [vmem:[%s2 + $0x44] sm:$0xf]
  %v71 = vld [vmem:[%s2 + $0x48] sm:$0xf]
  %v72 = vld [vmem:[%s2 + $0x4c] sm:$0xf]
  %v73 = vld [vmem:[%s2 + $0x50] sm:$0xf]
  %v74 = vld [vmem:[%s2 + $0x54] sm:$0xf]
  %v75 = vld [vmem:[%s2 + $0x58] sm:$0xf]
  %v76 = vld [vmem:[%s2 + $0x5c] sm:$0xf]
  %v77 = vld [vmem:[%s2 + $0x60] sm:$0xf]
  %v78 = vld [vmem:[%s2 + $0x64] sm:$0xf]
  %v79 = vld [vmem:[%s2 + $0x68] sm:$0xf]
  %v80 = vld [vmem:[%s2 + $0x6c] sm:$0xf]
  %v81 = vld [vmem:[%s2 + $0x70] sm:$0xf]
  %v82 = vld [vmem:[%s2 + $0x74] sm:$0xf]
  %v83 = vld [vmem:[%s2 + $0x78] sm:$0xf]
  %v84 = vld [vmem:[%s2 + $0x7c] sm:$0xf]
  %v85 = vld [vmem:[%s2 + $0x80] sm:$0xf]
  %v86 = vld [vmem:[%s2 + $0x84] sm:$0xf]
  %v87 = vld [vmem:[%s2 + $0x88] sm:$0xf]
  %v88 = vld [vmem:[%s2 + $0x8c] sm:$0xf]
  %v89 = vld [vmem:[%s1] sm:$0xf]
  %v90 = vld [vmem:[%s1 + $0x4] sm:$0xf]
  %v91 = vld [vmem:[%s1 + $0x8] sm:$0xf]
  %v92 = vld [vmem:[%s1 + $0xc] sm:$0xf]
  %v93 = vld [vmem:[%s1 + $0x10] sm:$0xf]
  %v94 = vld [vmem:[%s1 + $0x14] sm:$0xf]
  %v95 = vld [vmem:[%s1 + $0x18] sm:$0xf]
  %v96 = vld [vmem:[%s1 + $0x1c] sm:$0xf]
  %v97 = vld [vmem:[%s1 + $0x20] sm:$0xf]
  %v98 = vld [vmem:[%s1 + $0x24] sm:$0xf]
  %v99 = vld [vmem:[%s1 + $0x28] sm:$0xf]
  %v100 = vld [vmem:[%s1 + $0x2c] sm:$0xf]
  %v101 = vld [vmem:[%s1 + $0x30] sm:$0xf]
  %v102 = vld [vmem:[%s1 + $0x34] sm:$0xf]
  %v103 = vld [vmem:[%s1 + $0x38] sm:$0xf]
  %v104 = vld [vmem:[%s1 + $0x3c] sm:$0xf]
  %v105 = vld [vmem:[%s3] sm:$0xf]
  %v106 = vld [vmem:[%s3 + $0x4] sm:$0xf]
  %v107 = vld [vmem:[%s3 + $0x8] sm:$0xf]
  %v108 = vld [vmem:[%s3 + $0xc] sm:$0xf]
  %v109 = vld [vmem:[%s3 + $0x10] sm:$0xf]
  %v110 = vld [vmem:[%s3 + $0x14] sm:$0xf]
  %v111 = vld [vmem:[%s3 + $0x18] sm:$0xf]
  %v112 = vld [vmem:[%s3 + $0x1c] sm:$0xf]
  %v113 = vld [vmem:[%s3 + $0x20] sm:$0xf]
  %v130 = vunpack.c.l.b16 %v89
  %v131 = vunpack.c.l.b16 %v90
  %v132 = vunpack.c.l.b16 %v91
  %v133 = vunpack.c.l.b16 %v92
  %v134 = vunpack.c.l.b16 %v93
  %v135 = vunpack.c.l.b16 %v94
  %v136 = vunpack.c.l.b16 %v95
  %v137 = vunpack.c.l.b16 %v96
  %v138 = vunpack.c.l.b16 %v97
  %v139 = vunpack.c.l.b16 %v98
  %v140 = vunpack.c.l.b16 %v99
  %v141 = vunpack.c.l.b16 %v100
  %v142 = vunpack.c.l.b16 %v101
  %v143 = vunpack.c.l.b16 %v102
  %v144 = vunpack.c.l.b16 %v103
  %v145 = vunpack.c.l.b16 %v104
  %v146 = vpack.c.b16 %v131, %v130
  %v147 = vpack.c.b16 %v133, %v132
  %v148 = vpack.c.b16 %v135, %v134
  %v149 = vpack.c.b16 %v137, %v136
  %v150 = vpack.c.b16 %v139, %v138
  %v151 = vpack.c.b16 %v141, %v140
  %v152 = vpack.c.b16 %v143, %v142
  %v153 = vpack.c.b16 %v145, %v144
  %v163 = vunpack.c.l.b16 %v105
  %v164 = vunpack.c.l.b16 %v106
  %v165 = vunpack.c.l.b16 %v107
  %v166 = vunpack.c.l.b16 %v108
  %v167 = vunpack.c.l.b16 %v109
  %v168 = vunpack.c.l.b16 %v110
  %v169 = vunpack.c.l.b16 %v111
  %v170 = vunpack.c.l.b16 %v112
  %v171 = vunpack.c.l.b16 %v113
  %v172 = vpack.c.b16 %v164, %v163
  %v173 = vpack.c.b16 %v166, %v165
  %v174 = vpack.c.b16 %v168, %v167
  %v175 = vpack.c.b16 %v170, %v169
  %v176 = vpack.c.b16 %v171, %v171
  %vm181 = vcmask 588800
  %v183 = vsel %vm181, %v146, 0
  %v186 = vsel %vm181, %v147, 0
  %v189 = vsel %vm181, %v148, 0
  %v192 = vsel %vm181, %v149, 0
  %v195 = vsel %vm181, %v150, 0
  %v198 = vsel %vm181, %v151, 0
  %v201 = vsel %vm181, %v152, 0
  %v204 = vsel %vm181, %v153, 0
  %vm206 = vcmask 1043456
  %v208 = vsel %vm206, %v176, 0
  %210 = vmatpush.bf16.msra.mxu0 0
  %211 = vmatpush.bf16.msra.mxu0 0
  %212 = vmatpush.bf16.msra.mxu0 0
  %213 = vmatpush.bf16.msra.mxu0 %v208
  %214 = vmatpush.bf16.msra.mxu0 %v175
  %215 = vmatpush.bf16.msra.mxu0 %v174
  %216 = vmatpush.bf16.msra.mxu0 %v173
  %217 = vmatpush.bf16.msra.mxu0 %v172
  %218 = vmatmul.bf16.gmra.mxu0 %v183
  %v219 = vpop.f32.mrf.mxu0
  %v220 = vadd.f32 0.0, %v219
  %v221 = vpop.f32.mrf.mxu0
  %v222 = vadd.f32 0.0, %v221
  %223 = vmatmul.bf16.gmra.mxu0 %v186
  %v224 = vpop.f32.mrf.mxu0
  %v225 = vadd.f32 0.0, %v224
  %v226 = vpop.f32.mrf.mxu0
  %v227 = vadd.f32 0.0, %v226
  %228 = vmatmul.bf16.gmra.mxu0 %v189
  %v229 = vpop.f32.mrf.mxu0
  %v230 = vadd.f32 0.0, %v229
  %v231 = vpop.f32.mrf.mxu0
  %v232 = vadd.f32 0.0, %v231
  %233 = vmatmul.bf16.gmra.mxu0 %v192
  %v234 = vpop.f32.mrf.mxu0
  %v235 = vadd.f32 0.0, %v234
  %v236 = vpop.f32.mrf.mxu0
  %v237 = vadd.f32 0.0, %v236
  %238 = vmatmul.bf16.gmra.mxu0 %v195
  %v239 = vpop.f32.mrf.mxu0
  %v240 = vadd.f32 0.0, %v239
  %v241 = vpop.f32.mrf.mxu0
  %v242 = vadd.f32 0.0, %v241
  %243 = vmatmul.bf16.gmra.mxu0 %v198
  %v244 = vpop.f32.mrf.mxu0
  %v245 = vadd.f32 0.0, %v244
  %v246 = vpop.f32.mrf.mxu0
  %v247 = vadd.f32 0.0, %v246
  %248 = vmatmul.bf16.gmra.mxu0 %v201
  %v249 = vpop.f32.mrf.mxu0
  %v250 = vadd.f32 0.0, %v249
  %v251 = vpop.f32.mrf.mxu0
  %v252 = vadd.f32 0.0, %v251
  %253 = vmatmul.bf16.gmra.mxu0 %v204
  %v254 = vpop.f32.mrf.mxu0
  %v255 = vadd.f32 0.0, %v254
  %v256 = vpop.f32.mrf.mxu0
  %v257 = vadd.f32 0.0, %v256
  %258 = vdwg.mxu0
  %v291 = vunpack.c.l.b16 %v21
  %v292 = vunpack.c.h.b16 %v21
  %v293 = vunpack.c.l.b16 %v22
  %v294 = vunpack.c.l.b16 %v23
  %v295 = vunpack.c.h.b16 %v23
  %v296 = vunpack.c.l.b16 %v24
  %v297 = vunpack.c.l.b16 %v25
  %v298 = vunpack.c.h.b16 %v25
  %v299 = vunpack.c.l.b16 %v26
  %v300 = vunpack.c.l.b16 %v27
  %v301 = vunpack.c.h.b16 %v27
  %v302 = vunpack.c.l.b16 %v28
  %v303 = vunpack.c.l.b16 %v29
  %v304 = vunpack.c.h.b16 %v29
  %v305 = vunpack.c.l.b16 %v30
  %v306 = vunpack.c.l.b16 %v31
  %v307 = vunpack.c.h.b16 %v31
  %v308 = vunpack.c.l.b16 %v32
  %v309 = vunpack.c.l.b16 %v33
  %v310 = vunpack.c.h.b16 %v33
  %v311 = vunpack.c.l.b16 %v34
  %v312 = vunpack.c.l.b16 %v35
  %v313 = vunpack.c.h.b16 %v35
  %v314 = vunpack.c.l.b16 %v36
  %v315 = vunpack.c.l.b16 %v37
  %v316 = vunpack.c.h.b16 %v37
  %v317 = vunpack.c.l.b16 %v38
  %v318 = vunpack.c.l.b16 %v39
  %v319 = vunpack.c.h.b16 %v39
  %v320 = vunpack.c.l.b16 %v40
  %v321 = vunpack.c.l.b16 %v41
  %v322 = vunpack.c.h.b16 %v41
  %v323 = vunpack.c.l.b16 %v42
  %v324 = vunpack.c.l.b16 %v43
  %v325 = vunpack.c.h.b16 %v43
  %v326 = vunpack.c.l.b16 %v44
  %v327 = vunpack.c.l.b16 %v45
  %v328 = vunpack.c.h.b16 %v45
  %v329 = vunpack.c.l.b16 %v46
  %v330 = vunpack.c.l.b16 %v47
  %v331 = vunpack.c.h.b16 %v47
  %v332 = vunpack.c.l.b16 %v48
  %v333 = vunpack.c.l.b16 %v49
  %v334 = vunpack.c.h.b16 %v49
  %v335 = vunpack.c.l.b16 %v50
  %v336 = vunpack.c.l.b16 %v51
  %v337 = vunpack.c.h.b16 %v51
  %v338 = vunpack.c.l.b16 %v52
  %v339 = vpack.c.b16 %v294, %v291
  %v340 = vpack.c.b16 %v295, %v292
  %v341 = vpack.c.b16 %v296, %v293
  %v342 = vpack.c.b16 %v300, %v297
  %v343 = vpack.c.b16 %v301, %v298
  %v344 = vpack.c.b16 %v302, %v299
  %v345 = vpack.c.b16 %v306, %v303
  %v346 = vpack.c.b16 %v307, %v304
  %v347 = vpack.c.b16 %v308, %v305
  %v348 = vpack.c.b16 %v312, %v309
  %v349 = vpack.c.b16 %v313, %v310
  %v350 = vpack.c.b16 %v314, %v311
  %v351 = vpack.c.b16 %v318, %v315
  %v352 = vpack.c.b16 %v319, %v316
  %v353 = vpack.c.b16 %v320, %v317
  %v354 = vpack.c.b16 %v324, %v321
  %v355 = vpack.c.b16 %v325, %v322
  %v356 = vpack.c.b16 %v326, %v323
  %v357 = vpack.c.b16 %v330, %v327
  %v358 = vpack.c.b16 %v331, %v328
  %v359 = vpack.c.b16 %v332, %v329
  %v360 = vpack.c.b16 %v336, %v333
  %v361 = vpack.c.b16 %v337, %v334
  %v362 = vpack.c.b16 %v338, %v335
  %v415 = vunpack.c.l.b16 %v53
  %v416 = vunpack.c.l.b16 %v54
  %v417 = vunpack.c.l.b16 %v55
  %v418 = vunpack.c.l.b16 %v56
  %v419 = vunpack.c.l.b16 %v57
  %v420 = vunpack.c.l.b16 %v58
  %v421 = vunpack.c.l.b16 %v59
  %v422 = vunpack.c.l.b16 %v60
  %v423 = vunpack.c.l.b16 %v61
  %v424 = vunpack.c.l.b16 %v62
  %v425 = vunpack.c.l.b16 %v63
  %v426 = vunpack.c.l.b16 %v64
  %v427 = vunpack.c.l.b16 %v65
  %v428 = vunpack.c.l.b16 %v66
  %v429 = vunpack.c.l.b16 %v67
  %v430 = vunpack.c.l.b16 %v68
  %v431 = vunpack.c.l.b16 %v69
  %v432 = vunpack.c.l.b16 %v70
  %v433 = vunpack.c.l.b16 %v71
  %v434 = vunpack.c.l.b16 %v72
  %v435 = vunpack.c.l.b16 %v73
  %v436 = vunpack.c.l.b16 %v74
  %v437 = vunpack.c.l.b16 %v75
  %v438 = vunpack.c.l.b16 %v76
  %v439 = vunpack.c.l.b16 %v77
  %v440 = vunpack.c.l.b16 %v78
  %v441 = vunpack.c.l.b16 %v79
  %v442 = vunpack.c.l.b16 %v80
  %v443 = vunpack.c.l.b16 %v81
  %v444 = vunpack.c.l.b16 %v82
  %v445 = vunpack.c.l.b16 %v83
  %v446 = vunpack.c.l.b16 %v84
  %v447 = vunpack.c.l.b16 %v85
  %v448 = vunpack.c.l.b16 %v86
  %v449 = vunpack.c.l.b16 %v87
  %v450 = vunpack.c.l.b16 %v88
  %v451 = vpack.c.b16 %v416, %v415
  %v452 = vpack.c.b16 %v418, %v417
  %v453 = vpack.c.b16 %v420, %v419
  %v454 = vpack.c.b16 %v422, %v421
  %v455 = vpack.c.b16 %v424, %v423
  %v456 = vpack.c.b16 %v426, %v425
  %v457 = vpack.c.b16 %v428, %v427
  %v458 = vpack.c.b16 %v430, %v429
  %v459 = vpack.c.b16 %v432, %v431
  %v460 = vpack.c.b16 %v434, %v433
  %v461 = vpack.c.b16 %v436, %v435
  %v462 = vpack.c.b16 %v438, %v437
  %v463 = vpack.c.b16 %v440, %v439
  %v464 = vpack.c.b16 %v442, %v441
  %v465 = vpack.c.b16 %v444, %v443
  %v466 = vpack.c.b16 %v446, %v445
  %v467 = vpack.c.b16 %v448, %v447
  %v468 = vpack.c.b16 %v450, %v449
  %vm487 = vcmask 261120
  %v489 = vsel %vm487, %v341, 0
  %v492 = vsel %vm487, %v344, 0
  %v495 = vsel %vm487, %v347, 0
  %v498 = vsel %vm487, %v350, 0
  %v501 = vsel %vm487, %v353, 0
  %v504 = vsel %vm487, %v356, 0
  %v507 = vsel %vm487, %v359, 0
  %v510 = vsel %vm487, %v362, 0
  %512 = vmatpush.bf16.msra.mxu0 %v458
  %513 = vmatpush.bf16.msra.mxu0 %v457
  %514 = vmatpush.bf16.msra.mxu0 %v456
  %515 = vmatpush.bf16.msra.mxu0 %v455
  %516 = vmatpush.bf16.msra.mxu0 %v454
  %517 = vmatpush.bf16.msra.mxu0 %v453
  %518 = vmatpush.bf16.msra.mxu0 %v452
  %519 = vmatpush.bf16.msra.mxu0 %v451
  %520 = vmatmul.bf16.gmra.mxu0 %v339
  %v521 = vpop.f32.mrf.mxu0
  %v522 = vadd.f32 %v220, %v521
  %v523 = vpop.f32.mrf.mxu0
  %v524 = vadd.f32 %v222, %v523
  %525 = vmatmul.bf16.gmra.mxu0 %v342
  %v526 = vpop.f32.mrf.mxu0
  %v527 = vadd.f32 %v225, %v526
  %v528 = vpop.f32.mrf.mxu0
  %v529 = vadd.f32 %v227, %v528
  %530 = vmatmul.bf16.gmra.mxu0 %v345
  %v531 = vpop.f32.mrf.mxu0
  %v532 = vadd.f32 %v230, %v531
  %v533 = vpop.f32.mrf.mxu0
  %v534 = vadd.f32 %v232, %v533
  %535 = vmatmul.bf16.gmra.mxu0 %v348
  %v536 = vpop.f32.mrf.mxu0
  %v537 = vadd.f32 %v235, %v536
  %v538 = vpop.f32.mrf.mxu0
  %v539 = vadd.f32 %v237, %v538
  %540 = vmatmul.bf16.gmra.mxu0 %v351
  %v541 = vpop.f32.mrf.mxu0
  %v542 = vadd.f32 %v240, %v541
  %v543 = vpop.f32.mrf.mxu0
  %v544 = vadd.f32 %v242, %v543
  %545 = vmatmul.bf16.gmra.mxu0 %v354
  %v546 = vpop.f32.mrf.mxu0
  %v547 = vadd.f32 %v245, %v546
  %v548 = vpop.f32.mrf.mxu0
  %v549 = vadd.f32 %v247, %v548
  %550 = vmatmul.bf16.gmra.mxu0 %v357
  %v551 = vpop.f32.mrf.mxu0
  %v552 = vadd.f32 %v250, %v551
  %v553 = vpop.f32.mrf.mxu0
  %v554 = vadd.f32 %v252, %v553
  %555 = vmatmul.bf16.gmra.mxu0 %v360
  %v556 = vpop.f32.mrf.mxu0
  %v557 = vadd.f32 %v255, %v556
  %v558 = vpop.f32.mrf.mxu0
  %v559 = vadd.f32 %v257, %v558
  %560 = vdwg.mxu0
  %561 = vmatpush.bf16.msra.mxu0 %v466
  %562 = vmatpush.bf16.msra.mxu0 %v465
  %563 = vmatpush.bf16.msra.mxu0 %v464
  %564 = vmatpush.bf16.msra.mxu0 %v463
  %565 = vmatpush.bf16.msra.mxu0 %v462
  %566 = vmatpush.bf16.msra.mxu0 %v461
  %567 = vmatpush.bf16.msra.mxu0 %v460
  %568 = vmatpush.bf16.msra.mxu0 %v459
  %569 = vmatmul.bf16.gmra.mxu0 %v340
  %v570 = vpop.f32.mrf.mxu0
  %v571 = vadd.f32 %v522, %v570
  %v572 = vpop.f32.mrf.mxu0
  %v573 = vadd.f32 %v524, %v572
  %574 = vmatmul.bf16.gmra.mxu0 %v343
  %v575 = vpop.f32.mrf.mxu0
  %v576 = vadd.f32 %v527, %v575
  %v577 = vpop.f32.mrf.mxu0
  %v578 = vadd.f32 %v529, %v577
  %579 = vmatmul.bf16.gmra.mxu0 %v346
  %v580 = vpop.f32.mrf.mxu0
  %v581 = vadd.f32 %v532, %v580
  %v582 = vpop.f32.mrf.mxu0
  %v583 = vadd.f32 %v534, %v582
  %584 = vmatmul.bf16.gmra.mxu0 %v349
  %v585 = vpop.f32.mrf.mxu0
  %v586 = vadd.f32 %v537, %v585
  %v587 = vpop.f32.mrf.mxu0
  %v588 = vadd.f32 %v539, %v587
  %589 = vmatmul.bf16.gmra.mxu0 %v352
  %v590 = vpop.f32.mrf.mxu0
  %v591 = vadd.f32 %v542, %v590
  %v592 = vpop.f32.mrf.mxu0
  %v593 = vadd.f32 %v544, %v592
  %594 = vmatmul.bf16.gmra.mxu0 %v355
  %v595 = vpop.f32.mrf.mxu0
  %v596 = vadd.f32 %v547, %v595
  %v597 = vpop.f32.mrf.mxu0
  %v598 = vadd.f32 %v549, %v597
  %599 = vmatmul.bf16.gmra.mxu0 %v358
  %v600 = vpop.f32.mrf.mxu0
  %v601 = vadd.f32 %v552, %v600
  %v602 = vpop.f32.mrf.mxu0
  %v603 = vadd.f32 %v554, %v602
  %604 = vmatmul.bf16.gmra.mxu0 %v361
  %v605 = vpop.f32.mrf.mxu0
  %v606 = vadd.f32 %v557, %v605
  %v607 = vpop.f32.mrf.mxu0
  %v608 = vadd.f32 %v559, %v607
  %609 = vdwg.mxu0
  %610 = vmatpush.bf16.msra.mxu0 0
  %611 = vmatpush.bf16.msra.mxu0 0
  %612 = vmatpush.bf16.msra.mxu0 0
  %613 = vmatpush.bf16.msra.mxu0 0
  %614 = vmatpush.bf16.msra.mxu0 0
  %615 = vmatpush.bf16.msra.mxu0 0
  %616 = vmatpush.bf16.msra.mxu0 %v468
  %617 = vmatpush.bf16.msra.mxu0 %v467
  %618 = vmatmul.bf16.gmra.mxu0 %v489
  %v619 = vpop.f32.mrf.mxu0
  %v620 = vadd.f32 %v571, %v619
  %v621 = vpop.f32.mrf.mxu0
  %v622 = vadd.f32 %v573, %v621
  %623 = vmatmul.bf16.gmra.mxu0 %v492
  %v624 = vpop.f32.mrf.mxu0
  %v625 = vadd.f32 %v576, %v624
  %v626 = vpop.f32.mrf.mxu0
  %v627 = vadd.f32 %v578, %v626
  %628 = vmatmul.bf16.gmra.mxu0 %v495
  %v629 = vpop.f32.mrf.mxu0
  %v630 = vadd.f32 %v581, %v629
  %v631 = vpop.f32.mrf.mxu0
  %v632 = vadd.f32 %v583, %v631
  %633 = vmatmul.bf16.gmra.mxu0 %v498
  %v634 = vpop.f32.mrf.mxu0
  %v635 = vadd.f32 %v586, %v634
  %v636 = vpop.f32.mrf.mxu0
  %v637 = vadd.f32 %v588, %v636
  %638 = vmatmul.bf16.gmra.mxu0 %v501
  %v639 = vpop.f32.mrf.mxu0
  %v640 = vadd.f32 %v591, %v639
  %v641 = vpop.f32.mrf.mxu0
  %v642 = vadd.f32 %v593, %v641
  %643 = vmatmul.bf16.gmra.mxu0 %v504
  %v644 = vpop.f32.mrf.mxu0
  %v645 = vadd.f32 %v596, %v644
  %v646 = vpop.f32.mrf.mxu0
  %v647 = vadd.f32 %v598, %v646
  %648 = vmatmul.bf16.gmra.mxu0 %v507
  %v649 = vpop.f32.mrf.mxu0
  %v650 = vadd.f32 %v601, %v649
  %v651 = vpop.f32.mrf.mxu0
  %v652 = vadd.f32 %v603, %v651
  %653 = vmatmul.bf16.gmra.mxu0 %v510
  %v654 = vpop.f32.mrf.mxu0
  %v655 = vadd.f32 %v606, %v654
  %v656 = vpop.f32.mrf.mxu0
  %v657 = vadd.f32 %v608, %v656
  %658 = vdwg.mxu0
  %v659 = vld [vmem:[%s4] sm:$0x1]
  %v661 = vperm.slane %v659, 0
  %v663 = vadd.f32 %v620, %v661
  %v664 = vadd.f32 %v622, %v661
  %v665 = vadd.f32 %v625, %v661
  %v666 = vadd.f32 %v627, %v661
  %v667 = vadd.f32 %v630, %v661
  %v668 = vadd.f32 %v632, %v661
  %v669 = vadd.f32 %v635, %v661
  %v670 = vadd.f32 %v637, %v661
  %v671 = vadd.f32 %v640, %v661
  %v672 = vadd.f32 %v642, %v661
  %v673 = vadd.f32 %v645, %v661
  %v674 = vadd.f32 %v647, %v661
  %v675 = vadd.f32 %v650, %v661
  %v676 = vadd.f32 %v652, %v661
  %v677 = vadd.f32 %v655, %v661
  %v678 = vadd.f32 %v657, %v661
  %v679 = vmax.f32 %v663, 0.0
  %v680 = vmax.f32 %v664, 0.0
  %v681 = vmax.f32 %v665, 0.0
  %v682 = vmax.f32 %v666, 0.0
  %v683 = vmax.f32 %v667, 0.0
  %v684 = vmax.f32 %v668, 0.0
  %v685 = vmax.f32 %v669, 0.0
  %v686 = vmax.f32 %v670, 0.0
  %v687 = vmax.f32 %v671, 0.0
  %v688 = vmax.f32 %v672, 0.0
  %v689 = vmax.f32 %v673, 0.0
  %v690 = vmax.f32 %v674, 0.0
  %v691 = vmax.f32 %v675, 0.0
  %v692 = vmax.f32 %v676, 0.0
  %v693 = vmax.f32 %v677, 0.0
  %v694 = vmax.f32 %v678, 0.0
  %v695 = vpack.c.bf16 %v679, %v679
  %v696 = vpack.c.bf16 %v680, %v680
  %v697 = vpack.c.bf16 %v681, %v681
  %v698 = vpack.c.bf16 %v682, %v682
  %v699 = vpack.c.bf16 %v683, %v683
  %v700 = vpack.c.bf16 %v684, %v684
  %v701 = vpack.c.bf16 %v685, %v685
  %v702 = vpack.c.bf16 %v686, %v686
  %v703 = vpack.c.bf16 %v687, %v687
  %v704 = vpack.c.bf16 %v688, %v688
  %v705 = vpack.c.bf16 %v689, %v689
  %v706 = vpack.c.bf16 %v690, %v690
  %v707 = vpack.c.bf16 %v691, %v691
  %v708 = vpack.c.bf16 %v692, %v692
  %v709 = vpack.c.bf16 %v693, %v693
  %v710 = vpack.c.bf16 %v694, %v694
  %711 = vst [vmem:[%s5] sm:$0xf] %v695
  %712 = vst [vmem:[%s5 + $0x4] sm:$0xf] %v696
  %713 = vst [vmem:[%s5 + $0x8] sm:$0xf] %v697
  %714 = vst [vmem:[%s5 + $0xc] sm:$0xf] %v698
  %715 = vst [vmem:[%s5 + $0x10] sm:$0xf] %v699
  %716 = vst [vmem:[%s5 + $0x14] sm:$0xf] %v700
  %717 = vst [vmem:[%s5 + $0x18] sm:$0xf] %v701
  %718 = vst [vmem:[%s5 + $0x1c] sm:$0xf] %v702
  %719 = vst [vmem:[%s5 + $0x20] sm:$0xf] %v703
  %720 = vst [vmem:[%s5 + $0x24] sm:$0xf] %v704
  %721 = vst [vmem:[%s5 + $0x28] sm:$0xf] %v705
  %722 = vst [vmem:[%s5 + $0x2c] sm:$0xf] %v706
  %723 = vst [vmem:[%s5 + $0x30] sm:$0xf] %v707
  %724 = vst [vmem:[%s5 + $0x34] sm:$0xf] %v708
  %725 = vst [vmem:[%s5 + $0x38] sm:$0xf] %v709
  %726 = vst [vmem:[%s5 + $0x3c] sm:$0xf] %v710
  // Predicated region
  $region22: #{unipose_forward.21} parent=0 // pred_check
    _
  $region23: #{unipose_forward.21} parent=0 // pred_check_branch
    %728 = sbr.rel (0) target = $region25
  $region24: #{unipose_forward.21} parent=0 // pred_region
    _
  $region25: #{unipose_forward.21} parent=0 // pred_fallthru
    _
  // Predicated region
  $region26: #{unipose_forward.21} parent=0 // pred_check
    _
  $region27: #{unipose_forward.21} parent=0 // pred_check_branch
    %730 = sbr.rel (0) target = $region29
  $region28: #{unipose_forward.21} parent=0 // pred_region
    _
  $region29: #{unipose_forward.21} parent=0 // pred_fallthru
    _

// kernel: unipose_forward.23
$region0: #{unipose_forward.23}
  #allocation0 [shape = 'u32[]', space=smem, size = 0x4, offset = 0x4, fixed_abs, tag = 'smem constant byte address 0x4 - core index']
  #allocation1 [shape = 'u32[72,128]{1,0:T(1,128)}', space=vmem, size = 0x9000, scoped, tag = 'internal scratch']
  %s0 = inlined_call_operand.vmem [shape: bf16[128,32], index: 0, kind: input, shape index: {}]
  %s1 = inlined_call_operand.vmem [shape: bf16[32,128], index: 1, kind: input, shape index: {}]
  %s2 = inlined_call_operand.vmem [shape: f32[1,128], index: 2, kind: input, shape index: {}]
  %s3 = inlined_call_operand.vmem [shape: f32[128,128], index: 3, kind: output, shape index: {}]
  %s4 = sld [smem:[#allocation0]]
  $region22: #{unipose_forward.23} parent=0
    _
  %s6 = ssub.s32 1, %s4
  %s7 = scalar_select 0, %s6, %s4
  // Predicated region
  $region2: #{unipose_forward.23} parent=0 // pred_check
    _
  $region3: #{unipose_forward.23} parent=0 // pred_check_branch
    %9 = sbr.rel (0) target = $region5
  $region4: #{unipose_forward.23} parent=0 // pred_region
    _
  $region5: #{unipose_forward.23} parent=0 // pred_fallthru
    _
  // Predicated region
  $region6: #{unipose_forward.23} parent=0 // pred_check
    _
  $region7: #{unipose_forward.23} parent=0 // pred_check_branch
    %11 = sbr.rel (0) target = $region9
  $region8: #{unipose_forward.23} parent=0 // pred_region
    _
  $region9: #{unipose_forward.23} parent=0 // pred_fallthru
    _
  // Predicated region
  $region10: #{unipose_forward.23} parent=0 // pred_check
    _
  $region11: #{unipose_forward.23} parent=0 // pred_check_branch
    %13 = sbr.rel (0) target = $region13
  $region12: #{unipose_forward.23} parent=0 // pred_region
    _
  $region13: #{unipose_forward.23} parent=0 // pred_fallthru
    _
  %v15 = vld [vmem:[%s0] sm:$0xf]
  %v16 = vld [vmem:[%s0 + $0x4] sm:$0xf]
  %v17 = vld [vmem:[%s0 + $0x8] sm:$0xf]
  %v18 = vld [vmem:[%s0 + $0xc] sm:$0xf]
  %v19 = vld [vmem:[%s0 + $0x10] sm:$0xf]
  %v20 = vld [vmem:[%s0 + $0x14] sm:$0xf]
  %v21 = vld [vmem:[%s0 + $0x18] sm:$0xf]
  %v22 = vld [vmem:[%s0 + $0x1c] sm:$0xf]
  %v23 = vld [vmem:[%s0 + $0x20] sm:$0xf]
  %v24 = vld [vmem:[%s0 + $0x24] sm:$0xf]
  %v25 = vld [vmem:[%s0 + $0x28] sm:$0xf]
  %v26 = vld [vmem:[%s0 + $0x2c] sm:$0xf]
  %v27 = vld [vmem:[%s0 + $0x30] sm:$0xf]
  %v28 = vld [vmem:[%s0 + $0x34] sm:$0xf]
  %v29 = vld [vmem:[%s0 + $0x38] sm:$0xf]
  %v30 = vld [vmem:[%s0 + $0x3c] sm:$0xf]
  %v31 = vld [vmem:[%s1] sm:$0xf]
  %v32 = vld [vmem:[%s1 + $0x4] sm:$0xf]
  %v33 = vld [vmem:[%s1 + $0x8] sm:$0xf]
  %v34 = vld [vmem:[%s1 + $0xc] sm:$0xf]
  %v35 = vld [vmem:[%s2] sm:$0x1]
  %v37 = vperm.slane %v35, 0
  %v55 = vunpack.c.l.b16 %v15
  %v56 = vunpack.c.l.b16 %v16
  %v57 = vunpack.c.l.b16 %v17
  %v58 = vunpack.c.l.b16 %v18
  %v59 = vunpack.c.l.b16 %v19
  %v60 = vunpack.c.l.b16 %v20
  %v61 = vunpack.c.l.b16 %v21
  %v62 = vunpack.c.l.b16 %v22
  %v63 = vunpack.c.l.b16 %v23
  %v64 = vunpack.c.l.b16 %v24
  %v65 = vunpack.c.l.b16 %v25
  %v66 = vunpack.c.l.b16 %v26
  %v67 = vunpack.c.l.b16 %v27
  %v68 = vunpack.c.l.b16 %v28
  %v69 = vunpack.c.l.b16 %v29
  %v70 = vunpack.c.l.b16 %v30
  %v71 = vpack.c.b16 %v56, %v55
  %v72 = vpack.c.b16 %v58, %v57
  %v73 = vpack.c.b16 %v60, %v59
  %v74 = vpack.c.b16 %v62, %v61
  %v75 = vpack.c.b16 %v64, %v63
  %v76 = vpack.c.b16 %v66, %v65
  %v77 = vpack.c.b16 %v68, %v67
  %v78 = vpack.c.b16 %v70, %v69
  %v83 = vunpack.c.l.b16 %v31
  %v84 = vunpack.c.l.b16 %v32
  %v85 = vunpack.c.l.b16 %v33
  %v86 = vunpack.c.l.b16 %v34
  %v87 = vpack.c.b16 %v84, %v83
  %v88 = vpack.c.b16 %v86, %v85
  %vm91 = vcmask 261120
  %v93 = vsel %vm91, %v71, 0
  %v96 = vsel %vm91, %v72, 0
  %v99 = vsel %vm91, %v73, 0
  %v102 = vsel %vm91, %v74, 0
  %v105 = vsel %vm91, %v75, 0
  %v108 = vsel %vm91, %v76, 0
  %v111 = vsel %vm91, %v77, 0
  %v114 = vsel %vm91, %v78, 0
  %116 = vmatpush.bf16.msra.mxu0 0
  %117 = vmatpush.bf16.msra.mxu0 0
  %118 = vmatpush.bf16.msra.mxu0 0
  %119 = vmatpush.bf16.msra.mxu0 0
  %120 = vmatpush.bf16.msra.mxu0 0
  %121 = vmatpush.bf16.msra.mxu0 0
  %122 = vmatpush.bf16.msra.mxu0 %v88
  %123 = vmatpush.bf16.msra.mxu0 %v87
  %124 = vmatmul.bf16.gmra.mxu0 %v93
  %v125 = vpop.f32.mrf.mxu0
  %v126 = vadd.f32 %v37, %v125
  %v127 = vpop.f32.mrf.mxu0
  %v128 = vadd.f32 %v37, %v127
  %129 = vmatmul.bf16.gmra.mxu0 %v96
  %v130 = vpop.f32.mrf.mxu0
  %v131 = vadd.f32 %v37, %v130
  %v132 = vpop.f32.mrf.mxu0
  %v133 = vadd.f32 %v37, %v132
  %134 = vmatmul.bf16.gmra.mxu0 %v99
  %v135 = vpop.f32.mrf.mxu0
  %v136 = vadd.f32 %v37, %v135
  %v137 = vpop.f32.mrf.mxu0
  %v138 = vadd.f32 %v37, %v137
  %139 = vmatmul.bf16.gmra.mxu0 %v102
  %v140 = vpop.f32.mrf.mxu0
  %v141 = vadd.f32 %v37, %v140
  %v142 = vpop.f32.mrf.mxu0
  %v143 = vadd.f32 %v37, %v142
  %144 = vmatmul.bf16.gmra.mxu0 %v105
  %v145 = vpop.f32.mrf.mxu0
  %v146 = vadd.f32 %v37, %v145
  %v147 = vpop.f32.mrf.mxu0
  %v148 = vadd.f32 %v37, %v147
  %149 = vmatmul.bf16.gmra.mxu0 %v108
  %v150 = vpop.f32.mrf.mxu0
  %v151 = vadd.f32 %v37, %v150
  %v152 = vpop.f32.mrf.mxu0
  %v153 = vadd.f32 %v37, %v152
  %154 = vmatmul.bf16.gmra.mxu0 %v111
  %v155 = vpop.f32.mrf.mxu0
  %v156 = vadd.f32 %v37, %v155
  %v157 = vpop.f32.mrf.mxu0
  %v158 = vadd.f32 %v37, %v157
  %159 = vmatmul.bf16.gmra.mxu0 %v114
  %v160 = vpop.f32.mrf.mxu0
  %v161 = vadd.f32 %v37, %v160
  %v162 = vpop.f32.mrf.mxu0
  %v163 = vadd.f32 %v37, %v162
  %164 = vdwg.mxu0
  %165 = vst [vmem:[%s3] sm:$0xff] %v126
  %166 = vst [vmem:[%s3 + $0x8] sm:$0xff] %v128
  %167 = vst [vmem:[%s3 + $0x10] sm:$0xff] %v131
  %168 = vst [vmem:[%s3 + $0x18] sm:$0xff] %v133
  %169 = vst [vmem:[%s3 + $0x20] sm:$0xff] %v136
  %170 = vst [vmem:[%s3 + $0x28] sm:$0xff] %v138
  %171 = vst [vmem:[%s3 + $0x30] sm:$0xff] %v141
  %172 = vst [vmem:[%s3 + $0x38] sm:$0xff] %v143
  %173 = vst [vmem:[%s3 + $0x40] sm:$0xff] %v146
  %174 = vst [vmem:[%s3 + $0x48] sm:$0xff] %v148
  %175 = vst [vmem:[%s3 + $0x50] sm:$0xff] %v151
  %176 = vst [vmem:[%s3 + $0x58] sm:$0xff] %v153
  %177 = vst [vmem:[%s3 + $0x60] sm:$0xff] %v156
  %178 = vst [vmem:[%s3 + $0x68] sm:$0xff] %v158
  %179 = vst [vmem:[%s3 + $0x70] sm:$0xff] %v161
  %180 = vst [vmem:[%s3 + $0x78] sm:$0xff] %v163
  // Predicated region
  $region14: #{unipose_forward.23} parent=0 // pred_check
    _
  $region15: #{unipose_forward.23} parent=0 // pred_check_branch
    %182 = sbr.rel (0) target = $region17
  $region16: #{unipose_forward.23} parent=0 // pred_region
    _
  $region17: #{unipose_forward.23} parent=0 // pred_fallthru
    _
  // Predicated region
  $region18: #{unipose_forward.23} parent=0 // pred_check
    _
  $region19: #{unipose_forward.23} parent=0 // pred_check_branch
    %184 = sbr.rel (0) target = $region21
  $region20: #{unipose_forward.23} parent=0 // pred_region
    _
  $region21: #{unipose_forward.23} parent=0 // pred_fallthru
    _

</llo_original>
